<compile_context>
chip_gen: v6e
topology: v6e:2x2x1
jax: 0.10.0
libtpu: 0.0.40
codegen_flags: <defaults>
</compile_context>

<pallas_src>
import functools
import math

import jax
import jax.numpy as jnp
from jax import lax
from jax.experimental import pallas as pl
from jax.experimental.pallas import tpu as pltpu

NEG = jnp.float32(-1e30)  # additive mask value (softmax weight underflows to 0)


# ----------------------------------------------------------------------------
# Fused decoder-stack kernel: one grid step = one (batch_block, layer) pair.
# ----------------------------------------------------------------------------
def _decoder_stack_kernel(
    x_ref, enc_ref, sb_ref, cb_ref,
    wqkv_ref, bqkv_ref, wos_ref, bos_ref,
    wqc_ref, bqc_ref, wkvc_ref, bkvc_ref, woc_ref, boc_ref,
    w1_ref, b1_ref, w2_ref, b2_ref, ln_ref,
    o_ref, acc_ref,
    *, num_heads, head_dim):
    l = pl.program_id(1)
    D = num_heads * head_dim
    scale = 1.0 / math.sqrt(head_dim)
    inv_d = 1.0 / D

    # Layer 0: load this batch-block's decoder input into the VMEM-resident
    # accumulator (rows = all sequences of the block, folded into M).
    @pl.when(l == 0)
    def _():
        acc_ref[...] = x_ref[...]

    x = acc_ref[...]            # (M, D)  f32 activations, M = seqs_per_block*Td
    enc = enc_ref[...]          # (Me, D) f32 encoder output rows
    ln = ln_ref[0]              # (6, D)  f32 = [g1, b1, g2, b2, g3, b3]

    def bdot(a, w16):
        # bf16 MXU operands, f32 accumulation.
        return jnp.dot(a.astype(jnp.bfloat16), w16,
                       preferred_element_type=jnp.float32)

    def layer_norm(h, g_row, b_row):
        # Single-pass statistics: one reduction pair instead of two passes.
        s1 = jnp.sum(h, axis=-1, keepdims=True)
        s2 = jnp.sum(h * h, axis=-1, keepdims=True)
        mean = s1 * inv_d
        var = s2 * inv_d - mean * mean
        return (h - mean) * lax.rsqrt(var + 1e-5) * g_row + b_row

    def mh_attention(q16, k16, v16, bias, wo16):
        # q16 (Mq, D), k16/v16 (Mk, D) bf16; bias (Mq, Mk) f32 additive;
        # wo16 (D, D) bf16.  Output projection fused per head (no concat).
        out = jnp.zeros((q16.shape[0], D), jnp.float32)
        # NOTE: static unroll is fine for num_heads=4; for many heads switch
        # to a batched dot_general over a head axis to bound vreg pressure.
        for h in range(num_heads):
            sl = slice(h * head_dim, (h + 1) * head_dim)
            s = lax.dot_general(q16[:, sl], k16[:, sl],
                                (((1,), (1,)), ((), ())),
                                preferred_element_type=jnp.float32)
            s = s * scale + bias
            m = jnp.max(s, axis=-1, keepdims=True)
            p = jnp.exp(s - m)
            denom = jnp.sum(p, axis=-1, keepdims=True)
            attn = (p * pl.reciprocal(denom, approx=True)).astype(jnp.bfloat16)
            oh = jnp.dot(attn, v16[:, sl], preferred_element_type=jnp.float32)
            out = out + jnp.dot(oh.astype(jnp.bfloat16), wo16[sl, :],
                                preferred_element_type=jnp.float32)
        return out

    # ---- masked self-attention (fused QKV projection) ----
    qkv = bdot(x, wqkv_ref[0]) + bqkv_ref[0]                  # (M, 3D) f32
    qkv16 = qkv.astype(jnp.bfloat16)
    sa = mh_attention(qkv16[:, :D], qkv16[:, D:2 * D], qkv16[:, 2 * D:],
                      sb_ref[...], wos_ref[0]) + bos_ref[0]
    h1 = layer_norm(x + sa, ln[0:1, :], ln[1:2, :])

    # ---- encoder-decoder (cross) attention (fused KV projection) ----
    qc16 = (bdot(h1, wqc_ref[0]) + bqc_ref[0]).astype(jnp.bfloat16)
    kv16 = (bdot(enc, wkvc_ref[0]) + bkvc_ref[0]).astype(jnp.bfloat16)
    ca = mh_attention(qc16, kv16[:, :D], kv16[:, D:],
                      cb_ref[...], woc_ref[0]) + boc_ref[0]
    h2 = layer_norm(h1 + ca, ln[2:3, :], ln[3:4, :])

    # ---- feed-forward ----
    f = jnp.maximum(bdot(h2, w1_ref[0]) + b1_ref[0], 0.0)
    ff = bdot(f, w2_ref[0]) + b2_ref[0]
    h3 = layer_norm(h2 + ff, ln[4:5, :], ln[5:6, :])

    acc_ref[...] = h3

    @pl.when(l == pl.num_programs(1) - 1)
    def _():
        o_ref[...] = h3


def decoder_forward_pallas(params, x, enc_out, tgt_mask, src_kpm, tgt_kpm,
                           *, num_heads, batch_blocks=1):
    """x: (B, Td, D) decoder input, enc_out: (B, Ts, D), boolean masks as in PyTorch.

    batch_blocks: number of batch splits along the 'parallel' grid axis
    (1 for v5e/v6e; 2 on v7x to occupy both TensorCores).
    """
    B, Td, D = x.shape
    Ts = enc_out.shape[1]
    N = params["wqkv"].shape[0]
    hd = D // num_heads
    assert B % batch_blocks == 0
    seqs = B // batch_blocks
    Mq, Mk = seqs * Td, seqs * Ts          # rows per grid step (queries / enc keys)

    # Batch folded into the row (M) dimension.
    x2 = x.reshape(B * Td, D).astype(jnp.float32)
    enc2 = enc_out.reshape(B * Ts, D).astype(jnp.float32)

    # Additive attention biases, block-diagonal across batch so all sequences
    # of a batch-block share one score matrix (causal + key padding inside
    # each diagonal block, -1e30 everywhere else).  Tiny f32 tensors.
    blockdiag = jnp.where(jnp.eye(B, dtype=bool), 0.0, NEG)                 # (B, B)
    causal = jnp.where(tgt_mask, NEG, 0.0).astype(jnp.float32)              # (Td, Td)
    tpad = jnp.where(tgt_kpm, NEG, 0.0).astype(jnp.float32)                 # (B, Td)
    spad = jnp.where(src_kpm, NEG, 0.0).astype(jnp.float32)                 # (B, Ts)
    self_bias = (jnp.broadcast_to(blockdiag[:, None, :, None], (B, Td, B, Td))
                 + causal[None, :, None, :]
                 + tpad[None, None, :, :]).reshape(B * Td, B * Td)
    cross_bias = (jnp.broadcast_to(blockdiag[:, None, :, None], (B, Td, B, Ts))
                  + spad[None, None, :, :]).reshape(B * Td, B * Ts)

    weight_names = ("wqkv", "bqkv", "wos", "bos", "wqc", "bqc", "wkvc", "bkvc",
                    "woc", "boc", "w1", "b1", "w2", "b2", "ln")

    in_specs = [
        pl.BlockSpec((Mq, D), lambda g, l: (g, 0)),      # decoder input rows
        pl.BlockSpec((Mk, D), lambda g, l: (g, 0)),      # encoder output rows
        pl.BlockSpec((Mq, Mq), lambda g, l: (g, g)),     # self-attn bias (diag block)
        pl.BlockSpec((Mq, Mk), lambda g, l: (g, g)),     # cross-attn bias (diag block)
    ] + [
        # Per-layer weight blocks; index depends only on l, so each weight is
        # DMA'd once per layer (not once per batch).
        pl.BlockSpec((1,) + params[k].shape[1:], lambda g, l: (l, 0, 0))
        for k in weight_names
    ]

    kernel = functools.partial(_decoder_stack_kernel,
                               num_heads=num_heads, head_dim=hd)

    out = pl.pallas_call(
        kernel,
        out_shape=jax.ShapeDtypeStruct((B * Td, D), jnp.float32),
        grid=(batch_blocks, N),
        in_specs=in_specs,
        out_specs=pl.BlockSpec((Mq, D), lambda g, l: (g, 0)),
        scratch_shapes=[pltpu.VMEM((Mq, D), jnp.float32)],
        compiler_params=pltpu.CompilerParams(
            dimension_semantics=("parallel", "arbitrary"),
            vmem_limit_bytes=32 * 1024 * 1024),
    )(x2, enc2, self_bias, cross_bias, *[params[k] for k in weight_names])

    return out.reshape(B, Td, D)


# ----------------------------------------------------------------------------
# Parameter init (PyTorch nn.Linear / nn.LayerNorm defaults), stacked over
# layers.  Matmul weights stored in bf16 (MXU operands / halved DMA bytes);
# biases and LayerNorm params kept in f32.
# ----------------------------------------------------------------------------
class Config:
    d_model = 32
    n_heads = 4
    N = 2
    context_length = 16
    int_dim = 64
    PAD = 0


def _init_linear(key, din, dout):
    k1, k2 = jax.random.split(key)
    bound = 1.0 / math.sqrt(din)
    w = jax.random.uniform(k1, (din, dout), jnp.float32, -bound, bound)
    b = jax.random.uniform(k2, (dout,), jnp.float32, -bound, bound)
    return w, b


def init_decoder_params(key, cfg):
    D, F, N = cfg.d_model, cfg.int_dim, cfg.N
    names = ("wqkv", "bqkv", "wos", "bos", "wqc", "bqc", "wkvc", "bkvc",
             "woc", "boc", "w1", "b1", "w2", "b2", "ln")
    acc = {n: [] for n in names}
    bf16 = jnp.bfloat16
    for lk in jax.random.split(key, N):
        ks = jax.random.split(lk, 10)
        wq, bq = _init_linear(ks[0], D, D)
        wk, bk = _init_linear(ks[1], D, D)
        wv, bv = _init_linear(ks[2], D, D)
        wo, bo = _init_linear(ks[3], D, D)
        wqc, bqc = _init_linear(ks[4], D, D)
        wkc, bkc = _init_linear(ks[5], D, D)
        wvc, bvc = _init_linear(ks[6], D, D)
        woc, boc = _init_linear(ks[7], D, D)
        w1, b1 = _init_linear(ks[8], D, F)
        w2, b2 = _init_linear(ks[9], F, D)
        acc["wqkv"].append(jnp.concatenate([wq, wk, wv], axis=1).astype(bf16))  # (D, 3D)
        acc["bqkv"].append(jnp.concatenate([bq, bk, bv]).reshape(1, 3 * D))
        acc["wos"].append(wo.astype(bf16));  acc["bos"].append(bo.reshape(1, D))
        acc["wqc"].append(wqc.astype(bf16)); acc["bqc"].append(bqc.reshape(1, D))
        acc["wkvc"].append(jnp.concatenate([wkc, wvc], axis=1).astype(bf16))    # (D, 2D)
        acc["bkvc"].append(jnp.concatenate([bkc, bvc]).reshape(1, 2 * D))
        acc["woc"].append(woc.astype(bf16)); acc["boc"].append(boc.reshape(1, D))
        acc["w1"].append(w1.astype(bf16));   acc["b1"].append(b1.reshape(1, F))
        acc["w2"].append(w2.astype(bf16));   acc["b2"].append(b2.reshape(1, D))
        acc["ln"].append(jnp.stack([jnp.ones(D), jnp.zeros(D)] * 3))            # (6, D)
    return {k: jnp.stack(v) for k, v in acc.items()}


# ----------------------------------------------------------------------------
# Pure-JAX f32 reference (mirrors the PyTorch Decoder forward) for validation.
# ----------------------------------------------------------------------------
def decoder_forward_ref(params, x, enc_out, tgt_mask, src_kpm, tgt_kpm, *, num_heads):
    B, Td, D = x.shape
    Ts = enc_out.shape[1]
    hd = D // num_heads
    scale = 1.0 / math.sqrt(hd)
    causal_bias = jnp.where(tgt_mask, NEG, 0.0)
    tpad_bias = jnp.where(tgt_kpm, NEG, 0.0)
    spad_bias = jnp.where(src_kpm, NEG, 0.0)
    f32 = lambda a: a.astype(jnp.float32)

    def ln_fn(h, g, b):
        mean = h.mean(-1, keepdims=True)
        var = ((h - mean) ** 2).mean(-1, keepdims=True)
        return (h - mean) / jnp.sqrt(var + 1e-5) * g + b

    def mha(q_in, kv_in, wq, bq, wk, bk, wv, bv, wo, bo, bias):
        Tq, Tk = q_in.shape[1], kv_in.shape[1]
        q = (q_in @ wq + bq).reshape(B, Tq, num_heads, hd).transpose(0, 2, 1, 3)
        k = (kv_in @ wk + bk).reshape(B, Tk, num_heads, hd).transpose(0, 2, 1, 3)
        v = (kv_in @ wv + bv).reshape(B, Tk, num_heads, hd).transpose(0, 2, 1, 3)
        s = jnp.einsum('bhqd,bhkd->bhqk', q, k) * scale + bias[:, None, :, :]
        p = jax.nn.softmax(s, axis=-1)
        o = jnp.einsum('bhqk,bhkd->bhqd', p, v).transpose(0, 2, 1, 3).reshape(B, Tq, D)
        return o @ wo + bo

    h = x
    for l in range(params["wqkv"].shape[0]):
        wqkv, bqkv = f32(params["wqkv"][l]), params["bqkv"][l][0]
        wq, wk, wv = wqkv[:, :D], wqkv[:, D:2 * D], wqkv[:, 2 * D:]
        bq, bk, bv = bqkv[:D], bqkv[D:2 * D], bqkv[2 * D:]
        ln = params["ln"][l]
        self_bias = causal_bias[None] + tpad_bias[:, None, :]
        sa = mha(h, h, wq, bq, wk, bk, wv, bv,
                 f32(params["wos"][l]), params["bos"][l][0], self_bias)
        h = ln_fn(h + sa, ln[0], ln[1])
        wkvc, bkvc = f32(params["wkvc"][l]), params["bkvc"][l][0]
        wkc, wvc = wkvc[:, :D], wkvc[:, D:]
        bkc, bvc = bkvc[:D], bkvc[D:]
        cross_bias = jnp.broadcast_to(spad_bias[:, None, :], (B, Td, Ts))
        ca = mha(h, enc_out, f32(params["wqc"][l]), params["bqc"][l][0],
                 wkc, bkc, wvc, bvc,
                 f32(params["woc"][l]), params["boc"][l][0], cross_bias)
        h = ln_fn(h + ca, ln[2], ln[3])
        f = jnp.maximum(h @ f32(params["w1"][l]) + params["b1"][l][0], 0.0)
        ff = f @ f32(params["w2"][l]) + params["b2"][l][0]
        h = ln_fn(h + ff, ln[4], ln[5])
    return h


# ----------------------------------------------------------------------------
if __name__ == "__main__":
    cfg = Config()
    key = jax.random.PRNGKey(0)
    kp, kx, ke = jax.random.split(key, 3)

    B, Td, Ts = 2, 8, 16
    params = init_decoder_params(kp, cfg)
    x = jax.random.normal(kx, (B, Td, cfg.d_model), jnp.float32)
    enc_out = jax.random.normal(ke, (B, Ts, cfg.d_model), jnp.float32)

    tgt_mask = jnp.triu(jnp.ones((Td, Td), dtype=bool), k=1)          # causal
    src_kpm = jnp.zeros((B, Ts), dtype=bool).at[1, -3:].set(True)     # src key padding
    tgt_kpm = jnp.zeros((B, Td), dtype=bool).at[1, -2:].set(True)     # tgt key padding

    fwd = jax.jit(functools.partial(decoder_forward_pallas,
                                    num_heads=cfg.n_heads, batch_blocks=1))
    out = fwd(params, x, enc_out, tgt_mask, src_kpm, tgt_kpm)
    jax.block_until_ready(out)

    assert out.shape == (B, Td, cfg.d_model)
    assert bool(jnp.isfinite(out).all())

    ref = decoder_forward_ref(params, x, enc_out, tgt_mask, src_kpm, tgt_kpm,
                              num_heads=cfg.n_heads)
    max_err = float(jnp.max(jnp.abs(out - ref)))
    # bf16 MXU operands vs f32 reference: tolerance scaled accordingly.
    assert max_err < 5e-2, f"mismatch vs reference: max_err={max_err}"

    print("KERNEL_OK")
</pallas_src>

<mosaic_0001>
module attributes {stable_mosaic.version = 11 : i64} {
  func.func @_decoder_stack_kernel(%arg0: i32, %arg1: i32, %arg2: memref<16x32xf32, #tpu.memory_space<vmem>>, %arg3: memref<32x32xf32, #tpu.memory_space<vmem>>, %arg4: memref<16x16xf32, #tpu.memory_space<vmem>>, %arg5: memref<16x32xf32, #tpu.memory_space<vmem>>, %arg6: memref<1x32x96xbf16, #tpu.memory_space<vmem>>, %arg7: memref<1x1x96xf32, #tpu.memory_space<vmem>>, %arg8: memref<1x32x32xbf16, #tpu.memory_space<vmem>>, %arg9: memref<1x1x32xf32, #tpu.memory_space<vmem>>, %arg10: memref<1x32x32xbf16, #tpu.memory_space<vmem>>, %arg11: memref<1x1x32xf32, #tpu.memory_space<vmem>>, %arg12: memref<1x32x64xbf16, #tpu.memory_space<vmem>>, %arg13: memref<1x1x64xf32, #tpu.memory_space<vmem>>, %arg14: memref<1x32x32xbf16, #tpu.memory_space<vmem>>, %arg15: memref<1x1x32xf32, #tpu.memory_space<vmem>>, %arg16: memref<1x32x64xbf16, #tpu.memory_space<vmem>>, %arg17: memref<1x1x64xf32, #tpu.memory_space<vmem>>, %arg18: memref<1x64x32xbf16, #tpu.memory_space<vmem>>, %arg19: memref<1x1x32xf32, #tpu.memory_space<vmem>>, %arg20: memref<1x6x32xf32, #tpu.memory_space<vmem>>, %arg21: memref<16x32xf32, #tpu.memory_space<vmem>>, %arg22: memref<16x32xf32, #tpu.memory_space<vmem>>) attributes {dimension_semantics = [#tpu.dimension_semantics<parallel>, #tpu.dimension_semantics<arbitrary>], iteration_bounds = array<i64: 1, 2>, scalar_prefetch = 0 : i64, scratch_operands = 1 : i64, tpu.core_type = #tpu.core_type<tc>, window_params = [{transform_indices = @transform_0, window_bounds = array<i64: 16, 32>}, {transform_indices = @transform_1, window_bounds = array<i64: 32, 32>}, {transform_indices = @transform_2, window_bounds = array<i64: 16, 16>}, {transform_indices = @transform_3, window_bounds = array<i64: 16, 32>}, {transform_indices = @transform_4, window_bounds = array<i64: 1, 32, 96>}, {transform_indices = @transform_5, window_bounds = array<i64: 1, 1, 96>}, {transform_indices = @transform_6, window_bounds = array<i64: 1, 32, 32>}, {transform_indices = @transform_7, window_bounds = array<i64: 1, 1, 32>}, {transform_indices = @transform_8, window_bounds = array<i64: 1, 32, 32>}, {transform_indices = @transform_9, window_bounds = array<i64: 1, 1, 32>}, {transform_indices = @transform_10, window_bounds = array<i64: 1, 32, 64>}, {transform_indices = @transform_11, window_bounds = array<i64: 1, 1, 64>}, {transform_indices = @transform_12, window_bounds = array<i64: 1, 32, 32>}, {transform_indices = @transform_13, window_bounds = array<i64: 1, 1, 32>}, {transform_indices = @transform_14, window_bounds = array<i64: 1, 32, 64>}, {transform_indices = @transform_15, window_bounds = array<i64: 1, 1, 64>}, {transform_indices = @transform_16, window_bounds = array<i64: 1, 64, 32>}, {transform_indices = @transform_17, window_bounds = array<i64: 1, 1, 32>}, {transform_indices = @transform_18, window_bounds = array<i64: 1, 6, 32>}, {transform_indices = @transform_19, window_bounds = array<i64: 16, 32>}]} {
    %c0_i32 = arith.constant 0 : i32
    %0 = arith.cmpi eq, %arg1, %c0_i32 : i32
    %1 = arith.extui %0 : i1 to i32
    %c0_i32_0 = arith.constant 0 : i32
    %2 = arith.cmpi ne, %1, %c0_i32_0 : i32
    scf.if %2 {
      %c0_126 = arith.constant 0 : index
      %c0_127 = arith.constant 0 : index
      %336 = vector.load %arg2[%c0_126, %c0_127] : memref<16x32xf32, #tpu.memory_space<vmem>>, vector<16x32xf32>
      %c0_128 = arith.constant 0 : index
      %c0_129 = arith.constant 0 : index
      %337 = vector.load %arg22[%c0_128, %c0_129] : memref<16x32xf32, #tpu.memory_space<vmem>>, vector<16x32xf32>
      tpu.vector_store %arg22[%c0_128, %c0_129], %336 {strides = array<i32>} : memref<16x32xf32, #tpu.memory_space<vmem>>, vector<16x32xf32>,
    } else {
    }
    %c0 = arith.constant 0 : index
    %c0_1 = arith.constant 0 : index
    %3 = vector.load %arg22[%c0, %c0_1] : memref<16x32xf32, #tpu.memory_space<vmem>>, vector<16x32xf32>
    %c0_2 = arith.constant 0 : index
    %c0_3 = arith.constant 0 : index
    %4 = vector.load %arg3[%c0_2, %c0_3] : memref<32x32xf32, #tpu.memory_space<vmem>>, vector<32x32xf32>
    %c0_4 = arith.constant 0 : index
    %c0_5 = arith.constant 0 : index
    %c0_6 = arith.constant 0 : index
    %5 = vector.load %arg20[%c0_4, %c0_5, %c0_6] : memref<1x6x32xf32, #tpu.memory_space<vmem>>, vector<1x6x32xf32>
    %6 = vector.shape_cast %5 : vector<1x6x32xf32> to vector<6x32xf32>
    %c0_7 = arith.constant 0 : index
    %c0_8 = arith.constant 0 : index
    %c0_9 = arith.constant 0 : index
    %7 = vector.load %arg6[%c0_7, %c0_8, %c0_9] : memref<1x32x96xbf16, #tpu.memory_space<vmem>>, vector<1x32x96xbf16>
    %8 = vector.shape_cast %7 : vector<1x32x96xbf16> to vector<32x96xbf16>
    %9 = arith.truncf %3 : vector<16x32xf32> to vector<16x32xbf16>
    %cst = arith.constant dense<0.000000e+00> : vector<16x96xf32>
    %10 = tpu.matmul %9, %8, %cst {dimension_numbers = #tpu.dot_dimension_numbers<[1], [0], [0], [1], [0, 0, 1, 1], [], []>} : vector<16x32xbf16>, vector<32x96xbf16>, vector<16x96xf32> -> vector<16x96xf32>
    %c0_10 = arith.constant 0 : index
    %c0_11 = arith.constant 0 : index
    %c0_12 = arith.constant 0 : index
    %11 = vector.load %arg7[%c0_10, %c0_11, %c0_12] : memref<1x1x96xf32, #tpu.memory_space<vmem>>, vector<1x1x96xf32>
    %12 = vector.shape_cast %11 : vector<1x1x96xf32> to vector<1x96xf32>
    %13 = vector.broadcast %12 : vector<1x96xf32> to vector<16x96xf32>
    %14 = arith.addf %10, %13 : vector<16x96xf32>
    %15 = arith.truncf %14 : vector<16x96xf32> to vector<16x96xbf16>
    %16 = vector.extract_strided_slice %15 {offsets = [0, 0], sizes = [16, 32], strides = [1, 1]} : vector<16x96xbf16> to vector<16x32xbf16>
    %17 = vector.extract_strided_slice %15 {offsets = [0, 32], sizes = [16, 32], strides = [1, 1]} : vector<16x96xbf16> to vector<16x32xbf16>
    %18 = vector.extract_strided_slice %15 {offsets = [0, 64], sizes = [16, 32], strides = [1, 1]} : vector<16x96xbf16> to vector<16x32xbf16>
    %c0_13 = arith.constant 0 : index
    %c0_14 = arith.constant 0 : index
    %19 = vector.load %arg4[%c0_13, %c0_14] : memref<16x16xf32, #tpu.memory_space<vmem>>, vector<16x16xf32>
    %c0_15 = arith.constant 0 : index
    %c0_16 = arith.constant 0 : index
    %c0_17 = arith.constant 0 : index
    %20 = vector.load %arg8[%c0_15, %c0_16, %c0_17] : memref<1x32x32xbf16, #tpu.memory_space<vmem>>, vector<1x32x32xbf16>
    %21 = vector.shape_cast %20 : vector<1x32x32xbf16> to vector<32x32xbf16>
    %cst_18 = arith.constant 0.000000e+00 : f32
    %22 = vector.broadcast %cst_18 : f32 to vector<16x32xf32>
    %23 = vector.extract_strided_slice %16 {offsets = [0, 0], sizes = [16, 8], strides = [1, 1]} : vector<16x32xbf16> to vector<16x8xbf16>
    %24 = vector.extract_strided_slice %17 {offsets = [0, 0], sizes = [16, 8], strides = [1, 1]} : vector<16x32xbf16> to vector<16x8xbf16>
    %cst_19 = arith.constant dense<0.000000e+00> : vector<16x16xf32>
    %25 = tpu.matmul %23, %24, %cst_19 {dimension_numbers = #tpu.dot_dimension_numbers<[1], [1], [0], [0], [0, 0, 1, 0], [], []>} : vector<16x8xbf16>, vector<16x8xbf16>, vector<16x16xf32> -> vector<16x16xf32>
    %cst_20 = arith.constant 0.353553385 : f32
    %26 = vector.broadcast %cst_20 : f32 to vector<16x16xf32>
    %27 = arith.mulf %25, %26 : vector<16x16xf32>
    %28 = arith.addf %27, %19 : vector<16x16xf32>
    %cst_21 = arith.constant dense<0xFF800000> : vector<16xf32>
    %29 = vector.multi_reduction <maximumf>, %28, %cst_21 [1] : vector<16x16xf32> to vector<16xf32>
    %30 = vector.shape_cast %29 : vector<16xf32> to vector<16x1xf32>
    %31 = vector.broadcast %30 : vector<16x1xf32> to vector<16x16xf32>
    %32 = arith.subf %28, %31 : vector<16x16xf32>
    %33 = math.exp %32 : vector<16x16xf32>
    %cst_22 = arith.constant dense<0.000000e+00> : vector<16xf32>
    %34 = vector.multi_reduction <add>, %33, %cst_22 [1] : vector<16x16xf32> to vector<16xf32>
    %35 = vector.shape_cast %34 : vector<16xf32> to vector<16x1xf32>
    %36 = tpu.reciprocal %35 {approx = true} : vector<16x1xf32> -> vector<16x1xf32>
    %37 = vector.broadcast %36 : vector<16x1xf32> to vector<16x16xf32>
    %38 = arith.mulf %33, %37 : vector<16x16xf32>
    %39 = arith.truncf %38 : vector<16x16xf32> to vector<16x16xbf16>
    %40 = vector.extract_strided_slice %18 {offsets = [0, 0], sizes = [16, 8], strides = [1, 1]} : vector<16x32xbf16> to vector<16x8xbf16>
    %cst_23 = arith.constant dense<0.000000e+00> : vector<16x8xf32>
    %41 = tpu.matmul %39, %40, %cst_23 {dimension_numbers = #tpu.dot_dimension_numbers<[1], [0], [0], [1], [0, 0, 1, 1], [], []>} : vector<16x16xbf16>, vector<16x8xbf16>, vector<16x8xf32> -> vector<16x8xf32>
    %42 = arith.truncf %41 : vector<16x8xf32> to vector<16x8xbf16>
    %43 = vector.extract_strided_slice %21 {offsets = [0, 0], sizes = [8, 32], strides = [1, 1]} : vector<32x32xbf16> to vector<8x32xbf16>
    %cst_24 = arith.constant dense<0.000000e+00> : vector<16x32xf32>
    %44 = tpu.matmul %42, %43, %cst_24 {dimension_numbers = #tpu.dot_dimension_numbers<[1], [0], [0], [1], [0, 0, 1, 1], [], []>} : vector<16x8xbf16>, vector<8x32xbf16>, vector<16x32xf32> -> vector<16x32xf32>
    %45 = arith.addf %22, %44 : vector<16x32xf32>
    %46 = vector.extract_strided_slice %16 {offsets = [0, 8], sizes = [16, 8], strides = [1, 1]} : vector<16x32xbf16> to vector<16x8xbf16>
    %47 = vector.extract_strided_slice %17 {offsets = [0, 8], sizes = [16, 8], strides = [1, 1]} : vector<16x32xbf16> to vector<16x8xbf16>
    %cst_25 = arith.constant dense<0.000000e+00> : vector<16x16xf32>
    %48 = tpu.matmul %46, %47, %cst_25 {dimension_numbers = #tpu.dot_dimension_numbers<[1], [1], [0], [0], [0, 0, 1, 0], [], []>} : vector<16x8xbf16>, vector<16x8xbf16>, vector<16x16xf32> -> vector<16x16xf32>
    %cst_26 = arith.constant 0.353553385 : f32
    %49 = vector.broadcast %cst_26 : f32 to vector<16x16xf32>
    %50 = arith.mulf %48, %49 : vector<16x16xf32>
    %51 = arith.addf %50, %19 : vector<16x16xf32>
    %cst_27 = arith.constant dense<0xFF800000> : vector<16xf32>
    %52 = vector.multi_reduction <maximumf>, %51, %cst_27 [1] : vector<16x16xf32> to vector<16xf32>
    %53 = vector.shape_cast %52 : vector<16xf32> to vector<16x1xf32>
    %54 = vector.broadcast %53 : vector<16x1xf32> to vector<16x16xf32>
    %55 = arith.subf %51, %54 : vector<16x16xf32>
    %56 = math.exp %55 : vector<16x16xf32>
    %cst_28 = arith.constant dense<0.000000e+00> : vector<16xf32>
    %57 = vector.multi_reduction <add>, %56, %cst_28 [1] : vector<16x16xf32> to vector<16xf32>
    %58 = vector.shape_cast %57 : vector<16xf32> to vector<16x1xf32>
    %59 = tpu.reciprocal %58 {approx = true} : vector<16x1xf32> -> vector<16x1xf32>
    %60 = vector.broadcast %59 : vector<16x1xf32> to vector<16x16xf32>
    %61 = arith.mulf %56, %60 : vector<16x16xf32>
    %62 = arith.truncf %61 : vector<16x16xf32> to vector<16x16xbf16>
    %63 = vector.extract_strided_slice %18 {offsets = [0, 8], sizes = [16, 8], strides = [1, 1]} : vector<16x32xbf16> to vector<16x8xbf16>
    %cst_29 = arith.constant dense<0.000000e+00> : vector<16x8xf32>
    %64 = tpu.matmul %62, %63, %cst_29 {dimension_numbers = #tpu.dot_dimension_numbers<[1], [0], [0], [1], [0, 0, 1, 1], [], []>} : vector<16x16xbf16>, vector<16x8xbf16>, vector<16x8xf32> -> vector<16x8xf32>
    %65 = arith.truncf %64 : vector<16x8xf32> to vector<16x8xbf16>
    %66 = vector.extract_strided_slice %21 {offsets = [8, 0], sizes = [8, 32], strides = [1, 1]} : vector<32x32xbf16> to vector<8x32xbf16>
    %cst_30 = arith.constant dense<0.000000e+00> : vector<16x32xf32>
    %67 = tpu.matmul %65, %66, %cst_30 {dimension_numbers = #tpu.dot_dimension_numbers<[1], [0], [0], [1], [0, 0, 1, 1], [], []>} : vector<16x8xbf16>, vector<8x32xbf16>, vector<16x32xf32> -> vector<16x32xf32>
    %68 = arith.addf %45, %67 : vector<16x32xf32>
    %69 = vector.extract_strided_slice %16 {offsets = [0, 16], sizes = [16, 8], strides = [1, 1]} : vector<16x32xbf16> to vector<16x8xbf16>
    %70 = vector.extract_strided_slice %17 {offsets = [0, 16], sizes = [16, 8], strides = [1, 1]} : vector<16x32xbf16> to vector<16x8xbf16>
    %cst_31 = arith.constant dense<0.000000e+00> : vector<16x16xf32>
    %71 = tpu.matmul %69, %70, %cst_31 {dimension_numbers = #tpu.dot_dimension_numbers<[1], [1], [0], [0], [0, 0, 1, 0], [], []>} : vector<16x8xbf16>, vector<16x8xbf16>, vector<16x16xf32> -> vector<16x16xf32>
    %cst_32 = arith.constant 0.353553385 : f32
    %72 = vector.broadcast %cst_32 : f32 to vector<16x16xf32>
    %73 = arith.mulf %71, %72 : vector<16x16xf32>
    %74 = arith.addf %73, %19 : vector<16x16xf32>
    %cst_33 = arith.constant dense<0xFF800000> : vector<16xf32>
    %75 = vector.multi_reduction <maximumf>, %74, %cst_33 [1] : vector<16x16xf32> to vector<16xf32>
    %76 = vector.shape_cast %75 : vector<16xf32> to vector<16x1xf32>
    %77 = vector.broadcast %76 : vector<16x1xf32> to vector<16x16xf32>
    %78 = arith.subf %74, %77 : vector<16x16xf32>
    %79 = math.exp %78 : vector<16x16xf32>
    %cst_34 = arith.constant dense<0.000000e+00> : vector<16xf32>
    %80 = vector.multi_reduction <add>, %79, %cst_34 [1] : vector<16x16xf32> to vector<16xf32>
    %81 = vector.shape_cast %80 : vector<16xf32> to vector<16x1xf32>
    %82 = tpu.reciprocal %81 {approx = true} : vector<16x1xf32> -> vector<16x1xf32>
    %83 = vector.broadcast %82 : vector<16x1xf32> to vector<16x16xf32>
    %84 = arith.mulf %79, %83 : vector<16x16xf32>
    %85 = arith.truncf %84 : vector<16x16xf32> to vector<16x16xbf16>
    %86 = vector.extract_strided_slice %18 {offsets = [0, 16], sizes = [16, 8], strides = [1, 1]} : vector<16x32xbf16> to vector<16x8xbf16>
    %cst_35 = arith.constant dense<0.000000e+00> : vector<16x8xf32>
    %87 = tpu.matmul %85, %86, %cst_35 {dimension_numbers = #tpu.dot_dimension_numbers<[1], [0], [0], [1], [0, 0, 1, 1], [], []>} : vector<16x16xbf16>, vector<16x8xbf16>, vector<16x8xf32> -> vector<16x8xf32>
    %88 = arith.truncf %87 : vector<16x8xf32> to vector<16x8xbf16>
    %89 = vector.extract_strided_slice %21 {offsets = [16, 0], sizes = [8, 32], strides = [1, 1]} : vector<32x32xbf16> to vector<8x32xbf16>
    %cst_36 = arith.constant dense<0.000000e+00> : vector<16x32xf32>
    %90 = tpu.matmul %88, %89, %cst_36 {dimension_numbers = #tpu.dot_dimension_numbers<[1], [0], [0], [1], [0, 0, 1, 1], [], []>} : vector<16x8xbf16>, vector<8x32xbf16>, vector<16x32xf32> -> vector<16x32xf32>
    %91 = arith.addf %68, %90 : vector<16x32xf32>
    %92 = vector.extract_strided_slice %16 {offsets = [0, 24], sizes = [16, 8], strides = [1, 1]} : vector<16x32xbf16> to vector<16x8xbf16>
    %93 = vector.extract_strided_slice %17 {offsets = [0, 24], sizes = [16, 8], strides = [1, 1]} : vector<16x32xbf16> to vector<16x8xbf16>
    %cst_37 = arith.constant dense<0.000000e+00> : vector<16x16xf32>
    %94 = tpu.matmul %92, %93, %cst_37 {dimension_numbers = #tpu.dot_dimension_numbers<[1], [1], [0], [0], [0, 0, 1, 0], [], []>} : vector<16x8xbf16>, vector<16x8xbf16>, vector<16x16xf32> -> vector<16x16xf32>
    %cst_38 = arith.constant 0.353553385 : f32
    %95 = vector.broadcast %cst_38 : f32 to vector<16x16xf32>
    %96 = arith.mulf %94, %95 : vector<16x16xf32>
    %97 = arith.addf %96, %19 : vector<16x16xf32>
    %cst_39 = arith.constant dense<0xFF800000> : vector<16xf32>
    %98 = vector.multi_reduction <maximumf>, %97, %cst_39 [1] : vector<16x16xf32> to vector<16xf32>
    %99 = vector.shape_cast %98 : vector<16xf32> to vector<16x1xf32>
    %100 = vector.broadcast %99 : vector<16x1xf32> to vector<16x16xf32>
    %101 = arith.subf %97, %100 : vector<16x16xf32>
    %102 = math.exp %101 : vector<16x16xf32>
    %cst_40 = arith.constant dense<0.000000e+00> : vector<16xf32>
    %103 = vector.multi_reduction <add>, %102, %cst_40 [1] : vector<16x16xf32> to vector<16xf32>
    %104 = vector.shape_cast %103 : vector<16xf32> to vector<16x1xf32>
    %105 = tpu.reciprocal %104 {approx = true} : vector<16x1xf32> -> vector<16x1xf32>
    %106 = vector.broadcast %105 : vector<16x1xf32> to vector<16x16xf32>
    %107 = arith.mulf %102, %106 : vector<16x16xf32>
    %108 = arith.truncf %107 : vector<16x16xf32> to vector<16x16xbf16>
    %109 = vector.extract_strided_slice %18 {offsets = [0, 24], sizes = [16, 8], strides = [1, 1]} : vector<16x32xbf16> to vector<16x8xbf16>
    %cst_41 = arith.constant dense<0.000000e+00> : vector<16x8xf32>
    %110 = tpu.matmul %108, %109, %cst_41 {dimension_numbers = #tpu.dot_dimension_numbers<[1], [0], [0], [1], [0, 0, 1, 1], [], []>} : vector<16x16xbf16>, vector<16x8xbf16>, vector<16x8xf32> -> vector<16x8xf32>
    %111 = arith.truncf %110 : vector<16x8xf32> to vector<16x8xbf16>
    %112 = vector.extract_strided_slice %21 {offsets = [24, 0], sizes = [8, 32], strides = [1, 1]} : vector<32x32xbf16> to vector<8x32xbf16>
    %cst_42 = arith.constant dense<0.000000e+00> : vector<16x32xf32>
    %113 = tpu.matmul %111, %112, %cst_42 {dimension_numbers = #tpu.dot_dimension_numbers<[1], [0], [0], [1], [0, 0, 1, 1], [], []>} : vector<16x8xbf16>, vector<8x32xbf16>, vector<16x32xf32> -> vector<16x32xf32>
    %114 = arith.addf %91, %113 : vector<16x32xf32>
    %c0_43 = arith.constant 0 : index
    %c0_44 = arith.constant 0 : index
    %c0_45 = arith.constant 0 : index
    %115 = vector.load %arg9[%c0_43, %c0_44, %c0_45] : memref<1x1x32xf32, #tpu.memory_space<vmem>>, vector<1x1x32xf32>
    %116 = vector.shape_cast %115 : vector<1x1x32xf32> to vector<1x32xf32>
    %117 = vector.broadcast %116 : vector<1x32xf32> to vector<16x32xf32>
    %118 = arith.addf %114, %117 : vector<16x32xf32>
    %119 = arith.addf %3, %118 : vector<16x32xf32>
    %120 = vector.extract_strided_slice %6 {offsets = [0, 0], sizes = [1, 32], strides = [1, 1]} : vector<6x32xf32> to vector<1x32xf32>
    %121 = vector.extract_strided_slice %6 {offsets = [1, 0], sizes = [1, 32], strides = [1, 1]} : vector<6x32xf32> to vector<1x32xf32>
    %cst_46 = arith.constant dense<0.000000e+00> : vector<16xf32>
    %122 = vector.multi_reduction <add>, %119, %cst_46 [1] : vector<16x32xf32> to vector<16xf32>
    %123 = vector.shape_cast %122 : vector<16xf32> to vector<16x1xf32>
    %124 = arith.mulf %119, %119 : vector<16x32xf32>
    %cst_47 = arith.constant dense<0.000000e+00> : vector<16xf32>
    %125 = vector.multi_reduction <add>, %124, %cst_47 [1] : vector<16x32xf32> to vector<16xf32>
    %126 = vector.shape_cast %125 : vector<16xf32> to vector<16x1xf32>
    %cst_48 = arith.constant 3.125000e-02 : f32
    %127 = vector.broadcast %cst_48 : f32 to vector<16x1xf32>
    %128 = arith.mulf %123, %127 : vector<16x1xf32>
    %cst_49 = arith.constant 3.125000e-02 : f32
    %129 = vector.broadcast %cst_49 : f32 to vector<16x1xf32>
    %130 = arith.mulf %126, %129 : vector<16x1xf32>
    %131 = arith.mulf %128, %128 : vector<16x1xf32>
    %132 = arith.subf %130, %131 : vector<16x1xf32>
    %133 = vector.broadcast %128 : vector<16x1xf32> to vector<16x32xf32>
    %134 = arith.subf %119, %133 : vector<16x32xf32>
    %cst_50 = arith.constant 9.99999974E-6 : f32
    %135 = vector.broadcast %cst_50 : f32 to vector<16x1xf32>
    %136 = arith.addf %132, %135 : vector<16x1xf32>
    %137 = math.rsqrt %136 : vector<16x1xf32>
    %138 = vector.broadcast %137 : vector<16x1xf32> to vector<16x32xf32>
    %139 = arith.mulf %134, %138 : vector<16x32xf32>
    %140 = vector.broadcast %120 : vector<1x32xf32> to vector<16x32xf32>
    %141 = arith.mulf %139, %140 : vector<16x32xf32>
    %142 = vector.broadcast %121 : vector<1x32xf32> to vector<16x32xf32>
    %143 = arith.addf %141, %142 : vector<16x32xf32>
    %c0_51 = arith.constant 0 : index
    %c0_52 = arith.constant 0 : index
    %c0_53 = arith.constant 0 : index
    %144 = vector.load %arg10[%c0_51, %c0_52, %c0_53] : memref<1x32x32xbf16, #tpu.memory_space<vmem>>, vector<1x32x32xbf16>
    %145 = vector.shape_cast %144 : vector<1x32x32xbf16> to vector<32x32xbf16>
    %146 = arith.truncf %143 : vector<16x32xf32> to vector<16x32xbf16>
    %cst_54 = arith.constant dense<0.000000e+00> : vector<16x32xf32>
    %147 = tpu.matmul %146, %145, %cst_54 {dimension_numbers = #tpu.dot_dimension_numbers<[1], [0], [0], [1], [0, 0, 1, 1], [], []>} : vector<16x32xbf16>, vector<32x32xbf16>, vector<16x32xf32> -> vector<16x32xf32>
    %c0_55 = arith.constant 0 : index
    %c0_56 = arith.constant 0 : index
    %c0_57 = arith.constant 0 : index
    %148 = vector.load %arg11[%c0_55, %c0_56, %c0_57] : memref<1x1x32xf32, #tpu.memory_space<vmem>>, vector<1x1x32xf32>
    %149 = vector.shape_cast %148 : vector<1x1x32xf32> to vector<1x32xf32>
    %150 = vector.broadcast %149 : vector<1x32xf32> to vector<16x32xf32>
    %151 = arith.addf %147, %150 : vector<16x32xf32>
    %152 = arith.truncf %151 : vector<16x32xf32> to vector<16x32xbf16>
    %c0_58 = arith.constant 0 : index
    %c0_59 = arith.constant 0 : index
    %c0_60 = arith.constant 0 : index
    %153 = vector.load %arg12[%c0_58, %c0_59, %c0_60] : memref<1x32x64xbf16, #tpu.memory_space<vmem>>, vector<1x32x64xbf16>
    %154 = vector.shape_cast %153 : vector<1x32x64xbf16> to vector<32x64xbf16>
    %155 = arith.truncf %4 : vector<32x32xf32> to vector<32x32xbf16>
    %cst_61 = arith.constant dense<0.000000e+00> : vector<32x64xf32>
    %156 = tpu.matmul %155, %154, %cst_61 {dimension_numbers = #tpu.dot_dimension_numbers<[1], [0], [0], [1], [0, 0, 1, 1], [], []>} : vector<32x32xbf16>, vector<32x64xbf16>, vector<32x64xf32> -> vector<32x64xf32>
    %c0_62 = arith.constant 0 : index
    %c0_63 = arith.constant 0 : index
    %c0_64 = arith.constant 0 : index
    %157 = vector.load %arg13[%c0_62, %c0_63, %c0_64] : memref<1x1x64xf32, #tpu.memory_space<vmem>>, vector<1x1x64xf32>
    %158 = vector.shape_cast %157 : vector<1x1x64xf32> to vector<1x64xf32>
    %159 = vector.broadcast %158 : vector<1x64xf32> to vector<32x64xf32>
    %160 = arith.addf %156, %159 : vector<32x64xf32>
    %161 = arith.truncf %160 : vector<32x64xf32> to vector<32x64xbf16>
    %162 = vector.extract_strided_slice %161 {offsets = [0, 0], sizes = [32, 32], strides = [1, 1]} : vector<32x64xbf16> to vector<32x32xbf16>
    %163 = vector.extract_strided_slice %161 {offsets = [0, 32], sizes = [32, 32], strides = [1, 1]} : vector<32x64xbf16> to vector<32x32xbf16>
    %c0_65 = arith.constant 0 : index
    %c0_66 = arith.constant 0 : index
    %164 = vector.load %arg5[%c0_65, %c0_66] : memref<16x32xf32, #tpu.memory_space<vmem>>, vector<16x32xf32>
    %c0_67 = arith.constant 0 : index
    %c0_68 = arith.constant 0 : index
    %c0_69 = arith.constant 0 : index
    %165 = vector.load %arg14[%c0_67, %c0_68, %c0_69] : memref<1x32x32xbf16, #tpu.memory_space<vmem>>, vector<1x32x32xbf16>
    %166 = vector.shape_cast %165 : vector<1x32x32xbf16> to vector<32x32xbf16>
    %cst_70 = arith.constant 0.000000e+00 : f32
    %167 = vector.broadcast %cst_70 : f32 to vector<16x32xf32>
    %168 = vector.extract_strided_slice %152 {offsets = [0, 0], sizes = [16, 8], strides = [1, 1]} : vector<16x32xbf16> to vector<16x8xbf16>
    %169 = vector.extract_strided_slice %162 {offsets = [0, 0], sizes = [32, 8], strides = [1, 1]} : vector<32x32xbf16> to vector<32x8xbf16>
    %cst_71 = arith.constant dense<0.000000e+00> : vector<16x32xf32>
    %170 = tpu.matmul %168, %169, %cst_71 {dimension_numbers = #tpu.dot_dimension_numbers<[1], [1], [0], [0], [0, 0, 1, 0], [], []>} : vector<16x8xbf16>, vector<32x8xbf16>, vector<16x32xf32> -> vector<16x32xf32>
    %cst_72 = arith.constant 0.353553385 : f32
    %171 = vector.broadcast %cst_72 : f32 to vector<16x32xf32>
    %172 = arith.mulf %170, %171 : vector<16x32xf32>
    %173 = arith.addf %172, %164 : vector<16x32xf32>
    %cst_73 = arith.constant dense<0xFF800000> : vector<16xf32>
    %174 = vector.multi_reduction <maximumf>, %173, %cst_73 [1] : vector<16x32xf32> to vector<16xf32>
    %175 = vector.shape_cast %174 : vector<16xf32> to vector<16x1xf32>
    %176 = vector.broadcast %175 : vector<16x1xf32> to vector<16x32xf32>
    %177 = arith.subf %173, %176 : vector<16x32xf32>
    %178 = math.exp %177 : vector<16x32xf32>
    %cst_74 = arith.constant dense<0.000000e+00> : vector<16xf32>
    %179 = vector.multi_reduction <add>, %178, %cst_74 [1] : vector<16x32xf32> to vector<16xf32>
    %180 = vector.shape_cast %179 : vector<16xf32> to vector<16x1xf32>
    %181 = tpu.reciprocal %180 {approx = true} : vector<16x1xf32> -> vector<16x1xf32>
    %182 = vector.broadcast %181 : vector<16x1xf32> to vector<16x32xf32>
    %183 = arith.mulf %178, %182 : vector<16x32xf32>
    %184 = arith.truncf %183 : vector<16x32xf32> to vector<16x32xbf16>
    %185 = vector.extract_strided_slice %163 {offsets = [0, 0], sizes = [32, 8], strides = [1, 1]} : vector<32x32xbf16> to vector<32x8xbf16>
    %cst_75 = arith.constant dense<0.000000e+00> : vector<16x8xf32>
    %186 = tpu.matmul %184, %185, %cst_75 {dimension_numbers = #tpu.dot_dimension_numbers<[1], [0], [0], [1], [0, 0, 1, 1], [], []>} : vector<16x32xbf16>, vector<32x8xbf16>, vector<16x8xf32> -> vector<16x8xf32>
    %187 = arith.truncf %186 : vector<16x8xf32> to vector<16x8xbf16>
    %188 = vector.extract_strided_slice %166 {offsets = [0, 0], sizes = [8, 32], strides = [1, 1]} : vector<32x32xbf16> to vector<8x32xbf16>
    %cst_76 = arith.constant dense<0.000000e+00> : vector<16x32xf32>
    %189 = tpu.matmul %187, %188, %cst_76 {dimension_numbers = #tpu.dot_dimension_numbers<[1], [0], [0], [1], [0, 0, 1, 1], [], []>} : vector<16x8xbf16>, vector<8x32xbf16>, vector<16x32xf32> -> vector<16x32xf32>
    %190 = arith.addf %167, %189 : vector<16x32xf32>
    %191 = vector.extract_strided_slice %152 {offsets = [0, 8], sizes = [16, 8], strides = [1, 1]} : vector<16x32xbf16> to vector<16x8xbf16>
    %192 = vector.extract_strided_slice %162 {offsets = [0, 8], sizes = [32, 8], strides = [1, 1]} : vector<32x32xbf16> to vector<32x8xbf16>
    %cst_77 = arith.constant dense<0.000000e+00> : vector<16x32xf32>
    %193 = tpu.matmul %191, %192, %cst_77 {dimension_numbers = #tpu.dot_dimension_numbers<[1], [1], [0], [0], [0, 0, 1, 0], [], []>} : vector<16x8xbf16>, vector<32x8xbf16>, vector<16x32xf32> -> vector<16x32xf32>
    %cst_78 = arith.constant 0.353553385 : f32
    %194 = vector.broadcast %cst_78 : f32 to vector<16x32xf32>
    %195 = arith.mulf %193, %194 : vector<16x32xf32>
    %196 = arith.addf %195, %164 : vector<16x32xf32>
    %cst_79 = arith.constant dense<0xFF800000> : vector<16xf32>
    %197 = vector.multi_reduction <maximumf>, %196, %cst_79 [1] : vector<16x32xf32> to vector<16xf32>
    %198 = vector.shape_cast %197 : vector<16xf32> to vector<16x1xf32>
    %199 = vector.broadcast %198 : vector<16x1xf32> to vector<16x32xf32>
    %200 = arith.subf %196, %199 : vector<16x32xf32>
    %201 = math.exp %200 : vector<16x32xf32>
    %cst_80 = arith.constant dense<0.000000e+00> : vector<16xf32>
    %202 = vector.multi_reduction <add>, %201, %cst_80 [1] : vector<16x32xf32> to vector<16xf32>
    %203 = vector.shape_cast %202 : vector<16xf32> to vector<16x1xf32>
    %204 = tpu.reciprocal %203 {approx = true} : vector<16x1xf32> -> vector<16x1xf32>
    %205 = vector.broadcast %204 : vector<16x1xf32> to vector<16x32xf32>
    %206 = arith.mulf %201, %205 : vector<16x32xf32>
    %207 = arith.truncf %206 : vector<16x32xf32> to vector<16x32xbf16>
    %208 = vector.extract_strided_slice %163 {offsets = [0, 8], sizes = [32, 8], strides = [1, 1]} : vector<32x32xbf16> to vector<32x8xbf16>
    %cst_81 = arith.constant dense<0.000000e+00> : vector<16x8xf32>
    %209 = tpu.matmul %207, %208, %cst_81 {dimension_numbers = #tpu.dot_dimension_numbers<[1], [0], [0], [1], [0, 0, 1, 1], [], []>} : vector<16x32xbf16>, vector<32x8xbf16>, vector<16x8xf32> -> vector<16x8xf32>
    %210 = arith.truncf %209 : vector<16x8xf32> to vector<16x8xbf16>
    %211 = vector.extract_strided_slice %166 {offsets = [8, 0], sizes = [8, 32], strides = [1, 1]} : vector<32x32xbf16> to vector<8x32xbf16>
    %cst_82 = arith.constant dense<0.000000e+00> : vector<16x32xf32>
    %212 = tpu.matmul %210, %211, %cst_82 {dimension_numbers = #tpu.dot_dimension_numbers<[1], [0], [0], [1], [0, 0, 1, 1], [], []>} : vector<16x8xbf16>, vector<8x32xbf16>, vector<16x32xf32> -> vector<16x32xf32>
    %213 = arith.addf %190, %212 : vector<16x32xf32>
    %214 = vector.extract_strided_slice %152 {offsets = [0, 16], sizes = [16, 8], strides = [1, 1]} : vector<16x32xbf16> to vector<16x8xbf16>
    %215 = vector.extract_strided_slice %162 {offsets = [0, 16], sizes = [32, 8], strides = [1, 1]} : vector<32x32xbf16> to vector<32x8xbf16>
    %cst_83 = arith.constant dense<0.000000e+00> : vector<16x32xf32>
    %216 = tpu.matmul %214, %215, %cst_83 {dimension_numbers = #tpu.dot_dimension_numbers<[1], [1], [0], [0], [0, 0, 1, 0], [], []>} : vector<16x8xbf16>, vector<32x8xbf16>, vector<16x32xf32> -> vector<16x32xf32>
    %cst_84 = arith.constant 0.353553385 : f32
    %217 = vector.broadcast %cst_84 : f32 to vector<16x32xf32>
    %218 = arith.mulf %216, %217 : vector<16x32xf32>
    %219 = arith.addf %218, %164 : vector<16x32xf32>
    %cst_85 = arith.constant dense<0xFF800000> : vector<16xf32>
    %220 = vector.multi_reduction <maximumf>, %219, %cst_85 [1] : vector<16x32xf32> to vector<16xf32>
    %221 = vector.shape_cast %220 : vector<16xf32> to vector<16x1xf32>
    %222 = vector.broadcast %221 : vector<16x1xf32> to vector<16x32xf32>
    %223 = arith.subf %219, %222 : vector<16x32xf32>
    %224 = math.exp %223 : vector<16x32xf32>
    %cst_86 = arith.constant dense<0.000000e+00> : vector<16xf32>
    %225 = vector.multi_reduction <add>, %224, %cst_86 [1] : vector<16x32xf32> to vector<16xf32>
    %226 = vector.shape_cast %225 : vector<16xf32> to vector<16x1xf32>
    %227 = tpu.reciprocal %226 {approx = true} : vector<16x1xf32> -> vector<16x1xf32>
    %228 = vector.broadcast %227 : vector<16x1xf32> to vector<16x32xf32>
    %229 = arith.mulf %224, %228 : vector<16x32xf32>
    %230 = arith.truncf %229 : vector<16x32xf32> to vector<16x32xbf16>
    %231 = vector.extract_strided_slice %163 {offsets = [0, 16], sizes = [32, 8], strides = [1, 1]} : vector<32x32xbf16> to vector<32x8xbf16>
    %cst_87 = arith.constant dense<0.000000e+00> : vector<16x8xf32>
    %232 = tpu.matmul %230, %231, %cst_87 {dimension_numbers = #tpu.dot_dimension_numbers<[1], [0], [0], [1], [0, 0, 1, 1], [], []>} : vector<16x32xbf16>, vector<32x8xbf16>, vector<16x8xf32> -> vector<16x8xf32>
    %233 = arith.truncf %232 : vector<16x8xf32> to vector<16x8xbf16>
    %234 = vector.extract_strided_slice %166 {offsets = [16, 0], sizes = [8, 32], strides = [1, 1]} : vector<32x32xbf16> to vector<8x32xbf16>
    %cst_88 = arith.constant dense<0.000000e+00> : vector<16x32xf32>
    %235 = tpu.matmul %233, %234, %cst_88 {dimension_numbers = #tpu.dot_dimension_numbers<[1], [0], [0], [1], [0, 0, 1, 1], [], []>} : vector<16x8xbf16>, vector<8x32xbf16>, vector<16x32xf32> -> vector<16x32xf32>
    %236 = arith.addf %213, %235 : vector<16x32xf32>
    %237 = vector.extract_strided_slice %152 {offsets = [0, 24], sizes = [16, 8], strides = [1, 1]} : vector<16x32xbf16> to vector<16x8xbf16>
    %238 = vector.extract_strided_slice %162 {offsets = [0, 24], sizes = [32, 8], strides = [1, 1]} : vector<32x32xbf16> to vector<32x8xbf16>
    %cst_89 = arith.constant dense<0.000000e+00> : vector<16x32xf32>
    %239 = tpu.matmul %237, %238, %cst_89 {dimension_numbers = #tpu.dot_dimension_numbers<[1], [1], [0], [0], [0, 0, 1, 0], [], []>} : vector<16x8xbf16>, vector<32x8xbf16>, vector<16x32xf32> -> vector<16x32xf32>
    %cst_90 = arith.constant 0.353553385 : f32
    %240 = vector.broadcast %cst_90 : f32 to vector<16x32xf32>
    %241 = arith.mulf %239, %240 : vector<16x32xf32>
    %242 = arith.addf %241, %164 : vector<16x32xf32>
    %cst_91 = arith.constant dense<0xFF800000> : vector<16xf32>
    %243 = vector.multi_reduction <maximumf>, %242, %cst_91 [1] : vector<16x32xf32> to vector<16xf32>
    %244 = vector.shape_cast %243 : vector<16xf32> to vector<16x1xf32>
    %245 = vector.broadcast %244 : vector<16x1xf32> to vector<16x32xf32>
    %246 = arith.subf %242, %245 : vector<16x32xf32>
    %247 = math.exp %246 : vector<16x32xf32>
    %cst_92 = arith.constant dense<0.000000e+00> : vector<16xf32>
    %248 = vector.multi_reduction <add>, %247, %cst_92 [1] : vector<16x32xf32> to vector<16xf32>
    %249 = vector.shape_cast %248 : vector<16xf32> to vector<16x1xf32>
    %250 = tpu.reciprocal %249 {approx = true} : vector<16x1xf32> -> vector<16x1xf32>
    %251 = vector.broadcast %250 : vector<16x1xf32> to vector<16x32xf32>
    %252 = arith.mulf %247, %251 : vector<16x32xf32>
    %253 = arith.truncf %252 : vector<16x32xf32> to vector<16x32xbf16>
    %254 = vector.extract_strided_slice %163 {offsets = [0, 24], sizes = [32, 8], strides = [1, 1]} : vector<32x32xbf16> to vector<32x8xbf16>
    %cst_93 = arith.constant dense<0.000000e+00> : vector<16x8xf32>
    %255 = tpu.matmul %253, %254, %cst_93 {dimension_numbers = #tpu.dot_dimension_numbers<[1], [0], [0], [1], [0, 0, 1, 1], [], []>} : vector<16x32xbf16>, vector<32x8xbf16>, vector<16x8xf32> -> vector<16x8xf32>
    %256 = arith.truncf %255 : vector<16x8xf32> to vector<16x8xbf16>
    %257 = vector.extract_strided_slice %166 {offsets = [24, 0], sizes = [8, 32], strides = [1, 1]} : vector<32x32xbf16> to vector<8x32xbf16>
    %cst_94 = arith.constant dense<0.000000e+00> : vector<16x32xf32>
    %258 = tpu.matmul %256, %257, %cst_94 {dimension_numbers = #tpu.dot_dimension_numbers<[1], [0], [0], [1], [0, 0, 1, 1], [], []>} : vector<16x8xbf16>, vector<8x32xbf16>, vector<16x32xf32> -> vector<16x32xf32>
    %259 = arith.addf %236, %258 : vector<16x32xf32>
    %c0_95 = arith.constant 0 : index
    %c0_96 = arith.constant 0 : index
    %c0_97 = arith.constant 0 : index
    %260 = vector.load %arg15[%c0_95, %c0_96, %c0_97] : memref<1x1x32xf32, #tpu.memory_space<vmem>>, vector<1x1x32xf32>
    %261 = vector.shape_cast %260 : vector<1x1x32xf32> to vector<1x32xf32>
    %262 = vector.broadcast %261 : vector<1x32xf32> to vector<16x32xf32>
    %263 = arith.addf %259, %262 : vector<16x32xf32>
    %264 = arith.addf %143, %263 : vector<16x32xf32>
    %265 = vector.extract_strided_slice %6 {offsets = [2, 0], sizes = [1, 32], strides = [1, 1]} : vector<6x32xf32> to vector<1x32xf32>
    %266 = vector.extract_strided_slice %6 {offsets = [3, 0], sizes = [1, 32], strides = [1, 1]} : vector<6x32xf32> to vector<1x32xf32>
    %cst_98 = arith.constant dense<0.000000e+00> : vector<16xf32>
    %267 = vector.multi_reduction <add>, %264, %cst_98 [1] : vector<16x32xf32> to vector<16xf32>
    %268 = vector.shape_cast %267 : vector<16xf32> to vector<16x1xf32>
    %269 = arith.mulf %264, %264 : vector<16x32xf32>
    %cst_99 = arith.constant dense<0.000000e+00> : vector<16xf32>
    %270 = vector.multi_reduction <add>, %269, %cst_99 [1] : vector<16x32xf32> to vector<16xf32>
    %271 = vector.shape_cast %270 : vector<16xf32> to vector<16x1xf32>
    %cst_100 = arith.constant 3.125000e-02 : f32
    %272 = vector.broadcast %cst_100 : f32 to vector<16x1xf32>
    %273 = arith.mulf %268, %272 : vector<16x1xf32>
    %cst_101 = arith.constant 3.125000e-02 : f32
    %274 = vector.broadcast %cst_101 : f32 to vector<16x1xf32>
    %275 = arith.mulf %271, %274 : vector<16x1xf32>
    %276 = arith.mulf %273, %273 : vector<16x1xf32>
    %277 = arith.subf %275, %276 : vector<16x1xf32>
    %278 = vector.broadcast %273 : vector<16x1xf32> to vector<16x32xf32>
    %279 = arith.subf %264, %278 : vector<16x32xf32>
    %cst_102 = arith.constant 9.99999974E-6 : f32
    %280 = vector.broadcast %cst_102 : f32 to vector<16x1xf32>
    %281 = arith.addf %277, %280 : vector<16x1xf32>
    %282 = math.rsqrt %281 : vector<16x1xf32>
    %283 = vector.broadcast %282 : vector<16x1xf32> to vector<16x32xf32>
    %284 = arith.mulf %279, %283 : vector<16x32xf32>
    %285 = vector.broadcast %265 : vector<1x32xf32> to vector<16x32xf32>
    %286 = arith.mulf %284, %285 : vector<16x32xf32>
    %287 = vector.broadcast %266 : vector<1x32xf32> to vector<16x32xf32>
    %288 = arith.addf %286, %287 : vector<16x32xf32>
    %c0_103 = arith.constant 0 : index
    %c0_104 = arith.constant 0 : index
    %c0_105 = arith.constant 0 : index
    %289 = vector.load %arg16[%c0_103, %c0_104, %c0_105] : memref<1x32x64xbf16, #tpu.memory_space<vmem>>, vector<1x32x64xbf16>
    %290 = vector.shape_cast %289 : vector<1x32x64xbf16> to vector<32x64xbf16>
    %291 = arith.truncf %288 : vector<16x32xf32> to vector<16x32xbf16>
    %cst_106 = arith.constant dense<0.000000e+00> : vector<16x64xf32>
    %292 = tpu.matmul %291, %290, %cst_106 {dimension_numbers = #tpu.dot_dimension_numbers<[1], [0], [0], [1], [0, 0, 1, 1], [], []>} : vector<16x32xbf16>, vector<32x64xbf16>, vector<16x64xf32> -> vector<16x64xf32>
    %c0_107 = arith.constant 0 : index
    %c0_108 = arith.constant 0 : index
    %c0_109 = arith.constant 0 : index
    %293 = vector.load %arg17[%c0_107, %c0_108, %c0_109] : memref<1x1x64xf32, #tpu.memory_space<vmem>>, vector<1x1x64xf32>
    %294 = vector.shape_cast %293 : vector<1x1x64xf32> to vector<1x64xf32>
    %295 = vector.broadcast %294 : vector<1x64xf32> to vector<16x64xf32>
    %296 = arith.addf %292, %295 : vector<16x64xf32>
    %cst_110 = arith.constant 0.000000e+00 : f32
    %297 = vector.broadcast %cst_110 : f32 to vector<16x64xf32>
    %298 = arith.maximumf %296, %297 : vector<16x64xf32>
    %c0_111 = arith.constant 0 : index
    %c0_112 = arith.constant 0 : index
    %c0_113 = arith.constant 0 : index
    %299 = vector.load %arg18[%c0_111, %c0_112, %c0_113] : memref<1x64x32xbf16, #tpu.memory_space<vmem>>, vector<1x64x32xbf16>
    %300 = vector.shape_cast %299 : vector<1x64x32xbf16> to vector<64x32xbf16>
    %301 = arith.truncf %298 : vector<16x64xf32> to vector<16x64xbf16>
    %cst_114 = arith.constant dense<0.000000e+00> : vector<16x32xf32>
    %302 = tpu.matmul %301, %300, %cst_114 {dimension_numbers = #tpu.dot_dimension_numbers<[1], [0], [0], [1], [0, 0, 1, 1], [], []>} : vector<16x64xbf16>, vector<64x32xbf16>, vector<16x32xf32> -> vector<16x32xf32>
    %c0_115 = arith.constant 0 : index
    %c0_116 = arith.constant 0 : index
    %c0_117 = arith.constant 0 : index
    %303 = vector.load %arg19[%c0_115, %c0_116, %c0_117] : memref<1x1x32xf32, #tpu.memory_space<vmem>>, vector<1x1x32xf32>
    %304 = vector.shape_cast %303 : vector<1x1x32xf32> to vector<1x32xf32>
    %305 = vector.broadcast %304 : vector<1x32xf32> to vector<16x32xf32>
    %306 = arith.addf %302, %305 : vector<16x32xf32>
    %307 = arith.addf %288, %306 : vector<16x32xf32>
    %308 = vector.extract_strided_slice %6 {offsets = [4, 0], sizes = [1, 32], strides = [1, 1]} : vector<6x32xf32> to vector<1x32xf32>
    %309 = vector.extract_strided_slice %6 {offsets = [5, 0], sizes = [1, 32], strides = [1, 1]} : vector<6x32xf32> to vector<1x32xf32>
    %cst_118 = arith.constant dense<0.000000e+00> : vector<16xf32>
    %310 = vector.multi_reduction <add>, %307, %cst_118 [1] : vector<16x32xf32> to vector<16xf32>
    %311 = vector.shape_cast %310 : vector<16xf32> to vector<16x1xf32>
    %312 = arith.mulf %307, %307 : vector<16x32xf32>
    %cst_119 = arith.constant dense<0.000000e+00> : vector<16xf32>
    %313 = vector.multi_reduction <add>, %312, %cst_119 [1] : vector<16x32xf32> to vector<16xf32>
    %314 = vector.shape_cast %313 : vector<16xf32> to vector<16x1xf32>
    %cst_120 = arith.constant 3.125000e-02 : f32
    %315 = vector.broadcast %cst_120 : f32 to vector<16x1xf32>
    %316 = arith.mulf %311, %315 : vector<16x1xf32>
    %cst_121 = arith.constant 3.125000e-02 : f32
    %317 = vector.broadcast %cst_121 : f32 to vector<16x1xf32>
    %318 = arith.mulf %314, %317 : vector<16x1xf32>
    %319 = arith.mulf %316, %316 : vector<16x1xf32>
    %320 = arith.subf %318, %319 : vector<16x1xf32>
    %321 = vector.broadcast %316 : vector<16x1xf32> to vector<16x32xf32>
    %322 = arith.subf %307, %321 : vector<16x32xf32>
    %cst_122 = arith.constant 9.99999974E-6 : f32
    %323 = vector.broadcast %cst_122 : f32 to vector<16x1xf32>
    %324 = arith.addf %320, %323 : vector<16x1xf32>
    %325 = math.rsqrt %324 : vector<16x1xf32>
    %326 = vector.broadcast %325 : vector<16x1xf32> to vector<16x32xf32>
    %327 = arith.mulf %322, %326 : vector<16x32xf32>
    %328 = vector.broadcast %308 : vector<1x32xf32> to vector<16x32xf32>
    %329 = arith.mulf %327, %328 : vector<16x32xf32>
    %330 = vector.broadcast %309 : vector<1x32xf32> to vector<16x32xf32>
    %331 = arith.addf %329, %330 : vector<16x32xf32>
    %c0_123 = arith.constant 0 : index
    %c0_124 = arith.constant 0 : index
    %332 = vector.load %arg22[%c0_123, %c0_124] : memref<16x32xf32, #tpu.memory_space<vmem>>, vector<16x32xf32>
    tpu.vector_store %arg22[%c0_123, %c0_124], %331 {strides = array<i32>} : memref<16x32xf32, #tpu.memory_space<vmem>>, vector<16x32xf32>,
    %c1_i32 = arith.constant 1 : i32
    %333 = arith.cmpi eq, %arg1, %c1_i32 : i32
    %334 = arith.extui %333 : i1 to i32
    %c0_i32_125 = arith.constant 0 : i32
    %335 = arith.cmpi ne, %334, %c0_i32_125 : i32
    scf.if %335 {
      %c0_126 = arith.constant 0 : index
      %c0_127 = arith.constant 0 : index
      %336 = vector.load %arg21[%c0_126, %c0_127] : memref<16x32xf32, #tpu.memory_space<vmem>>, vector<16x32xf32>
      tpu.vector_store %arg21[%c0_126, %c0_127], %331 {strides = array<i32>} : memref<16x32xf32, #tpu.memory_space<vmem>>, vector<16x32xf32>,
    } else {
    }
    return
  }
  func.func @transform_0(%arg0: i32, %arg1: i32) -> (i32, i32) {
    %c0_i32 = arith.constant 0 : i32
    %c0_i32_0 = arith.constant 0 : i32
    return %arg0, %c0_i32 : i32, i32
  }
  func.func @transform_1(%arg0: i32, %arg1: i32) -> (i32, i32) {
    %c0_i32 = arith.constant 0 : i32
    %c0_i32_0 = arith.constant 0 : i32
    return %arg0, %c0_i32 : i32, i32
  }
  func.func @transform_2(%arg0: i32, %arg1: i32) -> (i32, i32) {
    %c0_i32 = arith.constant 0 : i32
    return %arg0, %arg0 : i32, i32
  }
  func.func @transform_3(%arg0: i32, %arg1: i32) -> (i32, i32) {
    %c0_i32 = arith.constant 0 : i32
    return %arg0, %arg0 : i32, i32
  }
  func.func @transform_4(%arg0: i32, %arg1: i32) -> (i32, i32, i32) {
    %c0_i32 = arith.constant 0 : i32
    %c0_i32_0 = arith.constant 0 : i32
    %c0_i32_1 = arith.constant 0 : i32
    return %arg1, %c0_i32, %c0_i32_0 : i32, i32, i32
  }
  func.func @transform_5(%arg0: i32, %arg1: i32) -> (i32, i32, i32) {
    %c0_i32 = arith.constant 0 : i32
    %c0_i32_0 = arith.constant 0 : i32
    %c0_i32_1 = arith.constant 0 : i32
    return %arg1, %c0_i32, %c0_i32_0 : i32, i32, i32
  }
  func.func @transform_6(%arg0: i32, %arg1: i32) -> (i32, i32, i32) {
    %c0_i32 = arith.constant 0 : i32
    %c0_i32_0 = arith.constant 0 : i32
    %c0_i32_1 = arith.constant 0 : i32
    return %arg1, %c0_i32, %c0_i32_0 : i32, i32, i32
  }
  func.func @transform_7(%arg0: i32, %arg1: i32) -> (i32, i32, i32) {
    %c0_i32 = arith.constant 0 : i32
    %c0_i32_0 = arith.constant 0 : i32
    %c0_i32_1 = arith.constant 0 : i32
    return %arg1, %c0_i32, %c0_i32_0 : i32, i32, i32
  }
  func.func @transform_8(%arg0: i32, %arg1: i32) -> (i32, i32, i32) {
    %c0_i32 = arith.constant 0 : i32
    %c0_i32_0 = arith.constant 0 : i32
    %c0_i32_1 = arith.constant 0 : i32
    return %arg1, %c0_i32, %c0_i32_0 : i32, i32, i32
  }
  func.func @transform_9(%arg0: i32, %arg1: i32) -> (i32, i32, i32) {
    %c0_i32 = arith.constant 0 : i32
    %c0_i32_0 = arith.constant 0 : i32
    %c0_i32_1 = arith.constant 0 : i32
    return %arg1, %c0_i32, %c0_i32_0 : i32, i32, i32
  }
  func.func @transform_10(%arg0: i32, %arg1: i32) -> (i32, i32, i32) {
    %c0_i32 = arith.constant 0 : i32
    %c0_i32_0 = arith.constant 0 : i32
    %c0_i32_1 = arith.constant 0 : i32
    return %arg1, %c0_i32, %c0_i32_0 : i32, i32, i32
  }
  func.func @transform_11(%arg0: i32, %arg1: i32) -> (i32, i32, i32) {
    %c0_i32 = arith.constant 0 : i32
    %c0_i32_0 = arith.constant 0 : i32
    %c0_i32_1 = arith.constant 0 : i32
    return %arg1, %c0_i32, %c0_i32_0 : i32, i32, i32
  }
  func.func @transform_12(%arg0: i32, %arg1: i32) -> (i32, i32, i32) {
    %c0_i32 = arith.constant 0 : i32
    %c0_i32_0 = arith.constant 0 : i32
    %c0_i32_1 = arith.constant 0 : i32
    return %arg1, %c0_i32, %c0_i32_0 : i32, i32, i32
  }
  func.func @transform_13(%arg0: i32, %arg1: i32) -> (i32, i32, i32) {
    %c0_i32 = arith.constant 0 : i32
    %c0_i32_0 = arith.constant 0 : i32
    %c0_i32_1 = arith.constant 0 : i32
    return %arg1, %c0_i32, %c0_i32_0 : i32, i32, i32
  }
  func.func @transform_14(%arg0: i32, %arg1: i32) -> (i32, i32, i32) {
    %c0_i32 = arith.constant 0 : i32
    %c0_i32_0 = arith.constant 0 : i32
    %c0_i32_1 = arith.constant 0 : i32
    return %arg1, %c0_i32, %c0_i32_0 : i32, i32, i32
  }
  func.func @transform_15(%arg0: i32, %arg1: i32) -> (i32, i32, i32) {
    %c0_i32 = arith.constant 0 : i32
    %c0_i32_0 = arith.constant 0 : i32
    %c0_i32_1 = arith.constant 0 : i32
    return %arg1, %c0_i32, %c0_i32_0 : i32, i32, i32
  }
  func.func @transform_16(%arg0: i32, %arg1: i32) -> (i32, i32, i32) {
    %c0_i32 = arith.constant 0 : i32
    %c0_i32_0 = arith.constant 0 : i32
    %c0_i32_1 = arith.constant 0 : i32
    return %arg1, %c0_i32, %c0_i32_0 : i32, i32, i32
  }
  func.func @transform_17(%arg0: i32, %arg1: i32) -> (i32, i32, i32) {
    %c0_i32 = arith.constant 0 : i32
    %c0_i32_0 = arith.constant 0 : i32
    %c0_i32_1 = arith.constant 0 : i32
    return %arg1, %c0_i32, %c0_i32_0 : i32, i32, i32
  }
  func.func @transform_18(%arg0: i32, %arg1: i32) -> (i32, i32, i32) {
    %c0_i32 = arith.constant 0 : i32
    %c0_i32_0 = arith.constant 0 : i32
    %c0_i32_1 = arith.constant 0 : i32
    return %arg1, %c0_i32, %c0_i32_0 : i32, i32, i32
  }
  func.func @transform_19(%arg0: i32, %arg1: i32) -> (i32, i32) {
    %c0_i32 = arith.constant 0 : i32
    %c0_i32_0 = arith.constant 0 : i32
    return %arg0, %c0_i32 : i32, i32
  }
}

</mosaic_0001>

<llo_original>
// kernel: decoder_forward_pallas.1
$region0: #{decoder_forward_pallas.1}
  #allocation0 [shape = 'u32[]', space=smem, size = 0x4, offset = 0x4, fixed_abs, tag = 'smem constant byte address 0x4 - core index']
  #allocation1 [shape = 'u32[144,128]{1,0:T(1,128)}', space=vmem, size = 0x12000, scoped, tag = 'internal scratch']
  #allocation2 [shape = 'f32[16,32]{1,0:T(8,128)}', space=vmem, size = 0x2000, scoped, tag = 'scratch operand']
  %s0 = inlined_call_operand.vmem [shape: f32[16,32], index: 0, kind: input, shape index: {}]
  %s1 = inlined_call_operand.vmem [shape: f32[32,32], index: 1, kind: input, shape index: {}]
  %s2 = inlined_call_operand.vmem [shape: f32[16,16], index: 2, kind: input, shape index: {}]
  %s3 = inlined_call_operand.vmem [shape: f32[16,32], index: 3, kind: input, shape index: {}]
  %s4 = inlined_call_operand.vmem [shape: bf16[2,32,96], index: 4, kind: input, shape index: {}]
  %s5 = inlined_call_operand.vmem [shape: f32[2,1,96], index: 5, kind: input, shape index: {}]
  %s6 = inlined_call_operand.vmem [shape: bf16[2,32,32], index: 6, kind: input, shape index: {}]
  %s7 = inlined_call_operand.vmem [shape: f32[2,1,32], index: 7, kind: input, shape index: {}]
  %s8 = inlined_call_operand.vmem [shape: bf16[2,32,32], index: 8, kind: input, shape index: {}]
  %s9 = inlined_call_operand.vmem [shape: f32[2,1,32], index: 9, kind: input, shape index: {}]
  %s10 = inlined_call_operand.vmem [shape: bf16[2,32,64], index: 10, kind: input, shape index: {}]
  %s11 = inlined_call_operand.vmem [shape: f32[2,1,64], index: 11, kind: input, shape index: {}]
  %s12 = inlined_call_operand.vmem [shape: bf16[2,32,32], index: 12, kind: input, shape index: {}]
  %s13 = inlined_call_operand.vmem [shape: f32[2,1,32], index: 13, kind: input, shape index: {}]
  %s14 = inlined_call_operand.vmem [shape: bf16[2,32,64], index: 14, kind: input, shape index: {}]
  %s15 = inlined_call_operand.vmem [shape: f32[2,1,64], index: 15, kind: input, shape index: {}]
  %s16 = inlined_call_operand.vmem [shape: bf16[2,64,32], index: 16, kind: input, shape index: {}]
  %s17 = inlined_call_operand.vmem [shape: f32[2,1,32], index: 17, kind: input, shape index: {}]
  %s18 = inlined_call_operand.vmem [shape: f32[2,6,32], index: 18, kind: input, shape index: {}]
  %s19 = inlined_call_operand.hbm [shape: f32[16,32], index: 19, kind: output, shape index: {}]
  %s20 = sld [smem:[#allocation0]]
  $region117: #{decoder_forward_pallas.1} parent=0
    _
  %s22 = ssub.s32 1, %s20
  %s23 = scalar_select 0, %s22, %s20
  $region1: #{decoder_forward_pallas.1} parent=0
    #allocation3 [shape = 'u8[8192]{0}', space=vmem, size = 0x2000, scoped, tag = 'output window, operand 0, single buffered']
    #allocation4 [shape = 's32[2]{0}', space=sflag, size = 0x8, scoped, tag = 'scoped memory for decoder_forward_pallas.1']
    %24 = vsyncpa [#allocation4], 0
    loop: start=0, step=1, limit=4
    $region2: #{decoder_forward_pallas.1} parent=1 // loop_pre_header
      _
    $region3: #{decoder_forward_pallas.1} parent=1 // loop_header
      %s26 = sphi 0, %s30
      %p27 = scmp.ge.s32.totalorder %s26, 4
      %s33 = sphi 0, %s45
      %s34 = sphi 0, %s41
      %s35 = sphi 0, %s33
      %s36 = sphi 0, %s34
      %s37 = sphi 0, %s35
      %s38 = sphi 0, %s36
      %s48 = sphi 0, %s50
      %s51 = sphi 0, %s48
      %s52 = sphi 0, %s51
      %s68 = sphi 0, %s52
      %s74 = sphi 0, %s76
      %s77 = sphi 0, %s74
      %s78 = sphi 0, %s77
      %s94 = sphi 0, %s78
      %s102 = sphi 0, %s104
      %s105 = sphi 0, %s102
      %s106 = sphi 0, %s105
      %s122 = sphi 0, %s106
      %s130 = sphi 0, %s132
      %s133 = sphi 0, %s130
      %s134 = sphi 0, %s133
      %s150 = sphi 0, %s134
      %s156 = sphi 0, %s158
      %s159 = sphi 0, %s156
      %s160 = sphi 0, %s159
      %s176 = sphi 0, %s160
      %s182 = sphi 0, %s184
      %s185 = sphi 0, %s182
      %s186 = sphi 0, %s185
      %s202 = sphi 0, %s186
      %s208 = sphi 0, %s210
      %s211 = sphi 0, %s208
      %s212 = sphi 0, %s211
      %s228 = sphi 0, %s212
      %s234 = sphi 0, %s236
      %s237 = sphi 0, %s234
      %s238 = sphi 0, %s237
      %s254 = sphi 0, %s238
      %s260 = sphi 0, %s262
      %s263 = sphi 0, %s260
      %s264 = sphi 0, %s263
      %s280 = sphi 0, %s264
      %s286 = sphi 0, %s288
      %s289 = sphi 0, %s286
      %s290 = sphi 0, %s289
      %s306 = sphi 0, %s290
      %s312 = sphi 0, %s314
      %s315 = sphi 0, %s312
      %s316 = sphi 0, %s315
      %s332 = sphi 0, %s316
      %s338 = sphi 0, %s340
      %s341 = sphi 0, %s338
      %s342 = sphi 0, %s341
      %s358 = sphi 0, %s342
      %s364 = sphi 0, %s366
      %s367 = sphi 0, %s364
      %s368 = sphi 0, %s367
      %s384 = sphi 0, %s368
      %s390 = sphi 0, %s392
      %s393 = sphi 0, %s390
      %s394 = sphi 0, %s393
      %s410 = sphi 0, %s394
      %s416 = sphi 0, %s418
      %s419 = sphi 0, %s416
      %s420 = sphi 0, %s419
      %s436 = sphi 0, %s420
      %s442 = sphi 0, %s444
      %s445 = sphi 0, %s442
      %s446 = sphi 0, %s445
      %s462 = sphi 0, %s446
      %s468 = sphi 0, %s470
      %s471 = sphi 0, %s468
      %s472 = sphi 0, %s471
      %s488 = sphi 0, %s472
      %s494 = sphi 0, %s496
      %s497 = sphi 0, %s494
      %s498 = sphi 0, %s497
      %s514 = sphi 0, %s498
      %s520 = sphi 0, %s522
      %s523 = sphi 0, %s520
      %s524 = sphi 0, %s523
      %s540 = sphi 0, %s524
      %s546 = sphi 0, %s548
      %s549 = sphi 0, %s546
      %s550 = sphi 0, %s549
      %s566 = sphi 0, %s550
    $region4: #{decoder_forward_pallas.1} parent=1 // loop_header_branch
      %29 = sbr.rel (%p27) target = $region8
    $region5: #{decoder_forward_pallas.1} parent=1 // loop_body
      %s31 = ssub.s32 %s26, 1
      %s32 = ssub.s32 %s26, 2
      %s39 = sadd.s32 1, %s34
      %p40 = scmp.ge.s32.totalorder %s39, 2
      %s41 = scalar_select %p40, 0, %s39
      %s42 = sadd.s32 1, %s33
      %s43 = scalar_select %p40, %s42, %s33
      %p44 = scmp.ge.s32.totalorder %s43, 1
      %s45 = scalar_select %p44, 0, %s43
      %s46 = ssub.s32 %s33, %s45
      %p47 = scmp.eq.s32.totalorder %s46, 0
      %s49 = sadd.s32 %s48, 1
      %s50 = scalar_select %p47, %s48, %s49
      %p53 = pneg %p47
      %p54 = scmp.eq.s32.totalorder %s26, 1
      %p55 = por %p53, %p54
      %p56 = scmp.ne.s32.totalorder %s48, %s51
      %p57 = scmp.eq.s32.totalorder %s26, 0
      %p58 = por %p56, %p57
      %p59 = scmp.ne.s32.totalorder %s48, %s51
      %p60 = scmp.eq.s32.totalorder %s31, 1
      %p61 = por %p59, %p60
      %p62 = scmp.ne.s32.totalorder %s51, %s52
      %p63 = scmp.eq.s32.totalorder %s31, 0
      %p64 = por %p62, %p63
      %p65 = scmp.ne.s32.totalorder %s51, %s52
      %p66 = scmp.eq.s32.totalorder %s32, 1
      %p67 = por %p65, %p66
      %p69 = scmp.ne.s32.totalorder %s52, %s68
      %p70 = scmp.eq.s32.totalorder %s32, 0
      %p71 = por %p69, %p70
      %s72 = ssub.s32 %s33, %s45
      %p73 = scmp.eq.s32.totalorder %s72, 0
      %s75 = sadd.s32 %s74, 1
      %s76 = scalar_select %p73, %s74, %s75
      %p79 = pneg %p73
      %p80 = scmp.eq.s32.totalorder %s26, 1
      %p81 = por %p79, %p80
      %p82 = scmp.ne.s32.totalorder %s74, %s77
      %p83 = scmp.eq.s32.totalorder %s26, 0
      %p84 = por %p82, %p83
      %p85 = scmp.ne.s32.totalorder %s74, %s77
      %p86 = scmp.eq.s32.totalorder %s31, 1
      %p87 = por %p85, %p86
      %p88 = scmp.ne.s32.totalorder %s77, %s78
      %p89 = scmp.eq.s32.totalorder %s31, 0
      %p90 = por %p88, %p89
      %p91 = scmp.ne.s32.totalorder %s77, %s78
      %p92 = scmp.eq.s32.totalorder %s32, 1
      %p93 = por %p91, %p92
      %p95 = scmp.ne.s32.totalorder %s78, %s94
      %p96 = scmp.eq.s32.totalorder %s32, 0
      %p97 = por %p95, %p96
      %s98 = ssub.s32 %s33, %s45
      %s99 = ssub.s32 %s33, %s45
      %s100 = sor.u32 %s98, %s99
      %p101 = scmp.eq.s32.totalorder %s100, 0
      %s103 = sadd.s32 %s102, 1
      %s104 = scalar_select %p101, %s102, %s103
      %p107 = pneg %p101
      %p108 = scmp.eq.s32.totalorder %s26, 1
      %p109 = por %p107, %p108
      %p110 = scmp.ne.s32.totalorder %s102, %s105
      %p111 = scmp.eq.s32.totalorder %s26, 0
      %p112 = por %p110, %p111
      %p113 = scmp.ne.s32.totalorder %s102, %s105
      %p114 = scmp.eq.s32.totalorder %s31, 1
      %p115 = por %p113, %p114
      %p116 = scmp.ne.s32.totalorder %s105, %s106
      %p117 = scmp.eq.s32.totalorder %s31, 0
      %p118 = por %p116, %p117
      %p119 = scmp.ne.s32.totalorder %s105, %s106
      %p120 = scmp.eq.s32.totalorder %s32, 1
      %p121 = por %p119, %p120
      %p123 = scmp.ne.s32.totalorder %s106, %s122
      %p124 = scmp.eq.s32.totalorder %s32, 0
      %p125 = por %p123, %p124
      %s126 = ssub.s32 %s33, %s45
      %s127 = ssub.s32 %s33, %s45
      %s128 = sor.u32 %s126, %s127
      %p129 = scmp.eq.s32.totalorder %s128, 0
      %s131 = sadd.s32 %s130, 1
      %s132 = scalar_select %p129, %s130, %s131
      %p135 = pneg %p129
      %p136 = scmp.eq.s32.totalorder %s26, 1
      %p137 = por %p135, %p136
      %p138 = scmp.ne.s32.totalorder %s130, %s133
      %p139 = scmp.eq.s32.totalorder %s26, 0
      %p140 = por %p138, %p139
      %p141 = scmp.ne.s32.totalorder %s130, %s133
      %p142 = scmp.eq.s32.totalorder %s31, 1
      %p143 = por %p141, %p142
      %p144 = scmp.ne.s32.totalorder %s133, %s134
      %p145 = scmp.eq.s32.totalorder %s31, 0
      %p146 = por %p144, %p145
      %p147 = scmp.ne.s32.totalorder %s133, %s134
      %p148 = scmp.eq.s32.totalorder %s32, 1
      %p149 = por %p147, %p148
      %p151 = scmp.ne.s32.totalorder %s134, %s150
      %p152 = scmp.eq.s32.totalorder %s32, 0
      %p153 = por %p151, %p152
      %s154 = ssub.s32 %s34, %s41
      %p155 = scmp.eq.s32.totalorder %s154, 0
      %s157 = sadd.s32 %s156, 1
      %s158 = scalar_select %p155, %s156, %s157
      %p161 = pneg %p155
      %p162 = scmp.eq.s32.totalorder %s26, 1
      %p163 = por %p161, %p162
      %p164 = scmp.ne.s32.totalorder %s156, %s159
      %p165 = scmp.eq.s32.totalorder %s26, 0
      %p166 = por %p164, %p165
      %p167 = scmp.ne.s32.totalorder %s156, %s159
      %p168 = scmp.eq.s32.totalorder %s31, 1
      %p169 = por %p167, %p168
      %p170 = scmp.ne.s32.totalorder %s159, %s160
      %p171 = scmp.eq.s32.totalorder %s31, 0
      %p172 = por %p170, %p171
      %p173 = scmp.ne.s32.totalorder %s159, %s160
      %p174 = scmp.eq.s32.totalorder %s32, 1
      %p175 = por %p173, %p174
      %p177 = scmp.ne.s32.totalorder %s160, %s176
      %p178 = scmp.eq.s32.totalorder %s32, 0
      %p179 = por %p177, %p178
      %s180 = ssub.s32 %s34, %s41
      %p181 = scmp.eq.s32.totalorder %s180, 0
      %s183 = sadd.s32 %s182, 1
      %s184 = scalar_select %p181, %s182, %s183
      %p187 = pneg %p181
      %p188 = scmp.eq.s32.totalorder %s26, 1
      %p189 = por %p187, %p188
      %p190 = scmp.ne.s32.totalorder %s182, %s185
      %p191 = scmp.eq.s32.totalorder %s26, 0
      %p192 = por %p190, %p191
      %p193 = scmp.ne.s32.totalorder %s182, %s185
      %p194 = scmp.eq.s32.totalorder %s31, 1
      %p195 = por %p193, %p194
      %p196 = scmp.ne.s32.totalorder %s185, %s186
      %p197 = scmp.eq.s32.totalorder %s31, 0
      %p198 = por %p196, %p197
      %p199 = scmp.ne.s32.totalorder %s185, %s186
      %p200 = scmp.eq.s32.totalorder %s32, 1
      %p201 = por %p199, %p200
      %p203 = scmp.ne.s32.totalorder %s186, %s202
      %p204 = scmp.eq.s32.totalorder %s32, 0
      %p205 = por %p203, %p204
      %s206 = ssub.s32 %s34, %s41
      %p207 = scmp.eq.s32.totalorder %s206, 0
      %s209 = sadd.s32 %s208, 1
      %s210 = scalar_select %p207, %s208, %s209
      %p213 = pneg %p207
      %p214 = scmp.eq.s32.totalorder %s26, 1
      %p215 = por %p213, %p214
      %p216 = scmp.ne.s32.totalorder %s208, %s211
      %p217 = scmp.eq.s32.totalorder %s26, 0
      %p218 = por %p216, %p217
      %p219 = scmp.ne.s32.totalorder %s208, %s211
      %p220 = scmp.eq.s32.totalorder %s31, 1
      %p221 = por %p219, %p220
      %p222 = scmp.ne.s32.totalorder %s211, %s212
      %p223 = scmp.eq.s32.totalorder %s31, 0
      %p224 = por %p222, %p223
      %p225 = scmp.ne.s32.totalorder %s211, %s212
      %p226 = scmp.eq.s32.totalorder %s32, 1
      %p227 = por %p225, %p226
      %p229 = scmp.ne.s32.totalorder %s212, %s228
      %p230 = scmp.eq.s32.totalorder %s32, 0
      %p231 = por %p229, %p230
      %s232 = ssub.s32 %s34, %s41
      %p233 = scmp.eq.s32.totalorder %s232, 0
      %s235 = sadd.s32 %s234, 1
      %s236 = scalar_select %p233, %s234, %s235
      %p239 = pneg %p233
      %p240 = scmp.eq.s32.totalorder %s26, 1
      %p241 = por %p239, %p240
      %p242 = scmp.ne.s32.totalorder %s234, %s237
      %p243 = scmp.eq.s32.totalorder %s26, 0
      %p244 = por %p242, %p243
      %p245 = scmp.ne.s32.totalorder %s234, %s237
      %p246 = scmp.eq.s32.totalorder %s31, 1
      %p247 = por %p245, %p246
      %p248 = scmp.ne.s32.totalorder %s237, %s238
      %p249 = scmp.eq.s32.totalorder %s31, 0
      %p250 = por %p248, %p249
      %p251 = scmp.ne.s32.totalorder %s237, %s238
      %p252 = scmp.eq.s32.totalorder %s32, 1
      %p253 = por %p251, %p252
      %p255 = scmp.ne.s32.totalorder %s238, %s254
      %p256 = scmp.eq.s32.totalorder %s32, 0
      %p257 = por %p255, %p256
      %s258 = ssub.s32 %s34, %s41
      %p259 = scmp.eq.s32.totalorder %s258, 0
      %s261 = sadd.s32 %s260, 1
      %s262 = scalar_select %p259, %s260, %s261
      %p265 = pneg %p259
      %p266 = scmp.eq.s32.totalorder %s26, 1
      %p267 = por %p265, %p266
      %p268 = scmp.ne.s32.totalorder %s260, %s263
      %p269 = scmp.eq.s32.totalorder %s26, 0
      %p270 = por %p268, %p269
      %p271 = scmp.ne.s32.totalorder %s260, %s263
      %p272 = scmp.eq.s32.totalorder %s31, 1
      %p273 = por %p271, %p272
      %p274 = scmp.ne.s32.totalorder %s263, %s264
      %p275 = scmp.eq.s32.totalorder %s31, 0
      %p276 = por %p274, %p275
      %p277 = scmp.ne.s32.totalorder %s263, %s264
      %p278 = scmp.eq.s32.totalorder %s32, 1
      %p279 = por %p277, %p278
      %p281 = scmp.ne.s32.totalorder %s264, %s280
      %p282 = scmp.eq.s32.totalorder %s32, 0
      %p283 = por %p281, %p282
      %s284 = ssub.s32 %s34, %s41
      %p285 = scmp.eq.s32.totalorder %s284, 0
      %s287 = sadd.s32 %s286, 1
      %s288 = scalar_select %p285, %s286, %s287
      %p291 = pneg %p285
      %p292 = scmp.eq.s32.totalorder %s26, 1
      %p293 = por %p291, %p292
      %p294 = scmp.ne.s32.totalorder %s286, %s289
      %p295 = scmp.eq.s32.totalorder %s26, 0
      %p296 = por %p294, %p295
      %p297 = scmp.ne.s32.totalorder %s286, %s289
      %p298 = scmp.eq.s32.totalorder %s31, 1
      %p299 = por %p297, %p298
      %p300 = scmp.ne.s32.totalorder %s289, %s290
      %p301 = scmp.eq.s32.totalorder %s31, 0
      %p302 = por %p300, %p301
      %p303 = scmp.ne.s32.totalorder %s289, %s290
      %p304 = scmp.eq.s32.totalorder %s32, 1
      %p305 = por %p303, %p304
      %p307 = scmp.ne.s32.totalorder %s290, %s306
      %p308 = scmp.eq.s32.totalorder %s32, 0
      %p309 = por %p307, %p308
      %s310 = ssub.s32 %s34, %s41
      %p311 = scmp.eq.s32.totalorder %s310, 0
      %s313 = sadd.s32 %s312, 1
      %s314 = scalar_select %p311, %s312, %s313
      %p317 = pneg %p311
      %p318 = scmp.eq.s32.totalorder %s26, 1
      %p319 = por %p317, %p318
      %p320 = scmp.ne.s32.totalorder %s312, %s315
      %p321 = scmp.eq.s32.totalorder %s26, 0
      %p322 = por %p320, %p321
      %p323 = scmp.ne.s32.totalorder %s312, %s315
      %p324 = scmp.eq.s32.totalorder %s31, 1
      %p325 = por %p323, %p324
      %p326 = scmp.ne.s32.totalorder %s315, %s316
      %p327 = scmp.eq.s32.totalorder %s31, 0
      %p328 = por %p326, %p327
      %p329 = scmp.ne.s32.totalorder %s315, %s316
      %p330 = scmp.eq.s32.totalorder %s32, 1
      %p331 = por %p329, %p330
      %p333 = scmp.ne.s32.totalorder %s316, %s332
      %p334 = scmp.eq.s32.totalorder %s32, 0
      %p335 = por %p333, %p334
      %s336 = ssub.s32 %s34, %s41
      %p337 = scmp.eq.s32.totalorder %s336, 0
      %s339 = sadd.s32 %s338, 1
      %s340 = scalar_select %p337, %s338, %s339
      %p343 = pneg %p337
      %p344 = scmp.eq.s32.totalorder %s26, 1
      %p345 = por %p343, %p344
      %p346 = scmp.ne.s32.totalorder %s338, %s341
      %p347 = scmp.eq.s32.totalorder %s26, 0
      %p348 = por %p346, %p347
      %p349 = scmp.ne.s32.totalorder %s338, %s341
      %p350 = scmp.eq.s32.totalorder %s31, 1
      %p351 = por %p349, %p350
      %p352 = scmp.ne.s32.totalorder %s341, %s342
      %p353 = scmp.eq.s32.totalorder %s31, 0
      %p354 = por %p352, %p353
      %p355 = scmp.ne.s32.totalorder %s341, %s342
      %p356 = scmp.eq.s32.totalorder %s32, 1
      %p357 = por %p355, %p356
      %p359 = scmp.ne.s32.totalorder %s342, %s358
      %p360 = scmp.eq.s32.totalorder %s32, 0
      %p361 = por %p359, %p360
      %s362 = ssub.s32 %s34, %s41
      %p363 = scmp.eq.s32.totalorder %s362, 0
      %s365 = sadd.s32 %s364, 1
      %s366 = scalar_select %p363, %s364, %s365
      %p369 = pneg %p363
      %p370 = scmp.eq.s32.totalorder %s26, 1
      %p371 = por %p369, %p370
      %p372 = scmp.ne.s32.totalorder %s364, %s367
      %p373 = scmp.eq.s32.totalorder %s26, 0
      %p374 = por %p372, %p373
      %p375 = scmp.ne.s32.totalorder %s364, %s367
      %p376 = scmp.eq.s32.totalorder %s31, 1
      %p377 = por %p375, %p376
      %p378 = scmp.ne.s32.totalorder %s367, %s368
      %p379 = scmp.eq.s32.totalorder %s31, 0
      %p380 = por %p378, %p379
      %p381 = scmp.ne.s32.totalorder %s367, %s368
      %p382 = scmp.eq.s32.totalorder %s32, 1
      %p383 = por %p381, %p382
      %p385 = scmp.ne.s32.totalorder %s368, %s384
      %p386 = scmp.eq.s32.totalorder %s32, 0
      %p387 = por %p385, %p386
      %s388 = ssub.s32 %s34, %s41
      %p389 = scmp.eq.s32.totalorder %s388, 0
      %s391 = sadd.s32 %s390, 1
      %s392 = scalar_select %p389, %s390, %s391
      %p395 = pneg %p389
      %p396 = scmp.eq.s32.totalorder %s26, 1
      %p397 = por %p395, %p396
      %p398 = scmp.ne.s32.totalorder %s390, %s393
      %p399 = scmp.eq.s32.totalorder %s26, 0
      %p400 = por %p398, %p399
      %p401 = scmp.ne.s32.totalorder %s390, %s393
      %p402 = scmp.eq.s32.totalorder %s31, 1
      %p403 = por %p401, %p402
      %p404 = scmp.ne.s32.totalorder %s393, %s394
      %p405 = scmp.eq.s32.totalorder %s31, 0
      %p406 = por %p404, %p405
      %p407 = scmp.ne.s32.totalorder %s393, %s394
      %p408 = scmp.eq.s32.totalorder %s32, 1
      %p409 = por %p407, %p408
      %p411 = scmp.ne.s32.totalorder %s394, %s410
      %p412 = scmp.eq.s32.totalorder %s32, 0
      %p413 = por %p411, %p412
      %s414 = ssub.s32 %s34, %s41
      %p415 = scmp.eq.s32.totalorder %s414, 0
      %s417 = sadd.s32 %s416, 1
      %s418 = scalar_select %p415, %s416, %s417
      %p421 = pneg %p415
      %p422 = scmp.eq.s32.totalorder %s26, 1
      %p423 = por %p421, %p422
      %p424 = scmp.ne.s32.totalorder %s416, %s419
      %p425 = scmp.eq.s32.totalorder %s26, 0
      %p426 = por %p424, %p425
      %p427 = scmp.ne.s32.totalorder %s416, %s419
      %p428 = scmp.eq.s32.totalorder %s31, 1
      %p429 = por %p427, %p428
      %p430 = scmp.ne.s32.totalorder %s419, %s420
      %p431 = scmp.eq.s32.totalorder %s31, 0
      %p432 = por %p430, %p431
      %p433 = scmp.ne.s32.totalorder %s419, %s420
      %p434 = scmp.eq.s32.totalorder %s32, 1
      %p435 = por %p433, %p434
      %p437 = scmp.ne.s32.totalorder %s420, %s436
      %p438 = scmp.eq.s32.totalorder %s32, 0
      %p439 = por %p437, %p438
      %s440 = ssub.s32 %s34, %s41
      %p441 = scmp.eq.s32.totalorder %s440, 0
      %s443 = sadd.s32 %s442, 1
      %s444 = scalar_select %p441, %s442, %s443
      %p447 = pneg %p441
      %p448 = scmp.eq.s32.totalorder %s26, 1
      %p449 = por %p447, %p448
      %p450 = scmp.ne.s32.totalorder %s442, %s445
      %p451 = scmp.eq.s32.totalorder %s26, 0
      %p452 = por %p450, %p451
      %p453 = scmp.ne.s32.totalorder %s442, %s445
      %p454 = scmp.eq.s32.totalorder %s31, 1
      %p455 = por %p453, %p454
      %p456 = scmp.ne.s32.totalorder %s445, %s446
      %p457 = scmp.eq.s32.totalorder %s31, 0
      %p458 = por %p456, %p457
      %p459 = scmp.ne.s32.totalorder %s445, %s446
      %p460 = scmp.eq.s32.totalorder %s32, 1
      %p461 = por %p459, %p460
      %p463 = scmp.ne.s32.totalorder %s446, %s462
      %p464 = scmp.eq.s32.totalorder %s32, 0
      %p465 = por %p463, %p464
      %s466 = ssub.s32 %s34, %s41
      %p467 = scmp.eq.s32.totalorder %s466, 0
      %s469 = sadd.s32 %s468, 1
      %s470 = scalar_select %p467, %s468, %s469
      %p473 = pneg %p467
      %p474 = scmp.eq.s32.totalorder %s26, 1
      %p475 = por %p473, %p474
      %p476 = scmp.ne.s32.totalorder %s468, %s471
      %p477 = scmp.eq.s32.totalorder %s26, 0
      %p478 = por %p476, %p477
      %p479 = scmp.ne.s32.totalorder %s468, %s471
      %p480 = scmp.eq.s32.totalorder %s31, 1
      %p481 = por %p479, %p480
      %p482 = scmp.ne.s32.totalorder %s471, %s472
      %p483 = scmp.eq.s32.totalorder %s31, 0
      %p484 = por %p482, %p483
      %p485 = scmp.ne.s32.totalorder %s471, %s472
      %p486 = scmp.eq.s32.totalorder %s32, 1
      %p487 = por %p485, %p486
      %p489 = scmp.ne.s32.totalorder %s472, %s488
      %p490 = scmp.eq.s32.totalorder %s32, 0
      %p491 = por %p489, %p490
      %s492 = ssub.s32 %s34, %s41
      %p493 = scmp.eq.s32.totalorder %s492, 0
      %s495 = sadd.s32 %s494, 1
      %s496 = scalar_select %p493, %s494, %s495
      %p499 = pneg %p493
      %p500 = scmp.eq.s32.totalorder %s26, 1
      %p501 = por %p499, %p500
      %p502 = scmp.ne.s32.totalorder %s494, %s497
      %p503 = scmp.eq.s32.totalorder %s26, 0
      %p504 = por %p502, %p503
      %p505 = scmp.ne.s32.totalorder %s494, %s497
      %p506 = scmp.eq.s32.totalorder %s31, 1
      %p507 = por %p505, %p506
      %p508 = scmp.ne.s32.totalorder %s497, %s498
      %p509 = scmp.eq.s32.totalorder %s31, 0
      %p510 = por %p508, %p509
      %p511 = scmp.ne.s32.totalorder %s497, %s498
      %p512 = scmp.eq.s32.totalorder %s32, 1
      %p513 = por %p511, %p512
      %p515 = scmp.ne.s32.totalorder %s498, %s514
      %p516 = scmp.eq.s32.totalorder %s32, 0
      %p517 = por %p515, %p516
      %s518 = ssub.s32 %s34, %s41
      %p519 = scmp.eq.s32.totalorder %s518, 0
      %s521 = sadd.s32 %s520, 1
      %s522 = scalar_select %p519, %s520, %s521
      %p525 = pneg %p519
      %p526 = scmp.eq.s32.totalorder %s26, 1
      %p527 = por %p525, %p526
      %p528 = scmp.ne.s32.totalorder %s520, %s523
      %p529 = scmp.eq.s32.totalorder %s26, 0
      %p530 = por %p528, %p529
      %p531 = scmp.ne.s32.totalorder %s520, %s523
      %p532 = scmp.eq.s32.totalorder %s31, 1
      %p533 = por %p531, %p532
      %p534 = scmp.ne.s32.totalorder %s523, %s524
      %p535 = scmp.eq.s32.totalorder %s31, 0
      %p536 = por %p534, %p535
      %p537 = scmp.ne.s32.totalorder %s523, %s524
      %p538 = scmp.eq.s32.totalorder %s32, 1
      %p539 = por %p537, %p538
      %p541 = scmp.ne.s32.totalorder %s524, %s540
      %p542 = scmp.eq.s32.totalorder %s32, 0
      %p543 = por %p541, %p542
      %s544 = ssub.s32 %s33, %s45
      %p545 = scmp.eq.s32.totalorder %s544, 0
      %s547 = sadd.s32 %s546, 1
      %s548 = scalar_select %p545, %s546, %s547
      %p551 = pneg %p545
      %p552 = scmp.eq.s32.totalorder %s26, 1
      %p553 = por %p551, %p552
      %p554 = scmp.ne.s32.totalorder %s546, %s549
      %p555 = scmp.eq.s32.totalorder %s26, 0
      %p556 = por %p554, %p555
      %p557 = scmp.ne.s32.totalorder %s546, %s549
      %p558 = scmp.eq.s32.totalorder %s31, 1
      %p559 = por %p557, %p558
      %p560 = scmp.ne.s32.totalorder %s549, %s550
      %p561 = scmp.eq.s32.totalorder %s31, 0
      %p562 = por %p560, %p561
      %p563 = scmp.ne.s32.totalorder %s549, %s550
      %p564 = scmp.eq.s32.totalorder %s32, 1
      %p565 = por %p563, %p564
      %p567 = scmp.ne.s32.totalorder %s550, %s566
      %p568 = scmp.eq.s32.totalorder %s32, 0
      %p569 = por %p567, %p568
      %p570 = scmp.le.s32.totalorder 1, %s26
      %p571 = scmp.lt.s32.totalorder %s26, 3
      %p572 = pnand %p570, %p571
      %p573 = pneg %p572
      // Predicated region
      $region9: #{decoder_forward_pallas.1} parent=5 // pred_check
        _
      $region10: #{decoder_forward_pallas.1} parent=5 // pred_check_branch
        %575 = sbr.rel (%p572) target = $region12
      $region11: #{decoder_forward_pallas.1} parent=5 // pred_region
        %s576 = ssub.s32 %s26, 1
        // Predicated region
        $region13: #{decoder_forward_pallas.1} parent=11 // pred_check
          %p577 = pneg %p64
        $region14: #{decoder_forward_pallas.1} parent=11 // pred_check_branch
          %579 = sbr.rel (%p577) target = $region16
        $region15: #{decoder_forward_pallas.1} parent=11 // pred_region
          %s580 = smul.u32 2, %s35
          %p581 = scmp.lt.s32.totalorder %s580, 1
          %s582 = scalar_select %p581, %s580, 1
          %s583 = smul.addr %s582, 8
          %s584 = scalar_lea.vmem %s0, %s583
          %s585 = smul.u32 2, %s35
        $region16: #{decoder_forward_pallas.1} parent=11 // pred_fallthru
          _
        // Predicated region
        $region17: #{decoder_forward_pallas.1} parent=11 // pred_check
          %p586 = pneg %p90
        $region18: #{decoder_forward_pallas.1} parent=11 // pred_check_branch
          %588 = sbr.rel (%p586) target = $region20
        $region19: #{decoder_forward_pallas.1} parent=11 // pred_region
          %s589 = smul.u32 4, %s35
          %p590 = scmp.lt.s32.totalorder %s589, 3
          %s591 = scalar_select %p590, %s589, 3
          %s592 = smul.addr %s591, 8
          %s593 = scalar_lea.vmem %s1, %s592
          %s594 = smul.u32 4, %s35
        $region20: #{decoder_forward_pallas.1} parent=11 // pred_fallthru
          _
        // Predicated region
        $region21: #{decoder_forward_pallas.1} parent=11 // pred_check
          %p595 = pneg %p118
        $region22: #{decoder_forward_pallas.1} parent=11 // pred_check_branch
          %597 = sbr.rel (%p595) target = $region24
        $region23: #{decoder_forward_pallas.1} parent=11 // pred_region
          %s598 = smul.u32 2, %s35
          %p599 = scmp.lt.s32.totalorder %s598, 1
          %s600 = scalar_select %p599, %s598, 1
          %p601 = scmp.lt.s32.totalorder %s35, 0
          %s602 = scalar_select %p601, %s35, 0
          %s603 = sadd.s32 %s602, %s600
          %s604 = smul.addr %s603, 8
          %s605 = scalar_lea.vmem %s2, %s604
          %s606 = smul.u32 2, %s35
        $region24: #{decoder_forward_pallas.1} parent=11 // pred_fallthru
          _
        // Predicated region
        $region25: #{decoder_forward_pallas.1} parent=11 // pred_check
          %p607 = pneg %p146
        $region26: #{decoder_forward_pallas.1} parent=11 // pred_check_branch
          %609 = sbr.rel (%p607) target = $region28
        $region27: #{decoder_forward_pallas.1} parent=11 // pred_region
          %s610 = smul.u32 2, %s35
          %p611 = scmp.lt.s32.totalorder %s610, 1
          %s612 = scalar_select %p611, %s610, 1
          %p613 = scmp.lt.s32.totalorder %s35, 0
          %s614 = scalar_select %p613, %s35, 0
          %s615 = sadd.s32 %s614, %s612
          %s616 = smul.addr %s615, 8
          %s617 = scalar_lea.vmem %s3, %s616
          %s618 = smul.u32 2, %s35
        $region28: #{decoder_forward_pallas.1} parent=11 // pred_fallthru
          _
      $region12: #{decoder_forward_pallas.1} parent=5 // pred_fallthru
        _
      %p619 = scmp.lt.s32.totalorder %s26, 2
      // Predicated region
      $region29: #{decoder_forward_pallas.1} parent=5 // pred_check
        %p620 = pneg %p619
      $region30: #{decoder_forward_pallas.1} parent=5 // pred_check_branch
        %622 = sbr.rel (%p620) target = $region32
      $region31: #{decoder_forward_pallas.1} parent=5 // pred_region
        // Predicated region
        $region33: #{decoder_forward_pallas.1} parent=31 // pred_check
          %p623 = pneg %p166
        $region34: #{decoder_forward_pallas.1} parent=31 // pred_check_branch
          %625 = sbr.rel (%p623) target = $region36
        $region35: #{decoder_forward_pallas.1} parent=31 // pred_region
          %p626 = scmp.lt.s32.totalorder %s34, 1
          %s627 = scalar_select %p626, %s34, 1
          %s628 = smul.addr %s627, 4
          %s629 = smul.addr %s628, 4
          %s630 = scalar_lea.vmem %s4, %s629
        $region36: #{decoder_forward_pallas.1} parent=31 // pred_fallthru
          _
        // Predicated region
        $region37: #{decoder_forward_pallas.1} parent=31 // pred_check
          %p631 = pneg %p192
        $region38: #{decoder_forward_pallas.1} parent=31 // pred_check_branch
          %633 = sbr.rel (%p631) target = $region40
        $region39: #{decoder_forward_pallas.1} parent=31 // pred_region
          %p634 = scmp.lt.s32.totalorder %s34, 1
          %s635 = scalar_select %p634, %s34, 1
          %s636 = scalar_lea.vmem %s5, %s635
        $region40: #{decoder_forward_pallas.1} parent=31 // pred_fallthru
          _
        // Predicated region
        $region41: #{decoder_forward_pallas.1} parent=31 // pred_check
          %p637 = pneg %p218
        $region42: #{decoder_forward_pallas.1} parent=31 // pred_check_branch
          %639 = sbr.rel (%p637) target = $region44
        $region43: #{decoder_forward_pallas.1} parent=31 // pred_region
          %p640 = scmp.lt.s32.totalorder %s34, 1
          %s641 = scalar_select %p640, %s34, 1
          %s642 = smul.addr %s641, 4
          %s643 = smul.addr %s642, 4
          %s644 = scalar_lea.vmem %s6, %s643
        $region44: #{decoder_forward_pallas.1} parent=31 // pred_fallthru
          _
        // Predicated region
        $region45: #{decoder_forward_pallas.1} parent=31 // pred_check
          %p645 = pneg %p244
        $region46: #{decoder_forward_pallas.1} parent=31 // pred_check_branch
          %647 = sbr.rel (%p645) target = $region48
        $region47: #{decoder_forward_pallas.1} parent=31 // pred_region
          %p648 = scmp.lt.s32.totalorder %s34, 1
          %s649 = scalar_select %p648, %s34, 1
          %s650 = scalar_lea.vmem %s7, %s649
        $region48: #{decoder_forward_pallas.1} parent=31 // pred_fallthru
          _
        // Predicated region
        $region49: #{decoder_forward_pallas.1} parent=31 // pred_check
          %p651 = pneg %p270
        $region50: #{decoder_forward_pallas.1} parent=31 // pred_check_branch
          %653 = sbr.rel (%p651) target = $region52
        $region51: #{decoder_forward_pallas.1} parent=31 // pred_region
          %p654 = scmp.lt.s32.totalorder %s34, 1
          %s655 = scalar_select %p654, %s34, 1
          %s656 = smul.addr %s655, 4
          %s657 = smul.addr %s656, 4
          %s658 = scalar_lea.vmem %s8, %s657
        $region52: #{decoder_forward_pallas.1} parent=31 // pred_fallthru
          _
        // Predicated region
        $region53: #{decoder_forward_pallas.1} parent=31 // pred_check
          %p659 = pneg %p296
        $region54: #{decoder_forward_pallas.1} parent=31 // pred_check_branch
          %661 = sbr.rel (%p659) target = $region56
        $region55: #{decoder_forward_pallas.1} parent=31 // pred_region
          %p662 = scmp.lt.s32.totalorder %s34, 1
          %s663 = scalar_select %p662, %s34, 1
          %s664 = scalar_lea.vmem %s9, %s663
        $region56: #{decoder_forward_pallas.1} parent=31 // pred_fallthru
          _
        // Predicated region
        $region57: #{decoder_forward_pallas.1} parent=31 // pred_check
          %p665 = pneg %p322
        $region58: #{decoder_forward_pallas.1} parent=31 // pred_check_branch
          %667 = sbr.rel (%p665) target = $region60
        $region59: #{decoder_forward_pallas.1} parent=31 // pred_region
          %p668 = scmp.lt.s32.totalorder %s34, 1
          %s669 = scalar_select %p668, %s34, 1
          %s670 = smul.addr %s669, 4
          %s671 = smul.addr %s670, 4
          %s672 = scalar_lea.vmem %s10, %s671
        $region60: #{decoder_forward_pallas.1} parent=31 // pred_fallthru
          _
        // Predicated region
        $region61: #{decoder_forward_pallas.1} parent=31 // pred_check
          %p673 = pneg %p348
        $region62: #{decoder_forward_pallas.1} parent=31 // pred_check_branch
          %675 = sbr.rel (%p673) target = $region64
        $region63: #{decoder_forward_pallas.1} parent=31 // pred_region
          %p676 = scmp.lt.s32.totalorder %s34, 1
          %s677 = scalar_select %p676, %s34, 1
          %s678 = scalar_lea.vmem %s11, %s677
        $region64: #{decoder_forward_pallas.1} parent=31 // pred_fallthru
          _
        // Predicated region
        $region65: #{decoder_forward_pallas.1} parent=31 // pred_check
          %p679 = pneg %p374
        $region66: #{decoder_forward_pallas.1} parent=31 // pred_check_branch
          %681 = sbr.rel (%p679) target = $region68
        $region67: #{decoder_forward_pallas.1} parent=31 // pred_region
          %p682 = scmp.lt.s32.totalorder %s34, 1
          %s683 = scalar_select %p682, %s34, 1
          %s684 = smul.addr %s683, 4
          %s685 = smul.addr %s684, 4
          %s686 = scalar_lea.vmem %s12, %s685
        $region68: #{decoder_forward_pallas.1} parent=31 // pred_fallthru
          _
        // Predicated region
        $region69: #{decoder_forward_pallas.1} parent=31 // pred_check
          %p687 = pneg %p400
        $region70: #{decoder_forward_pallas.1} parent=31 // pred_check_branch
          %689 = sbr.rel (%p687) target = $region72
        $region71: #{decoder_forward_pallas.1} parent=31 // pred_region
          %p690 = scmp.lt.s32.totalorder %s34, 1
          %s691 = scalar_select %p690, %s34, 1
          %s692 = scalar_lea.vmem %s13, %s691
        $region72: #{decoder_forward_pallas.1} parent=31 // pred_fallthru
          _
        // Predicated region
        $region73: #{decoder_forward_pallas.1} parent=31 // pred_check
          %p693 = pneg %p426
        $region74: #{decoder_forward_pallas.1} parent=31 // pred_check_branch
          %695 = sbr.rel (%p693) target = $region76
        $region75: #{decoder_forward_pallas.1} parent=31 // pred_region
          %p696 = scmp.lt.s32.totalorder %s34, 1
          %s697 = scalar_select %p696, %s34, 1
          %s698 = smul.addr %s697, 4
          %s699 = smul.addr %s698, 4
          %s700 = scalar_lea.vmem %s14, %s699
        $region76: #{decoder_forward_pallas.1} parent=31 // pred_fallthru
          _
        // Predicated region
        $region77: #{decoder_forward_pallas.1} parent=31 // pred_check
          %p701 = pneg %p452
        $region78: #{decoder_forward_pallas.1} parent=31 // pred_check_branch
          %703 = sbr.rel (%p701) target = $region80
        $region79: #{decoder_forward_pallas.1} parent=31 // pred_region
          %p704 = scmp.lt.s32.totalorder %s34, 1
          %s705 = scalar_select %p704, %s34, 1
          %s706 = scalar_lea.vmem %s15, %s705
        $region80: #{decoder_forward_pallas.1} parent=31 // pred_fallthru
          _
        // Predicated region
        $region81: #{decoder_forward_pallas.1} parent=31 // pred_check
          %p707 = pneg %p478
        $region82: #{decoder_forward_pallas.1} parent=31 // pred_check_branch
          %709 = sbr.rel (%p707) target = $region84
        $region83: #{decoder_forward_pallas.1} parent=31 // pred_region
          %p710 = scmp.lt.s32.totalorder %s34, 1
          %s711 = scalar_select %p710, %s34, 1
          %s712 = smul.addr %s711, 8
          %s713 = smul.addr %s712, 4
          %s714 = scalar_lea.vmem %s16, %s713
        $region84: #{decoder_forward_pallas.1} parent=31 // pred_fallthru
          _
        // Predicated region
        $region85: #{decoder_forward_pallas.1} parent=31 // pred_check
          %p715 = pneg %p504
        $region86: #{decoder_forward_pallas.1} parent=31 // pred_check_branch
          %717 = sbr.rel (%p715) target = $region88
        $region87: #{decoder_forward_pallas.1} parent=31 // pred_region
          %p718 = scmp.lt.s32.totalorder %s34, 1
          %s719 = scalar_select %p718, %s34, 1
          %s720 = scalar_lea.vmem %s17, %s719
        $region88: #{decoder_forward_pallas.1} parent=31 // pred_fallthru
          _
        // Predicated region
        $region89: #{decoder_forward_pallas.1} parent=31 // pred_check
          %p721 = pneg %p530
        $region90: #{decoder_forward_pallas.1} parent=31 // pred_check_branch
          %723 = sbr.rel (%p721) target = $region92
        $region91: #{decoder_forward_pallas.1} parent=31 // pred_region
          %p724 = scmp.lt.s32.totalorder %s34, 1
          %s725 = scalar_select %p724, %s34, 1
          %s726 = smul.addr %s725, 8
          %s727 = scalar_lea.vmem %s18, %s726
        $region92: #{decoder_forward_pallas.1} parent=31 // pred_fallthru
          _
      $region32: #{decoder_forward_pallas.1} parent=5 // pred_fallthru
        _
      %p728 = scmp.le.s32.totalorder 1, %s26
      %p729 = scmp.lt.s32.totalorder %s26, 3
      %p730 = pnand %p728, %p729
      %p731 = pneg %p730
      // Predicated region
      $region93: #{decoder_forward_pallas.1} parent=5 // pred_check
        _
      $region94: #{decoder_forward_pallas.1} parent=5 // pred_check_branch
        %733 = sbr.rel (%p730) target = $region96
      $region95: #{decoder_forward_pallas.1} parent=5 // pred_region
        %s734 = ssub.s32 %s26, 1
        %s735 = smul.u32 2, %s35
        %p736 = scmp.lt.s32.totalorder %s735, 1
        %s737 = scalar_select %p736, %s735, 1
        %s738 = smul.addr %s737, 8
        %s739 = scalar_lea.vmem %s0, %s738
        %p740 = pneg %p64
        %p741 = pneg %p61
        %s742 = smul.u32 4, %s35
        %p743 = scmp.lt.s32.totalorder %s742, 3
        %s744 = scalar_select %p743, %s742, 3
        %s745 = smul.addr %s744, 8
        %s746 = scalar_lea.vmem %s1, %s745
        %p747 = pneg %p90
        %p748 = pneg %p87
        %s749 = smul.u32 2, %s35
        %p750 = scmp.lt.s32.totalorder %s749, 1
        %s751 = scalar_select %p750, %s749, 1
        %p752 = scmp.lt.s32.totalorder %s35, 0
        %s753 = scalar_select %p752, %s35, 0
        %s754 = sadd.s32 %s753, %s751
        %s755 = smul.addr %s754, 8
        %s756 = scalar_lea.vmem %s2, %s755
        %p757 = pneg %p118
        %p758 = pneg %p115
        %s759 = smul.u32 2, %s35
        %p760 = scmp.lt.s32.totalorder %s759, 1
        %s761 = scalar_select %p760, %s759, 1
        %p762 = scmp.lt.s32.totalorder %s35, 0
        %s763 = scalar_select %p762, %s35, 0
        %s764 = sadd.s32 %s763, %s761
        %s765 = smul.addr %s764, 8
        %s766 = scalar_lea.vmem %s3, %s765
        %p767 = pneg %p146
        %p768 = pneg %p143
        %p769 = scmp.lt.s32.totalorder %s36, 1
        %s770 = scalar_select %p769, %s36, 1
        %s771 = smul.addr %s770, 4
        %s772 = smul.addr %s771, 4
        %s773 = scalar_lea.vmem %s4, %s772
        %p774 = pneg %p172
        %p775 = pneg %p169
        %p776 = scmp.lt.s32.totalorder %s36, 1
        %s777 = scalar_select %p776, %s36, 1
        %s778 = scalar_lea.vmem %s5, %s777
        %p779 = pneg %p198
        %p780 = pneg %p195
        %p781 = scmp.lt.s32.totalorder %s36, 1
        %s782 = scalar_select %p781, %s36, 1
        %s783 = smul.addr %s782, 4
        %s784 = smul.addr %s783, 4
        %s785 = scalar_lea.vmem %s6, %s784
        %p786 = pneg %p224
        %p787 = pneg %p221
        %p788 = scmp.lt.s32.totalorder %s36, 1
        %s789 = scalar_select %p788, %s36, 1
        %s790 = scalar_lea.vmem %s7, %s789
        %p791 = pneg %p250
        %p792 = pneg %p247
        %p793 = scmp.lt.s32.totalorder %s36, 1
        %s794 = scalar_select %p793, %s36, 1
        %s795 = smul.addr %s794, 4
        %s796 = smul.addr %s795, 4
        %s797 = scalar_lea.vmem %s8, %s796
        %p798 = pneg %p276
        %p799 = pneg %p273
        %p800 = scmp.lt.s32.totalorder %s36, 1
        %s801 = scalar_select %p800, %s36, 1
        %s802 = scalar_lea.vmem %s9, %s801
        %p803 = pneg %p302
        %p804 = pneg %p299
        %p805 = scmp.lt.s32.totalorder %s36, 1
        %s806 = scalar_select %p805, %s36, 1
        %s807 = smul.addr %s806, 4
        %s808 = smul.addr %s807, 4
        %s809 = scalar_lea.vmem %s10, %s808
        %p810 = pneg %p328
        %p811 = pneg %p325
        %p812 = scmp.lt.s32.totalorder %s36, 1
        %s813 = scalar_select %p812, %s36, 1
        %s814 = scalar_lea.vmem %s11, %s813
        %p815 = pneg %p354
        %p816 = pneg %p351
        %p817 = scmp.lt.s32.totalorder %s36, 1
        %s818 = scalar_select %p817, %s36, 1
        %s819 = smul.addr %s818, 4
        %s820 = smul.addr %s819, 4
        %s821 = scalar_lea.vmem %s12, %s820
        %p822 = pneg %p380
        %p823 = pneg %p377
        %p824 = scmp.lt.s32.totalorder %s36, 1
        %s825 = scalar_select %p824, %s36, 1
        %s826 = scalar_lea.vmem %s13, %s825
        %p827 = pneg %p406
        %p828 = pneg %p403
        %p829 = scmp.lt.s32.totalorder %s36, 1
        %s830 = scalar_select %p829, %s36, 1
        %s831 = smul.addr %s830, 4
        %s832 = smul.addr %s831, 4
        %s833 = scalar_lea.vmem %s14, %s832
        %p834 = pneg %p432
        %p835 = pneg %p429
        %p836 = scmp.lt.s32.totalorder %s36, 1
        %s837 = scalar_select %p836, %s36, 1
        %s838 = scalar_lea.vmem %s15, %s837
        %p839 = pneg %p458
        %p840 = pneg %p455
        %p841 = scmp.lt.s32.totalorder %s36, 1
        %s842 = scalar_select %p841, %s36, 1
        %s843 = smul.addr %s842, 8
        %s844 = smul.addr %s843, 4
        %s845 = scalar_lea.vmem %s16, %s844
        %p846 = pneg %p484
        %p847 = pneg %p481
        %p848 = scmp.lt.s32.totalorder %s36, 1
        %s849 = scalar_select %p848, %s36, 1
        %s850 = scalar_lea.vmem %s17, %s849
        %p851 = pneg %p510
        %p852 = pneg %p507
        %p853 = scmp.lt.s32.totalorder %s36, 1
        %s854 = scalar_select %p853, %s36, 1
        %s855 = smul.addr %s854, 8
        %s856 = scalar_lea.vmem %s18, %s855
        %p857 = pneg %p536
        %p858 = pneg %p533
        %p859 = pneg %p562
        %p860 = pneg %p559
        %s861 = smul.u32 2, %s35
        %p862 = scmp.lt.s32.totalorder %s861, 1
        %s863 = scalar_select %p862, %s861, 1
        %s864 = smul.addr %s863, 8
        %s865 = scalar_lea.vmem %s0, %s864
        %s866 = smul.u32 2, %s35
        %s867 = smul.u32 4, %s35
        %p868 = scmp.lt.s32.totalorder %s867, 3
        %s869 = scalar_select %p868, %s867, 3
        %s870 = smul.addr %s869, 8
        %s871 = scalar_lea.vmem %s1, %s870
        %s872 = smul.u32 4, %s35
        %s873 = smul.u32 2, %s35
        %p874 = scmp.lt.s32.totalorder %s873, 1
        %s875 = scalar_select %p874, %s873, 1
        %p876 = scmp.lt.s32.totalorder %s35, 0
        %s877 = scalar_select %p876, %s35, 0
        %s878 = sadd.s32 %s877, %s875
        %s879 = smul.addr %s878, 8
        %s880 = scalar_lea.vmem %s2, %s879
        %s881 = smul.u32 2, %s35
        %s882 = smul.u32 2, %s35
        %p883 = scmp.lt.s32.totalorder %s882, 1
        %s884 = scalar_select %p883, %s882, 1
        %p885 = scmp.lt.s32.totalorder %s35, 0
        %s886 = scalar_select %p885, %s35, 0
        %s887 = sadd.s32 %s886, %s884
        %s888 = smul.addr %s887, 8
        %s889 = scalar_lea.vmem %s3, %s888
        %s890 = smul.u32 2, %s35
        %p891 = scmp.lt.s32.totalorder %s36, 1
        %s892 = scalar_select %p891, %s36, 1
        %s893 = smul.addr %s892, 4
        %s894 = smul.addr %s893, 4
        %s895 = scalar_lea.vmem %s4, %s894
        %p896 = scmp.lt.s32.totalorder %s36, 1
        %s897 = scalar_select %p896, %s36, 1
        %s898 = scalar_lea.vmem %s5, %s897
        %p899 = scmp.lt.s32.totalorder %s36, 1
        %s900 = scalar_select %p899, %s36, 1
        %s901 = smul.addr %s900, 4
        %s902 = smul.addr %s901, 4
        %s903 = scalar_lea.vmem %s6, %s902
        %p904 = scmp.lt.s32.totalorder %s36, 1
        %s905 = scalar_select %p904, %s36, 1
        %s906 = scalar_lea.vmem %s7, %s905
        %p907 = scmp.lt.s32.totalorder %s36, 1
        %s908 = scalar_select %p907, %s36, 1
        %s909 = smul.addr %s908, 4
        %s910 = smul.addr %s909, 4
        %s911 = scalar_lea.vmem %s8, %s910
        %p912 = scmp.lt.s32.totalorder %s36, 1
        %s913 = scalar_select %p912, %s36, 1
        %s914 = scalar_lea.vmem %s9, %s913
        %p915 = scmp.lt.s32.totalorder %s36, 1
        %s916 = scalar_select %p915, %s36, 1
        %s917 = smul.addr %s916, 4
        %s918 = smul.addr %s917, 4
        %s919 = scalar_lea.vmem %s10, %s918
        %p920 = scmp.lt.s32.totalorder %s36, 1
        %s921 = scalar_select %p920, %s36, 1
        %s922 = scalar_lea.vmem %s11, %s921
        %p923 = scmp.lt.s32.totalorder %s36, 1
        %s924 = scalar_select %p923, %s36, 1
        %s925 = smul.addr %s924, 4
        %s926 = smul.addr %s925, 4
        %s927 = scalar_lea.vmem %s12, %s926
        %p928 = scmp.lt.s32.totalorder %s36, 1
        %s929 = scalar_select %p928, %s36, 1
        %s930 = scalar_lea.vmem %s13, %s929
        %p931 = scmp.lt.s32.totalorder %s36, 1
        %s932 = scalar_select %p931, %s36, 1
        %s933 = smul.addr %s932, 4
        %s934 = smul.addr %s933, 4
        %s935 = scalar_lea.vmem %s14, %s934
        %p936 = scmp.lt.s32.totalorder %s36, 1
        %s937 = scalar_select %p936, %s36, 1
        %s938 = scalar_lea.vmem %s15, %s937
        %p939 = scmp.lt.s32.totalorder %s36, 1
        %s940 = scalar_select %p939, %s36, 1
        %s941 = smul.addr %s940, 8
        %s942 = smul.addr %s941, 4
        %s943 = scalar_lea.vmem %s16, %s942
        %p944 = scmp.lt.s32.totalorder %s36, 1
        %s945 = scalar_select %p944, %s36, 1
        %s946 = scalar_lea.vmem %s17, %s945
        %p947 = scmp.lt.s32.totalorder %s36, 1
        %s948 = scalar_select %p947, %s36, 1
        %s949 = smul.addr %s948, 8
        %s950 = scalar_lea.vmem %s18, %s949
        %s951 = smul.u32 2, %s35
        %p953 = scmp.eq.s32.totalorder %s36, 0
        // Predicated region
        $region97: #{decoder_forward_pallas.1} parent=95 // pred_check
          %p954 = pneg %p953
        $region98: #{decoder_forward_pallas.1} parent=95 // pred_check_branch
          %956 = sbr.rel (%p954) target = $region100
        $region99: #{decoder_forward_pallas.1} parent=95 // pred_region
          %v957 = vld [vmem:[%s865] sm:$0xff]
          %v958 = vld [vmem:[%s865 + $0x8] sm:$0xff]
          %vm959 = vcmask 261120
          %960 = vst.msk [vmem:[#allocation2] sm:$0xff] %vm959, %v957
          %961 = vst.msk [vmem:[#allocation2 + $0x8] sm:$0xff] %vm959, %v958
        $region100: #{decoder_forward_pallas.1} parent=95 // pred_fallthru
          _
        %v962 = vld [vmem:[#allocation2] sm:$0xff]
        %v963 = vld [vmem:[#allocation2 + $0x8] sm:$0xff]
        %v964 = vld [vmem:[%s871] sm:$0xff]
        %v965 = vld [vmem:[%s871 + $0x8] sm:$0xff]
        %v966 = vld [vmem:[%s871 + $0x10] sm:$0xff]
        %v967 = vld [vmem:[%s871 + $0x18] sm:$0xff]
        %v968 = vld [vmem:[%s950] sm:$0x3f]
        %v969 = vld [vmem:[%s895] sm:$0xf]
        %v970 = vld [vmem:[%s895 + $0x4] sm:$0xf]
        %v971 = vld [vmem:[%s895 + $0x8] sm:$0xf]
        %v972 = vld [vmem:[%s895 + $0xc] sm:$0xf]
        %v973 = vpack.c.bf16 %v963, %v962
        %v974 = vld [vmem:[%s898] sm:$0x1]
        %v976 = vlaneseq
        %v977 = vshrl.u32 %v976, 7
        %v978 = vsub.s32 0, %v977
        %v979 = vrot.slane %v974, %v978
        %v985 = vunpack.c.l.b16 %v969
        %v986 = vunpack.c.l.b16 %v970
        %v987 = vunpack.c.l.b16 %v971
        %v988 = vunpack.c.l.b16 %v972
        %v989 = vpack.c.b16 %v986, %v985
        %v990 = vpack.c.b16 %v988, %v987
        %vm993 = vcmask 261120
        %v995 = vsel %vm993, %v973, 0
        %997 = vmatprep.subr.bf16.mxu0 0
        %998 = vmatpush1.bf16.msra.mxu0 0
        %999 = vmatprep.subr.bf16.mxu0 0
        %1000 = vmatpush1.bf16.msra.mxu0 0
        %1001 = vmatprep.subr.bf16.mxu0 0
        %1002 = vmatpush1.bf16.msra.mxu0 0
        %1003 = vmatprep.subr.bf16.mxu0 0
        %1004 = vmatpush1.bf16.msra.mxu0 0
        %1005 = vmatprep.subr.bf16.mxu0 0
        %1006 = vmatpush1.bf16.msra.mxu0 0
        %1007 = vmatprep.subr.bf16.mxu0 0
        %1008 = vmatpush1.bf16.msra.mxu0 0
        %1009 = vmatprep.subr.bf16.mxu0 0
        %1010 = vmatpush1.bf16.msra.mxu0 %v990
        %1011 = vmatprep.subr.bf16.mxu0 0
        %1012 = vmatpush1.bf16.msra.mxu0 %v989
        %1013 = vmatprep.subr.bf16.mxu0 0
        %1014 = vmatpush2.bf16.msra.mxu0 0
        %1015 = vmatprep.subr.bf16.mxu0 0
        %1016 = vmatpush2.bf16.msra.mxu0 0
        %1017 = vmatprep.subr.bf16.mxu0 0
        %1018 = vmatpush2.bf16.msra.mxu0 0
        %1019 = vmatprep.subr.bf16.mxu0 0
        %1020 = vmatpush2.bf16.msra.mxu0 0
        %1021 = vmatprep.subr.bf16.mxu0 0
        %1022 = vmatpush2.bf16.msra.mxu0 0
        %1023 = vmatprep.subr.bf16.mxu0 0
        %1024 = vmatpush2.bf16.msra.mxu0 0
        %1025 = vmatprep.subr.bf16.mxu0 0
        %1026 = vmatpush2.bf16.msra.mxu0 0
        %1027 = vmatprep.subr.bf16.mxu0 0
        %1028 = vmatpush2.bf16.msra.mxu0 0
        %1029 = vmatprep.mubr.bf16.mxu0 0
        %1030 = vmatmul.mubr.bf16.gmra.mxu0 %v995
        %v1031 = vpop.f32.mrf.mxu0
        %v1032 = vadd.f32 %v979, %v1031
        %v1033 = vpop.f32.mrf.mxu0
        %v1034 = vpop.f32.mrf.mxu0
        %v1035 = vadd.f32 %v979, %v1034
        %v1036 = vpop.f32.mrf.mxu0
        %1037 = vdwg.mxu0
        %v1038 = vpack.c.bf16 %v1035, %v1032
        %v1039 = vld [vmem:[%s880] sm:$0xff]
        %v1040 = vld [vmem:[%s880 + $0x8] sm:$0xff]
        %v1041 = vld [vmem:[%s903] sm:$0xf]
        %v1042 = vld [vmem:[%s903 + $0x4] sm:$0xf]
        %v1043 = vld [vmem:[%s903 + $0x8] sm:$0xf]
        %v1044 = vld [vmem:[%s903 + $0xc] sm:$0xf]
        %1046 = vrot.lane.b32.xlu0 %v1038, 96
        %v1047 = vpop.permute.xlu0 %1046
        %vm1048 = vcmask 64512
        %v1050 = vsel %vm1048, %v1038, 0
        %v1053 = vsel %vm1048, %v1047, 0
        %1055 = vmatprep.subr.bf16.mxu0 0
        %1056 = vmatpush1.bf16.xpose.msra.mxu0 0
        %1057 = vmatprep.subr.bf16.mxu0 0
        %1058 = vmatpush1.bf16.xpose.msra.mxu0 0
        %1059 = vmatprep.subr.bf16.mxu0 0
        %1060 = vmatpush1.bf16.xpose.msra.mxu0 0
        %1061 = vmatprep.subr.bf16.mxu0 0
        %1062 = vmatpush1.bf16.xpose.msra.mxu0 0
        %1063 = vmatprep.subr.bf16.mxu0 0
        %1064 = vmatpush1.bf16.xpose.msra.mxu0 0
        %1065 = vmatprep.subr.bf16.mxu0 0
        %1066 = vmatpush1.bf16.xpose.msra.mxu0 0
        %1067 = vmatprep.subr.bf16.mxu0 0
        %1068 = vmatpush1.bf16.xpose.msra.mxu0 0
        %1069 = vmatprep.subr.bf16.mxu0 0
        %1070 = vmatpush1.bf16.xpose.msra.mxu0 %v1053
        %1071 = vmatprep.subr.bf16.mxu0 0
        %1072 = vmatpush2.bf16.xpose.msra.mxu0 0
        %1073 = vmatprep.subr.bf16.mxu0 0
        %1074 = vmatpush2.bf16.xpose.msra.mxu0 0
        %1075 = vmatprep.subr.bf16.mxu0 0
        %1076 = vmatpush2.bf16.xpose.msra.mxu0 0
        %1077 = vmatprep.subr.bf16.mxu0 0
        %1078 = vmatpush2.bf16.xpose.msra.mxu0 0
        %1079 = vmatprep.subr.bf16.mxu0 0
        %1080 = vmatpush2.bf16.xpose.msra.mxu0 0
        %1081 = vmatprep.subr.bf16.mxu0 0
        %1082 = vmatpush2.bf16.xpose.msra.mxu0 0
        %1083 = vmatprep.subr.bf16.mxu0 0
        %1084 = vmatpush2.bf16.xpose.msra.mxu0 0
        %1085 = vmatprep.subr.bf16.mxu0 0
        %1086 = vmatpush2.bf16.xpose.msra.mxu0 0
        %1087 = vmatprep.mubr.bf16.mxu0 0
        %1088 = vmatmul.mubr.bf16.gmra.mxu0 %v1050
        %v1089 = vpop.f32.mrf.mxu0
        %v1090 = vadd.f32 0.0, %v1089
        %v1091 = vpop.f32.mrf.mxu0
        %v1092 = vpop.f32.mrf.mxu0
        %v1093 = vadd.f32 0.0, %v1092
        %v1094 = vpop.f32.mrf.mxu0
        %1095 = vdwg.mxu0
        %v1096 = vmul.f32 %v1090, 0.35355338
        %v1097 = vmul.f32 %v1093, 0.35355338
        %v1098 = vadd.f32 %v1096, %v1039
        %v1099 = vadd.f32 %v1097, %v1040
        %vm1100 = vcmask 130048
        %v1101 = vsel %vm1100, %v1098, -inf
        %1102 = vmax.xlane.f32.xlu0 %v1101
        %v1103 = vpop.xlane.xlu0 %1102
        %v1104 = vsel %vm1100, %v1099, -inf
        %1105 = vmax.xlane.f32.xlu0 %v1104
        %v1106 = vpop.xlane.xlu0 %1105
        %v1107 = vsub.f32 %v1098, %v1103
        %v1108 = vsub.f32 %v1099, %v1106
        %v1109 = vmul.f32 %v1107, 1.442695
        %v1110 = vpow.pop %v1109
        %v1111 = vmul.f32 %v1108, 1.442695
        %v1112 = vpow.pop %v1111
        %v1113 = vsel %vm1100, %v1110, 0.0
        %1114 = vadd.xlane.f32.xlu0 %v1113
        %v1115 = vpop.xlane.xlu0 %1114
        %v1116 = vsel %vm1100, %v1112, 0.0
        %1117 = vadd.xlane.f32.xlu0 %v1116
        %v1118 = vpop.xlane.xlu0 %1117
        %v1119 = vrcp.pop %v1115
        %v1120 = vrcp.pop %v1118
        %v1121 = vmul.f32 %v1110, %v1119
        %v1122 = vmul.f32 %v1112, %v1120
        %v1123 = vpack.c.bf16 %v1122, %v1121
        %1124 = vrot.lane.b32.xlu0 %v1038, 64
        %v1125 = vpop.permute.xlu0 %1124
        %v1128 = vsel %vm1100, %v1123, 0
        %1130 = vmatprep.subr.bf16.mxu0 0
        %1131 = vmatpush1.bf16.msra.mxu0 0
        %1132 = vmatprep.subr.bf16.mxu0 0
        %1133 = vmatpush1.bf16.msra.mxu0 0
        %1134 = vmatprep.subr.bf16.mxu0 0
        %1135 = vmatpush1.bf16.msra.mxu0 0
        %1136 = vmatprep.subr.bf16.mxu0 0
        %1137 = vmatpush1.bf16.msra.mxu0 0
        %1138 = vmatprep.subr.bf16.mxu0 0
        %1139 = vmatpush1.bf16.msra.mxu0 0
        %1140 = vmatprep.subr.bf16.mxu0 0
        %1141 = vmatpush1.bf16.msra.mxu0 0
        %1142 = vmatprep.subr.bf16.mxu0 0
        %1143 = vmatpush1.bf16.msra.mxu0 0
        %1144 = vmatprep.subr.bf16.mxu0 0
        %1145 = vmatpush1.bf16.msra.mxu0 %v1125
        %1146 = vmatprep.subr.bf16.mxu0 0
        %1147 = vmatpush2.bf16.msra.mxu0 0
        %1148 = vmatprep.subr.bf16.mxu0 0
        %1149 = vmatpush2.bf16.msra.mxu0 0
        %1150 = vmatprep.subr.bf16.mxu0 0
        %1151 = vmatpush2.bf16.msra.mxu0 0
        %1152 = vmatprep.subr.bf16.mxu0 0
        %1153 = vmatpush2.bf16.msra.mxu0 0
        %1154 = vmatprep.subr.bf16.mxu0 0
        %1155 = vmatpush2.bf16.msra.mxu0 0
        %1156 = vmatprep.subr.bf16.mxu0 0
        %1157 = vmatpush2.bf16.msra.mxu0 0
        %1158 = vmatprep.subr.bf16.mxu0 0
        %1159 = vmatpush2.bf16.msra.mxu0 0
        %1160 = vmatprep.subr.bf16.mxu0 0
        %1161 = vmatpush2.bf16.msra.mxu0 0
        %1162 = vmatprep.mubr.bf16.mxu0 0
        %1163 = vmatmul.mubr.bf16.gmra.mxu0 %v1128
        %v1164 = vpop.f32.mrf.mxu0
        %v1165 = vadd.f32 0.0, %v1164
        %v1166 = vpop.f32.mrf.mxu0
        %v1167 = vpop.f32.mrf.mxu0
        %v1168 = vadd.f32 0.0, %v1167
        %v1169 = vpop.f32.mrf.mxu0
        %1170 = vdwg.mxu0
        %v1171 = vpack.c.bf16 %v1168, %v1165
        %1172 = vrot.lane.b32.xlu0 %v1038, 120
        %v1173 = vpop.permute.xlu0 %1172
        %1174 = vrot.lane.b32.xlu0 %v1038, 88
        %v1175 = vpop.permute.xlu0 %1174
        %v1177 = vsel %vm1048, %v1173, 0
        %v1180 = vsel %vm1048, %v1175, 0
        %1182 = vmatprep.subr.bf16.mxu0 0
        %1183 = vmatpush1.bf16.xpose.msra.mxu0 0
        %1184 = vmatprep.subr.bf16.mxu0 0
        %1185 = vmatpush1.bf16.xpose.msra.mxu0 0
        %1186 = vmatprep.subr.bf16.mxu0 0
        %1187 = vmatpush1.bf16.xpose.msra.mxu0 0
        %1188 = vmatprep.subr.bf16.mxu0 0
        %1189 = vmatpush1.bf16.xpose.msra.mxu0 0
        %1190 = vmatprep.subr.bf16.mxu0 0
        %1191 = vmatpush1.bf16.xpose.msra.mxu0 0
        %1192 = vmatprep.subr.bf16.mxu0 0
        %1193 = vmatpush1.bf16.xpose.msra.mxu0 0
        %1194 = vmatprep.subr.bf16.mxu0 0
        %1195 = vmatpush1.bf16.xpose.msra.mxu0 0
        %1196 = vmatprep.subr.bf16.mxu0 0
        %1197 = vmatpush1.bf16.xpose.msra.mxu0 %v1180
        %1198 = vmatprep.subr.bf16.mxu0 0
        %1199 = vmatpush2.bf16.xpose.msra.mxu0 0
        %1200 = vmatprep.subr.bf16.mxu0 0
        %1201 = vmatpush2.bf16.xpose.msra.mxu0 0
        %1202 = vmatprep.subr.bf16.mxu0 0
        %1203 = vmatpush2.bf16.xpose.msra.mxu0 0
        %1204 = vmatprep.subr.bf16.mxu0 0
        %1205 = vmatpush2.bf16.xpose.msra.mxu0 0
        %1206 = vmatprep.subr.bf16.mxu0 0
        %1207 = vmatpush2.bf16.xpose.msra.mxu0 0
        %1208 = vmatprep.subr.bf16.mxu0 0
        %1209 = vmatpush2.bf16.xpose.msra.mxu0 0
        %1210 = vmatprep.subr.bf16.mxu0 0
        %1211 = vmatpush2.bf16.xpose.msra.mxu0 0
        %1212 = vmatprep.subr.bf16.mxu0 0
        %1213 = vmatpush2.bf16.xpose.msra.mxu0 0
        %1214 = vmatprep.mubr.bf16.mxu0 0
        %1215 = vmatmul.mubr.bf16.gmra.mxu0 %v1177
        %v1216 = vpop.f32.mrf.mxu0
        %v1217 = vadd.f32 0.0, %v1216
        %v1218 = vpop.f32.mrf.mxu0
        %v1219 = vpop.f32.mrf.mxu0
        %v1220 = vadd.f32 0.0, %v1219
        %v1221 = vpop.f32.mrf.mxu0
        %1222 = vdwg.mxu0
        %v1223 = vmul.f32 %v1217, 0.35355338
        %v1224 = vmul.f32 %v1220, 0.35355338
        %v1225 = vadd.f32 %v1223, %v1039
        %v1226 = vadd.f32 %v1224, %v1040
        %v1227 = vsel %vm1100, %v1225, -inf
        %1228 = vmax.xlane.f32.xlu0 %v1227
        %v1229 = vpop.xlane.xlu0 %1228
        %v1230 = vsel %vm1100, %v1226, -inf
        %1231 = vmax.xlane.f32.xlu0 %v1230
        %v1232 = vpop.xlane.xlu0 %1231
        %v1233 = vsub.f32 %v1225, %v1229
        %v1234 = vsub.f32 %v1226, %v1232
        %v1235 = vmul.f32 %v1233, 1.442695
        %v1236 = vpow.pop %v1235
        %v1237 = vmul.f32 %v1234, 1.442695
        %v1238 = vpow.pop %v1237
        %v1239 = vsel %vm1100, %v1236, 0.0
        %1240 = vadd.xlane.f32.xlu0 %v1239
        %v1241 = vpop.xlane.xlu0 %1240
        %v1242 = vsel %vm1100, %v1238, 0.0
        %1243 = vadd.xlane.f32.xlu0 %v1242
        %v1244 = vpop.xlane.xlu0 %1243
        %v1245 = vrcp.pop %v1241
        %v1246 = vrcp.pop %v1244
        %v1247 = vmul.f32 %v1236, %v1245
        %v1248 = vmul.f32 %v1238, %v1246
        %v1249 = vpack.c.bf16 %v1248, %v1247
        %1250 = vrot.lane.b32.xlu0 %v1038, 56
        %v1251 = vpop.permute.xlu0 %1250
        %v1254 = vsel %vm1100, %v1249, 0
        %1256 = vmatprep.subr.bf16.mxu0 0
        %1257 = vmatpush1.bf16.msra.mxu0 0
        %1258 = vmatprep.subr.bf16.mxu0 0
        %1259 = vmatpush1.bf16.msra.mxu0 0
        %1260 = vmatprep.subr.bf16.mxu0 0
        %1261 = vmatpush1.bf16.msra.mxu0 0
        %1262 = vmatprep.subr.bf16.mxu0 0
        %1263 = vmatpush1.bf16.msra.mxu0 0
        %1264 = vmatprep.subr.bf16.mxu0 0
        %1265 = vmatpush1.bf16.msra.mxu0 0
        %1266 = vmatprep.subr.bf16.mxu0 0
        %1267 = vmatpush1.bf16.msra.mxu0 0
        %1268 = vmatprep.subr.bf16.mxu0 0
        %1269 = vmatpush1.bf16.msra.mxu0 0
        %1270 = vmatprep.subr.bf16.mxu0 0
        %1271 = vmatpush1.bf16.msra.mxu0 %v1251
        %1272 = vmatprep.subr.bf16.mxu0 0
        %1273 = vmatpush2.bf16.msra.mxu0 0
        %1274 = vmatprep.subr.bf16.mxu0 0
        %1275 = vmatpush2.bf16.msra.mxu0 0
        %1276 = vmatprep.subr.bf16.mxu0 0
        %1277 = vmatpush2.bf16.msra.mxu0 0
        %1278 = vmatprep.subr.bf16.mxu0 0
        %1279 = vmatpush2.bf16.msra.mxu0 0
        %1280 = vmatprep.subr.bf16.mxu0 0
        %1281 = vmatpush2.bf16.msra.mxu0 0
        %1282 = vmatprep.subr.bf16.mxu0 0
        %1283 = vmatpush2.bf16.msra.mxu0 0
        %1284 = vmatprep.subr.bf16.mxu0 0
        %1285 = vmatpush2.bf16.msra.mxu0 0
        %1286 = vmatprep.subr.bf16.mxu0 0
        %1287 = vmatpush2.bf16.msra.mxu0 0
        %1288 = vmatprep.mubr.bf16.mxu0 0
        %1289 = vmatmul.mubr.bf16.gmra.mxu0 %v1254
        %v1290 = vpop.f32.mrf.mxu0
        %v1291 = vadd.f32 0.0, %v1290
        %v1292 = vpop.f32.mrf.mxu0
        %v1293 = vpop.f32.mrf.mxu0
        %v1294 = vadd.f32 0.0, %v1293
        %v1295 = vpop.f32.mrf.mxu0
        %1296 = vdwg.mxu0
        %v1297 = vpack.c.bf16 %v1294, %v1291
        %v1299 = vsel %vm1048, %v1297, 0
        %vm1301 = vcmask 1043456
        %v1303 = vsel %vm1301, %v1042, 0
        %1305 = vmatprep.subr.bf16.mxu0 0
        %1306 = vmatpush1.bf16.msra.mxu0 0
        %1307 = vmatprep.subr.bf16.mxu0 0
        %1308 = vmatpush1.bf16.msra.mxu0 0
        %1309 = vmatprep.subr.bf16.mxu0 0
        %1310 = vmatpush1.bf16.msra.mxu0 0
        %1311 = vmatprep.subr.bf16.mxu0 0
        %1312 = vmatpush1.bf16.msra.mxu0 0
        %1313 = vmatprep.subr.bf16.mxu0 0
        %1314 = vmatpush1.bf16.msra.mxu0 0
        %1315 = vmatprep.subr.bf16.mxu0 0
        %1316 = vmatpush1.bf16.msra.mxu0 0
        %1317 = vmatprep.subr.bf16.mxu0 0
        %1318 = vmatpush1.bf16.msra.mxu0 0
        %1319 = vmatprep.subr.bf16.mxu0 0
        %1320 = vmatpush1.bf16.msra.mxu0 %v1303
        %1321 = vmatprep.subr.bf16.mxu0 0
        %1322 = vmatpush2.bf16.msra.mxu0 0
        %1323 = vmatprep.subr.bf16.mxu0 0
        %1324 = vmatpush2.bf16.msra.mxu0 0
        %1325 = vmatprep.subr.bf16.mxu0 0
        %1326 = vmatpush2.bf16.msra.mxu0 0
        %1327 = vmatprep.subr.bf16.mxu0 0
        %1328 = vmatpush2.bf16.msra.mxu0 0
        %1329 = vmatprep.subr.bf16.mxu0 0
        %1330 = vmatpush2.bf16.msra.mxu0 0
        %1331 = vmatprep.subr.bf16.mxu0 0
        %1332 = vmatpush2.bf16.msra.mxu0 0
        %1333 = vmatprep.subr.bf16.mxu0 0
        %1334 = vmatpush2.bf16.msra.mxu0 0
        %1335 = vmatprep.subr.bf16.mxu0 0
        %1336 = vmatpush2.bf16.msra.mxu0 0
        %1337 = vmatprep.mubr.bf16.mxu0 0
        %1338 = vmatmul.mubr.bf16.gmra.mxu0 %v1299
        %v1339 = vpop.f32.mrf.mxu0
        %v1340 = vadd.f32 0.0, %v1339
        %v1341 = vpop.f32.mrf.mxu0
        %v1342 = vpop.f32.mrf.mxu0
        %v1343 = vadd.f32 0.0, %v1342
        %v1344 = vpop.f32.mrf.mxu0
        %1345 = vdwg.mxu0
        %v1347 = vsel %vm1048, %v1171, 0
        %v1350 = vsel %vm1301, %v1041, 0
        %1352 = vmatprep.subr.bf16.mxu0 0
        %1353 = vmatpush1.bf16.msra.mxu0 0
        %1354 = vmatprep.subr.bf16.mxu0 0
        %1355 = vmatpush1.bf16.msra.mxu0 0
        %1356 = vmatprep.subr.bf16.mxu0 0
        %1357 = vmatpush1.bf16.msra.mxu0 0
        %1358 = vmatprep.subr.bf16.mxu0 0
        %1359 = vmatpush1.bf16.msra.mxu0 0
        %1360 = vmatprep.subr.bf16.mxu0 0
        %1361 = vmatpush1.bf16.msra.mxu0 0
        %1362 = vmatprep.subr.bf16.mxu0 0
        %1363 = vmatpush1.bf16.msra.mxu0 0
        %1364 = vmatprep.subr.bf16.mxu0 0
        %1365 = vmatpush1.bf16.msra.mxu0 0
        %1366 = vmatprep.subr.bf16.mxu0 0
        %1367 = vmatpush1.bf16.msra.mxu0 %v1350
        %1368 = vmatprep.subr.bf16.mxu0 0
        %1369 = vmatpush2.bf16.msra.mxu0 0
        %1370 = vmatprep.subr.bf16.mxu0 0
        %1371 = vmatpush2.bf16.msra.mxu0 0
        %1372 = vmatprep.subr.bf16.mxu0 0
        %1373 = vmatpush2.bf16.msra.mxu0 0
        %1374 = vmatprep.subr.bf16.mxu0 0
        %1375 = vmatpush2.bf16.msra.mxu0 0
        %1376 = vmatprep.subr.bf16.mxu0 0
        %1377 = vmatpush2.bf16.msra.mxu0 0
        %1378 = vmatprep.subr.bf16.mxu0 0
        %1379 = vmatpush2.bf16.msra.mxu0 0
        %1380 = vmatprep.subr.bf16.mxu0 0
        %1381 = vmatpush2.bf16.msra.mxu0 0
        %1382 = vmatprep.subr.bf16.mxu0 0
        %1383 = vmatpush2.bf16.msra.mxu0 0
        %1384 = vmatprep.mubr.bf16.mxu0 0
        %1385 = vmatmul.mubr.bf16.gmra.mxu0 %v1347
        %v1386 = vpop.f32.mrf.mxu0
        %v1387 = vadd.f32 %v1340, %v1386
        %v1388 = vpop.f32.mrf.mxu0
        %v1389 = vpop.f32.mrf.mxu0
        %v1390 = vadd.f32 %v1343, %v1389
        %v1391 = vpop.f32.mrf.mxu0
        %1392 = vdwg.mxu0
        %1393 = vrot.lane.b32.xlu0 %v1038, 112
        %v1394 = vpop.permute.xlu0 %1393
        %1395 = vrot.lane.b32.xlu0 %v1038, 80
        %v1396 = vpop.permute.xlu0 %1395
        %v1398 = vsel %vm1048, %v1394, 0
        %v1401 = vsel %vm1048, %v1396, 0
        %1403 = vmatprep.subr.bf16.mxu0 0
        %1404 = vmatpush1.bf16.xpose.msra.mxu0 0
        %1405 = vmatprep.subr.bf16.mxu0 0
        %1406 = vmatpush1.bf16.xpose.msra.mxu0 0
        %1407 = vmatprep.subr.bf16.mxu0 0
        %1408 = vmatpush1.bf16.xpose.msra.mxu0 0
        %1409 = vmatprep.subr.bf16.mxu0 0
        %1410 = vmatpush1.bf16.xpose.msra.mxu0 0
        %1411 = vmatprep.subr.bf16.mxu0 0
        %1412 = vmatpush1.bf16.xpose.msra.mxu0 0
        %1413 = vmatprep.subr.bf16.mxu0 0
        %1414 = vmatpush1.bf16.xpose.msra.mxu0 0
        %1415 = vmatprep.subr.bf16.mxu0 0
        %1416 = vmatpush1.bf16.xpose.msra.mxu0 0
        %1417 = vmatprep.subr.bf16.mxu0 0
        %1418 = vmatpush1.bf16.xpose.msra.mxu0 %v1401
        %1419 = vmatprep.subr.bf16.mxu0 0
        %1420 = vmatpush2.bf16.xpose.msra.mxu0 0
        %1421 = vmatprep.subr.bf16.mxu0 0
        %1422 = vmatpush2.bf16.xpose.msra.mxu0 0
        %1423 = vmatprep.subr.bf16.mxu0 0
        %1424 = vmatpush2.bf16.xpose.msra.mxu0 0
        %1425 = vmatprep.subr.bf16.mxu0 0
        %1426 = vmatpush2.bf16.xpose.msra.mxu0 0
        %1427 = vmatprep.subr.bf16.mxu0 0
        %1428 = vmatpush2.bf16.xpose.msra.mxu0 0
        %1429 = vmatprep.subr.bf16.mxu0 0
        %1430 = vmatpush2.bf16.xpose.msra.mxu0 0
        %1431 = vmatprep.subr.bf16.mxu0 0
        %1432 = vmatpush2.bf16.xpose.msra.mxu0 0
        %1433 = vmatprep.subr.bf16.mxu0 0
        %1434 = vmatpush2.bf16.xpose.msra.mxu0 0
        %1435 = vmatprep.mubr.bf16.mxu0 0
        %1436 = vmatmul.mubr.bf16.gmra.mxu0 %v1398
        %v1437 = vpop.f32.mrf.mxu0
        %v1438 = vadd.f32 0.0, %v1437
        %v1439 = vpop.f32.mrf.mxu0
        %v1440 = vpop.f32.mrf.mxu0
        %v1441 = vadd.f32 0.0, %v1440
        %v1442 = vpop.f32.mrf.mxu0
        %1443 = vdwg.mxu0
        %v1444 = vmul.f32 %v1438, 0.35355338
        %v1445 = vmul.f32 %v1441, 0.35355338
        %v1446 = vadd.f32 %v1444, %v1039
        %v1447 = vadd.f32 %v1445, %v1040
        %v1448 = vsel %vm1100, %v1446, -inf
        %1449 = vmax.xlane.f32.xlu0 %v1448
        %v1450 = vpop.xlane.xlu0 %1449
        %v1451 = vsel %vm1100, %v1447, -inf
        %1452 = vmax.xlane.f32.xlu0 %v1451
        %v1453 = vpop.xlane.xlu0 %1452
        %v1454 = vsub.f32 %v1446, %v1450
        %v1455 = vsub.f32 %v1447, %v1453
        %v1456 = vmul.f32 %v1454, 1.442695
        %v1457 = vpow.pop %v1456
        %v1458 = vmul.f32 %v1455, 1.442695
        %v1459 = vpow.pop %v1458
        %v1460 = vsel %vm1100, %v1457, 0.0
        %1461 = vadd.xlane.f32.xlu0 %v1460
        %v1462 = vpop.xlane.xlu0 %1461
        %v1463 = vsel %vm1100, %v1459, 0.0
        %1464 = vadd.xlane.f32.xlu0 %v1463
        %v1465 = vpop.xlane.xlu0 %1464
        %v1466 = vrcp.pop %v1462
        %v1467 = vrcp.pop %v1465
        %v1468 = vmul.f32 %v1457, %v1466
        %v1469 = vmul.f32 %v1459, %v1467
        %v1470 = vpack.c.bf16 %v1469, %v1468
        %1471 = vrot.lane.b32.xlu0 %v1038, 48
        %v1472 = vpop.permute.xlu0 %1471
        %v1475 = vsel %vm1100, %v1470, 0
        %1477 = vmatprep.subr.bf16.mxu0 0
        %1478 = vmatpush1.bf16.msra.mxu0 0
        %1479 = vmatprep.subr.bf16.mxu0 0
        %1480 = vmatpush1.bf16.msra.mxu0 0
        %1481 = vmatprep.subr.bf16.mxu0 0
        %1482 = vmatpush1.bf16.msra.mxu0 0
        %1483 = vmatprep.subr.bf16.mxu0 0
        %1484 = vmatpush1.bf16.msra.mxu0 0
        %1485 = vmatprep.subr.bf16.mxu0 0
        %1486 = vmatpush1.bf16.msra.mxu0 0
        %1487 = vmatprep.subr.bf16.mxu0 0
        %1488 = vmatpush1.bf16.msra.mxu0 0
        %1489 = vmatprep.subr.bf16.mxu0 0
        %1490 = vmatpush1.bf16.msra.mxu0 0
        %1491 = vmatprep.subr.bf16.mxu0 0
        %1492 = vmatpush1.bf16.msra.mxu0 %v1472
        %1493 = vmatprep.subr.bf16.mxu0 0
        %1494 = vmatpush2.bf16.msra.mxu0 0
        %1495 = vmatprep.subr.bf16.mxu0 0
        %1496 = vmatpush2.bf16.msra.mxu0 0
        %1497 = vmatprep.subr.bf16.mxu0 0
        %1498 = vmatpush2.bf16.msra.mxu0 0
        %1499 = vmatprep.subr.bf16.mxu0 0
        %1500 = vmatpush2.bf16.msra.mxu0 0
        %1501 = vmatprep.subr.bf16.mxu0 0
        %1502 = vmatpush2.bf16.msra.mxu0 0
        %1503 = vmatprep.subr.bf16.mxu0 0
        %1504 = vmatpush2.bf16.msra.mxu0 0
        %1505 = vmatprep.subr.bf16.mxu0 0
        %1506 = vmatpush2.bf16.msra.mxu0 0
        %1507 = vmatprep.subr.bf16.mxu0 0
        %1508 = vmatpush2.bf16.msra.mxu0 0
        %1509 = vmatprep.mubr.bf16.mxu0 0
        %1510 = vmatmul.mubr.bf16.gmra.mxu0 %v1475
        %v1511 = vpop.f32.mrf.mxu0
        %v1512 = vadd.f32 0.0, %v1511
        %v1513 = vpop.f32.mrf.mxu0
        %v1514 = vpop.f32.mrf.mxu0
        %v1515 = vadd.f32 0.0, %v1514
        %v1516 = vpop.f32.mrf.mxu0
        %1517 = vdwg.mxu0
        %v1518 = vpack.c.bf16 %v1515, %v1512
        %v1520 = vsel %vm1048, %v1518, 0
        %v1523 = vsel %vm1301, %v1043, 0
        %1525 = vmatprep.subr.bf16.mxu0 0
        %1526 = vmatpush1.bf16.msra.mxu0 0
        %1527 = vmatprep.subr.bf16.mxu0 0
        %1528 = vmatpush1.bf16.msra.mxu0 0
        %1529 = vmatprep.subr.bf16.mxu0 0
        %1530 = vmatpush1.bf16.msra.mxu0 0
        %1531 = vmatprep.subr.bf16.mxu0 0
        %1532 = vmatpush1.bf16.msra.mxu0 0
        %1533 = vmatprep.subr.bf16.mxu0 0
        %1534 = vmatpush1.bf16.msra.mxu0 0
        %1535 = vmatprep.subr.bf16.mxu0 0
        %1536 = vmatpush1.bf16.msra.mxu0 0
        %1537 = vmatprep.subr.bf16.mxu0 0
        %1538 = vmatpush1.bf16.msra.mxu0 0
        %1539 = vmatprep.subr.bf16.mxu0 0
        %1540 = vmatpush1.bf16.msra.mxu0 %v1523
        %1541 = vmatprep.subr.bf16.mxu0 0
        %1542 = vmatpush2.bf16.msra.mxu0 0
        %1543 = vmatprep.subr.bf16.mxu0 0
        %1544 = vmatpush2.bf16.msra.mxu0 0
        %1545 = vmatprep.subr.bf16.mxu0 0
        %1546 = vmatpush2.bf16.msra.mxu0 0
        %1547 = vmatprep.subr.bf16.mxu0 0
        %1548 = vmatpush2.bf16.msra.mxu0 0
        %1549 = vmatprep.subr.bf16.mxu0 0
        %1550 = vmatpush2.bf16.msra.mxu0 0
        %1551 = vmatprep.subr.bf16.mxu0 0
        %1552 = vmatpush2.bf16.msra.mxu0 0
        %1553 = vmatprep.subr.bf16.mxu0 0
        %1554 = vmatpush2.bf16.msra.mxu0 0
        %1555 = vmatprep.subr.bf16.mxu0 0
        %1556 = vmatpush2.bf16.msra.mxu0 0
        %1557 = vmatprep.mubr.bf16.mxu0 0
        %1558 = vmatmul.mubr.bf16.gmra.mxu0 %v1520
        %v1559 = vpop.f32.mrf.mxu0
        %v1560 = vadd.f32 0.0, %v1559
        %v1561 = vpop.f32.mrf.mxu0
        %v1562 = vpop.f32.mrf.mxu0
        %v1563 = vadd.f32 0.0, %v1562
        %v1564 = vpop.f32.mrf.mxu0
        %1565 = vdwg.mxu0
        %v1566 = vadd.f32 %v1387, %v1560
        %v1567 = vadd.f32 %v1390, %v1563
        %1568 = vrot.lane.b32.xlu0 %v1038, 104
        %v1569 = vpop.permute.xlu0 %1568
        %1570 = vrot.lane.b32.xlu0 %v1038, 72
        %v1571 = vpop.permute.xlu0 %1570
        %v1573 = vsel %vm1048, %v1569, 0
        %v1576 = vsel %vm1048, %v1571, 0
        %1578 = vmatprep.subr.bf16.mxu0 0
        %1579 = vmatpush1.bf16.xpose.msra.mxu0 0
        %1580 = vmatprep.subr.bf16.mxu0 0
        %1581 = vmatpush1.bf16.xpose.msra.mxu0 0
        %1582 = vmatprep.subr.bf16.mxu0 0
        %1583 = vmatpush1.bf16.xpose.msra.mxu0 0
        %1584 = vmatprep.subr.bf16.mxu0 0
        %1585 = vmatpush1.bf16.xpose.msra.mxu0 0
        %1586 = vmatprep.subr.bf16.mxu0 0
        %1587 = vmatpush1.bf16.xpose.msra.mxu0 0
        %1588 = vmatprep.subr.bf16.mxu0 0
        %1589 = vmatpush1.bf16.xpose.msra.mxu0 0
        %1590 = vmatprep.subr.bf16.mxu0 0
        %1591 = vmatpush1.bf16.xpose.msra.mxu0 0
        %1592 = vmatprep.subr.bf16.mxu0 0
        %1593 = vmatpush1.bf16.xpose.msra.mxu0 %v1576
        %1594 = vmatprep.subr.bf16.mxu0 0
        %1595 = vmatpush2.bf16.xpose.msra.mxu0 0
        %1596 = vmatprep.subr.bf16.mxu0 0
        %1597 = vmatpush2.bf16.xpose.msra.mxu0 0
        %1598 = vmatprep.subr.bf16.mxu0 0
        %1599 = vmatpush2.bf16.xpose.msra.mxu0 0
        %1600 = vmatprep.subr.bf16.mxu0 0
        %1601 = vmatpush2.bf16.xpose.msra.mxu0 0
        %1602 = vmatprep.subr.bf16.mxu0 0
        %1603 = vmatpush2.bf16.xpose.msra.mxu0 0
        %1604 = vmatprep.subr.bf16.mxu0 0
        %1605 = vmatpush2.bf16.xpose.msra.mxu0 0
        %1606 = vmatprep.subr.bf16.mxu0 0
        %1607 = vmatpush2.bf16.xpose.msra.mxu0 0
        %1608 = vmatprep.subr.bf16.mxu0 0
        %1609 = vmatpush2.bf16.xpose.msra.mxu0 0
        %1610 = vmatprep.mubr.bf16.mxu0 0
        %1611 = vmatmul.mubr.bf16.gmra.mxu0 %v1573
        %v1612 = vpop.f32.mrf.mxu0
        %v1613 = vadd.f32 0.0, %v1612
        %v1614 = vpop.f32.mrf.mxu0
        %v1615 = vpop.f32.mrf.mxu0
        %v1616 = vadd.f32 0.0, %v1615
        %v1617 = vpop.f32.mrf.mxu0
        %1618 = vdwg.mxu0
        %v1619 = vmul.f32 %v1613, 0.35355338
        %v1620 = vmul.f32 %v1616, 0.35355338
        %v1621 = vadd.f32 %v1619, %v1039
        %v1622 = vadd.f32 %v1620, %v1040
        %v1623 = vsel %vm1100, %v1621, -inf
        %1624 = vmax.xlane.f32.xlu0 %v1623
        %v1625 = vpop.xlane.xlu0 %1624
        %v1626 = vsel %vm1100, %v1622, -inf
        %1627 = vmax.xlane.f32.xlu0 %v1626
        %v1628 = vpop.xlane.xlu0 %1627
        %v1629 = vsub.f32 %v1621, %v1625
        %v1630 = vsub.f32 %v1622, %v1628
        %v1631 = vmul.f32 %v1629, 1.442695
        %v1632 = vpow.pop %v1631
        %v1633 = vmul.f32 %v1630, 1.442695
        %v1634 = vpow.pop %v1633
        %v1635 = vsel %vm1100, %v1632, 0.0
        %1636 = vadd.xlane.f32.xlu0 %v1635
        %v1637 = vpop.xlane.xlu0 %1636
        %v1638 = vsel %vm1100, %v1634, 0.0
        %1639 = vadd.xlane.f32.xlu0 %v1638
        %v1640 = vpop.xlane.xlu0 %1639
        %v1641 = vrcp.pop %v1637
        %v1642 = vrcp.pop %v1640
        %v1643 = vmul.f32 %v1632, %v1641
        %v1644 = vmul.f32 %v1634, %v1642
        %v1645 = vpack.c.bf16 %v1644, %v1643
        %1646 = vrot.lane.b32.xlu0 %v1038, 40
        %v1647 = vpop.permute.xlu0 %1646
        %v1650 = vsel %vm1100, %v1645, 0
        %1652 = vmatprep.subr.bf16.mxu0 0
        %1653 = vmatpush1.bf16.msra.mxu0 0
        %1654 = vmatprep.subr.bf16.mxu0 0
        %1655 = vmatpush1.bf16.msra.mxu0 0
        %1656 = vmatprep.subr.bf16.mxu0 0
        %1657 = vmatpush1.bf16.msra.mxu0 0
        %1658 = vmatprep.subr.bf16.mxu0 0
        %1659 = vmatpush1.bf16.msra.mxu0 0
        %1660 = vmatprep.subr.bf16.mxu0 0
        %1661 = vmatpush1.bf16.msra.mxu0 0
        %1662 = vmatprep.subr.bf16.mxu0 0
        %1663 = vmatpush1.bf16.msra.mxu0 0
        %1664 = vmatprep.subr.bf16.mxu0 0
        %1665 = vmatpush1.bf16.msra.mxu0 0
        %1666 = vmatprep.subr.bf16.mxu0 0
        %1667 = vmatpush1.bf16.msra.mxu0 %v1647
        %1668 = vmatprep.subr.bf16.mxu0 0
        %1669 = vmatpush2.bf16.msra.mxu0 0
        %1670 = vmatprep.subr.bf16.mxu0 0
        %1671 = vmatpush2.bf16.msra.mxu0 0
        %1672 = vmatprep.subr.bf16.mxu0 0
        %1673 = vmatpush2.bf16.msra.mxu0 0
        %1674 = vmatprep.subr.bf16.mxu0 0
        %1675 = vmatpush2.bf16.msra.mxu0 0
        %1676 = vmatprep.subr.bf16.mxu0 0
        %1677 = vmatpush2.bf16.msra.mxu0 0
        %1678 = vmatprep.subr.bf16.mxu0 0
        %1679 = vmatpush2.bf16.msra.mxu0 0
        %1680 = vmatprep.subr.bf16.mxu0 0
        %1681 = vmatpush2.bf16.msra.mxu0 0
        %1682 = vmatprep.subr.bf16.mxu0 0
        %1683 = vmatpush2.bf16.msra.mxu0 0
        %1684 = vmatprep.mubr.bf16.mxu0 0
        %1685 = vmatmul.mubr.bf16.gmra.mxu0 %v1650
        %v1686 = vpop.f32.mrf.mxu0
        %v1687 = vadd.f32 0.0, %v1686
        %v1688 = vpop.f32.mrf.mxu0
        %v1689 = vpop.f32.mrf.mxu0
        %v1690 = vadd.f32 0.0, %v1689
        %v1691 = vpop.f32.mrf.mxu0
        %1692 = vdwg.mxu0
        %v1693 = vpack.c.bf16 %v1690, %v1687
        %v1695 = vsel %vm1048, %v1693, 0
        %v1698 = vsel %vm1301, %v1044, 0
        %1700 = vmatprep.subr.bf16.mxu0 0
        %1701 = vmatpush1.bf16.msra.mxu0 0
        %1702 = vmatprep.subr.bf16.mxu0 0
        %1703 = vmatpush1.bf16.msra.mxu0 0
        %1704 = vmatprep.subr.bf16.mxu0 0
        %1705 = vmatpush1.bf16.msra.mxu0 0
        %1706 = vmatprep.subr.bf16.mxu0 0
        %1707 = vmatpush1.bf16.msra.mxu0 0
        %1708 = vmatprep.subr.bf16.mxu0 0
        %1709 = vmatpush1.bf16.msra.mxu0 0
        %1710 = vmatprep.subr.bf16.mxu0 0
        %1711 = vmatpush1.bf16.msra.mxu0 0
        %1712 = vmatprep.subr.bf16.mxu0 0
        %1713 = vmatpush1.bf16.msra.mxu0 0
        %1714 = vmatprep.subr.bf16.mxu0 0
        %1715 = vmatpush1.bf16.msra.mxu0 %v1698
        %1716 = vmatprep.subr.bf16.mxu0 0
        %1717 = vmatpush2.bf16.msra.mxu0 0
        %1718 = vmatprep.subr.bf16.mxu0 0
        %1719 = vmatpush2.bf16.msra.mxu0 0
        %1720 = vmatprep.subr.bf16.mxu0 0
        %1721 = vmatpush2.bf16.msra.mxu0 0
        %1722 = vmatprep.subr.bf16.mxu0 0
        %1723 = vmatpush2.bf16.msra.mxu0 0
        %1724 = vmatprep.subr.bf16.mxu0 0
        %1725 = vmatpush2.bf16.msra.mxu0 0
        %1726 = vmatprep.subr.bf16.mxu0 0
        %1727 = vmatpush2.bf16.msra.mxu0 0
        %1728 = vmatprep.subr.bf16.mxu0 0
        %1729 = vmatpush2.bf16.msra.mxu0 0
        %1730 = vmatprep.subr.bf16.mxu0 0
        %1731 = vmatpush2.bf16.msra.mxu0 0
        %1732 = vmatprep.mubr.bf16.mxu0 0
        %1733 = vmatmul.mubr.bf16.gmra.mxu0 %v1695
        %v1734 = vpop.f32.mrf.mxu0
        %v1735 = vadd.f32 0.0, %v1734
        %v1736 = vpop.f32.mrf.mxu0
        %v1737 = vpop.f32.mrf.mxu0
        %v1738 = vadd.f32 0.0, %v1737
        %v1739 = vpop.f32.mrf.mxu0
        %1740 = vdwg.mxu0
        %v1741 = vadd.f32 %v1566, %v1735
        %v1742 = vadd.f32 %v1567, %v1738
        %v1743 = vld [vmem:[%s906] sm:$0x1]
        %v1745 = vlaneseq
        %v1746 = vshrl.u32 %v1745, 7
        %v1747 = vsub.s32 0, %v1746
        %v1748 = vrot.slane %v1743, %v1747
        %v1750 = vadd.f32 %v1741, %v1748
        %v1751 = vadd.f32 %v1742, %v1748
        %v1752 = vadd.f32 %v962, %v1750
        %v1753 = vadd.f32 %v963, %v1751
        %v1754 = vsel %vm993, %v1752, 0.0
        %1755 = vadd.xlane.f32.xlu0 %v1754
        %v1756 = vpop.xlane.xlu0 %1755
        %v1757 = vsel %vm993, %v1753, 0.0
        %1758 = vadd.xlane.f32.xlu0 %v1757
        %v1759 = vpop.xlane.xlu0 %1758
        %v1760 = vmul.f32 %v1752, %v1752
        %v1761 = vmul.f32 %v1753, %v1753
        %v1762 = vsel %vm993, %v1760, 0.0
        %1763 = vadd.xlane.f32.xlu0 %v1762
        %v1764 = vpop.xlane.xlu0 %1763
        %v1765 = vsel %vm993, %v1761, 0.0
        %1766 = vadd.xlane.f32.xlu0 %v1765
        %v1767 = vpop.xlane.xlu0 %1766
        %v1768 = vmul.f32 %v1756, 0.03125
        %v1769 = vmul.f32 %v1759, 0.03125
        %v1770 = vmul.f32 %v1764, 0.03125
        %v1771 = vmul.f32 %v1767, 0.03125
        %v1772 = vmul.f32 %v1768, %v1768
        %v1773 = vmul.f32 %v1769, %v1769
        %v1774 = vsub.f32 %v1770, %v1772
        %v1775 = vsub.f32 %v1771, %v1773
        %v1776 = vsub.f32 %v1752, %v1768
        %v1777 = vsub.f32 %v1753, %v1769
        %v1778 = vadd.f32 %v1774, 1e-05
        %v1779 = vadd.f32 %v1775, 1e-05
        %v1780 = vrsqrt.pop %v1778
        %v1781 = vrsqrt.pop %v1779
        %v1782 = vmul.f32 %v1776, %v1780
        %v1783 = vmul.f32 %v1777, %v1781
        %v1784 = vlaneseq
        %v1785 = vshrl.u32 %v1784, 7
        %v1786 = vsub.s32 0, %v1785
        %v1787 = vrot.slane %v968, %v1786
        %v1788 = vmul.f32 %v1782, %v1787
        %v1789 = vmul.f32 %v1783, %v1787
        %v1790 = vlaneseq
        %v1791 = vshrl.u32 %v1790, 7
        %v1792 = vsub.s32 1, %v1791
        %v1793 = vrot.slane %v968, %v1792
        %v1794 = vadd.f32 %v1788, %v1793
        %v1795 = vadd.f32 %v1789, %v1793
        %v1796 = vld [vmem:[%s911] sm:$0xf]
        %v1797 = vld [vmem:[%s911 + $0x4] sm:$0xf]
        %v1798 = vld [vmem:[%s911 + $0x8] sm:$0xf]
        %v1799 = vld [vmem:[%s911 + $0xc] sm:$0xf]
        %v1800 = vpack.c.bf16 %v1795, %v1794
        %v1801 = vld [vmem:[%s914] sm:$0x1]
        %v1803 = vlaneseq
        %v1804 = vshrl.u32 %v1803, 7
        %v1805 = vsub.s32 0, %v1804
        %v1806 = vrot.slane %v1801, %v1805
        %v1812 = vunpack.c.l.b16 %v1796
        %v1813 = vunpack.c.l.b16 %v1797
        %v1814 = vunpack.c.l.b16 %v1798
        %v1815 = vunpack.c.l.b16 %v1799
        %v1816 = vpack.c.b16 %v1813, %v1812
        %v1817 = vpack.c.b16 %v1815, %v1814
        %v1821 = vsel %vm993, %v1800, 0
        %1823 = vmatprep.subr.bf16.mxu0 0
        %1824 = vmatpush1.bf16.msra.mxu0 0
        %1825 = vmatprep.subr.bf16.mxu0 0
        %1826 = vmatpush1.bf16.msra.mxu0 0
        %1827 = vmatprep.subr.bf16.mxu0 0
        %1828 = vmatpush1.bf16.msra.mxu0 0
        %1829 = vmatprep.subr.bf16.mxu0 0
        %1830 = vmatpush1.bf16.msra.mxu0 0
        %1831 = vmatprep.subr.bf16.mxu0 0
        %1832 = vmatpush1.bf16.msra.mxu0 0
        %1833 = vmatprep.subr.bf16.mxu0 0
        %1834 = vmatpush1.bf16.msra.mxu0 0
        %1835 = vmatprep.subr.bf16.mxu0 0
        %1836 = vmatpush1.bf16.msra.mxu0 %v1817
        %1837 = vmatprep.subr.bf16.mxu0 0
        %1838 = vmatpush1.bf16.msra.mxu0 %v1816
        %1839 = vmatprep.subr.bf16.mxu0 0
        %1840 = vmatpush2.bf16.msra.mxu0 0
        %1841 = vmatprep.subr.bf16.mxu0 0
        %1842 = vmatpush2.bf16.msra.mxu0 0
        %1843 = vmatprep.subr.bf16.mxu0 0
        %1844 = vmatpush2.bf16.msra.mxu0 0
        %1845 = vmatprep.subr.bf16.mxu0 0
        %1846 = vmatpush2.bf16.msra.mxu0 0
        %1847 = vmatprep.subr.bf16.mxu0 0
        %1848 = vmatpush2.bf16.msra.mxu0 0
        %1849 = vmatprep.subr.bf16.mxu0 0
        %1850 = vmatpush2.bf16.msra.mxu0 0
        %1851 = vmatprep.subr.bf16.mxu0 0
        %1852 = vmatpush2.bf16.msra.mxu0 0
        %1853 = vmatprep.subr.bf16.mxu0 0
        %1854 = vmatpush2.bf16.msra.mxu0 0
        %1855 = vmatprep.mubr.bf16.mxu0 0
        %1856 = vmatmul.mubr.bf16.gmra.mxu0 %v1821
        %v1857 = vpop.f32.mrf.mxu0
        %v1858 = vadd.f32 %v1806, %v1857
        %v1859 = vpop.f32.mrf.mxu0
        %v1860 = vpop.f32.mrf.mxu0
        %v1861 = vadd.f32 %v1806, %v1860
        %v1862 = vpop.f32.mrf.mxu0
        %1863 = vdwg.mxu0
        %v1864 = vpack.c.bf16 %v1861, %v1858
        %v1865 = vld [vmem:[%s919] sm:$0xf]
        %v1866 = vld [vmem:[%s919 + $0x4] sm:$0xf]
        %v1867 = vld [vmem:[%s919 + $0x8] sm:$0xf]
        %v1868 = vld [vmem:[%s919 + $0xc] sm:$0xf]
        %v1869 = vpack.c.bf16 %v965, %v964
        %v1870 = vpack.c.bf16 %v967, %v966
        %v1871 = vld [vmem:[%s922] sm:$0x1]
        %v1873 = vlaneseq
        %v1874 = vshrl.u32 %v1873, 7
        %v1875 = vsub.s32 0, %v1874
        %v1876 = vrot.slane %v1871, %v1875
        %v1882 = vunpack.c.l.b16 %v1865
        %v1883 = vunpack.c.l.b16 %v1866
        %v1884 = vunpack.c.l.b16 %v1867
        %v1885 = vunpack.c.l.b16 %v1868
        %v1886 = vpack.c.b16 %v1883, %v1882
        %v1887 = vpack.c.b16 %v1885, %v1884
        %v1891 = vsel %vm993, %v1869, 0
        %v1894 = vsel %vm993, %v1870, 0
        %1896 = vmatprep.subr.bf16.mxu0 0
        %1897 = vmatpush1.bf16.msra.mxu0 0
        %1898 = vmatprep.subr.bf16.mxu0 0
        %1899 = vmatpush1.bf16.msra.mxu0 0
        %1900 = vmatprep.subr.bf16.mxu0 0
        %1901 = vmatpush1.bf16.msra.mxu0 0
        %1902 = vmatprep.subr.bf16.mxu0 0
        %1903 = vmatpush1.bf16.msra.mxu0 0
        %1904 = vmatprep.subr.bf16.mxu0 0
        %1905 = vmatpush1.bf16.msra.mxu0 0
        %1906 = vmatprep.subr.bf16.mxu0 0
        %1907 = vmatpush1.bf16.msra.mxu0 0
        %1908 = vmatprep.subr.bf16.mxu0 0
        %1909 = vmatpush1.bf16.msra.mxu0 %v1887
        %1910 = vmatprep.subr.bf16.mxu0 0
        %1911 = vmatpush1.bf16.msra.mxu0 %v1886
        %1912 = vmatprep.subr.bf16.mxu0 0
        %1913 = vmatpush2.bf16.msra.mxu0 0
        %1914 = vmatprep.subr.bf16.mxu0 0
        %1915 = vmatpush2.bf16.msra.mxu0 0
        %1916 = vmatprep.subr.bf16.mxu0 0
        %1917 = vmatpush2.bf16.msra.mxu0 0
        %1918 = vmatprep.subr.bf16.mxu0 0
        %1919 = vmatpush2.bf16.msra.mxu0 0
        %1920 = vmatprep.subr.bf16.mxu0 0
        %1921 = vmatpush2.bf16.msra.mxu0 0
        %1922 = vmatprep.subr.bf16.mxu0 0
        %1923 = vmatpush2.bf16.msra.mxu0 0
        %1924 = vmatprep.subr.bf16.mxu0 0
        %1925 = vmatpush2.bf16.msra.mxu0 0
        %1926 = vmatprep.subr.bf16.mxu0 0
        %1927 = vmatpush2.bf16.msra.mxu0 0
        %1928 = vmatprep.mubr.bf16.mxu0 0
        %1929 = vmatmul.mubr.bf16.gmra.mxu0 %v1891
        %v1930 = vpop.f32.mrf.mxu0
        %v1931 = vadd.f32 %v1876, %v1930
        %v1932 = vpop.f32.mrf.mxu0
        %v1933 = vpop.f32.mrf.mxu0
        %v1934 = vadd.f32 %v1876, %v1933
        %v1935 = vpop.f32.mrf.mxu0
        %1936 = vmatprep.mubr.bf16.mxu0 0
        %1937 = vmatmul.mubr.bf16.gmra.mxu0 %v1894
        %v1938 = vpop.f32.mrf.mxu0
        %v1939 = vadd.f32 %v1876, %v1938
        %v1940 = vpop.f32.mrf.mxu0
        %v1941 = vpop.f32.mrf.mxu0
        %v1942 = vadd.f32 %v1876, %v1941
        %v1943 = vpop.f32.mrf.mxu0
        %1944 = vdwg.mxu0
        %v1945 = vpack.c.bf16 %v1934, %v1931
        %v1946 = vpack.c.bf16 %v1942, %v1939
        %v1947 = vld [vmem:[%s889] sm:$0xff]
        %v1948 = vld [vmem:[%s889 + $0x8] sm:$0xff]
        %v1949 = vld [vmem:[%s927] sm:$0xf]
        %v1950 = vld [vmem:[%s927 + $0x4] sm:$0xf]
        %v1951 = vld [vmem:[%s927 + $0x8] sm:$0xf]
        %v1952 = vld [vmem:[%s927 + $0xc] sm:$0xf]
        %v1954 = vsel %vm1048, %v1864, 0
        %v1957 = vsel %vm1048, %v1945, 0
        %v1960 = vsel %vm1048, %v1946, 0
        %1962 = vmatprep.subr.bf16.mxu0 0
        %1963 = vmatpush1.bf16.xpose.msra.mxu0 0
        %1964 = vmatprep.subr.bf16.mxu0 0
        %1965 = vmatpush1.bf16.xpose.msra.mxu0 0
        %1966 = vmatprep.subr.bf16.mxu0 0
        %1967 = vmatpush1.bf16.xpose.msra.mxu0 0
        %1968 = vmatprep.subr.bf16.mxu0 0
        %1969 = vmatpush1.bf16.xpose.msra.mxu0 0
        %1970 = vmatprep.subr.bf16.mxu0 0
        %1971 = vmatpush1.bf16.xpose.msra.mxu0 0
        %1972 = vmatprep.subr.bf16.mxu0 0
        %1973 = vmatpush1.bf16.xpose.msra.mxu0 0
        %1974 = vmatprep.subr.bf16.mxu0 0
        %1975 = vmatpush1.bf16.xpose.msra.mxu0 %v1960
        %1976 = vmatprep.subr.bf16.mxu0 0
        %1977 = vmatpush1.bf16.xpose.msra.mxu0 %v1957
        %1978 = vmatprep.subr.bf16.mxu0 0
        %1979 = vmatpush2.bf16.xpose.msra.mxu0 0
        %1980 = vmatprep.subr.bf16.mxu0 0
        %1981 = vmatpush2.bf16.xpose.msra.mxu0 0
        %1982 = vmatprep.subr.bf16.mxu0 0
        %1983 = vmatpush2.bf16.xpose.msra.mxu0 0
        %1984 = vmatprep.subr.bf16.mxu0 0
        %1985 = vmatpush2.bf16.xpose.msra.mxu0 0
        %1986 = vmatprep.subr.bf16.mxu0 0
        %1987 = vmatpush2.bf16.xpose.msra.mxu0 0
        %1988 = vmatprep.subr.bf16.mxu0 0
        %1989 = vmatpush2.bf16.xpose.msra.mxu0 0
        %1990 = vmatprep.subr.bf16.mxu0 0
        %1991 = vmatpush2.bf16.xpose.msra.mxu0 0
        %1992 = vmatprep.subr.bf16.mxu0 0
        %1993 = vmatpush2.bf16.xpose.msra.mxu0 0
        %1994 = vmatprep.mubr.bf16.mxu0 0
        %1995 = vmatmul.mubr.bf16.gmra.mxu0 %v1954
        %v1996 = vpop.f32.mrf.mxu0
        %v1997 = vadd.f32 0.0, %v1996
        %v1998 = vpop.f32.mrf.mxu0
        %v1999 = vpop.f32.mrf.mxu0
        %v2000 = vadd.f32 0.0, %v1999
        %v2001 = vpop.f32.mrf.mxu0
        %2002 = vdwg.mxu0
        %v2003 = vmul.f32 %v1997, 0.35355338
        %v2004 = vmul.f32 %v2000, 0.35355338
        %v2005 = vadd.f32 %v2003, %v1947
        %v2006 = vadd.f32 %v2004, %v1948
        %v2007 = vsel %vm993, %v2005, -inf
        %2008 = vmax.xlane.f32.xlu0 %v2007
        %v2009 = vpop.xlane.xlu0 %2008
        %v2010 = vsel %vm993, %v2006, -inf
        %2011 = vmax.xlane.f32.xlu0 %v2010
        %v2012 = vpop.xlane.xlu0 %2011
        %v2013 = vsub.f32 %v2005, %v2009
        %v2014 = vsub.f32 %v2006, %v2012
        %v2015 = vmul.f32 %v2013, 1.442695
        %v2016 = vpow.pop %v2015
        %v2017 = vmul.f32 %v2014, 1.442695
        %v2018 = vpow.pop %v2017
        %v2019 = vsel %vm993, %v2016, 0.0
        %2020 = vadd.xlane.f32.xlu0 %v2019
        %v2021 = vpop.xlane.xlu0 %2020
        %v2022 = vsel %vm993, %v2018, 0.0
        %2023 = vadd.xlane.f32.xlu0 %v2022
        %v2024 = vpop.xlane.xlu0 %2023
        %v2025 = vrcp.pop %v2021
        %v2026 = vrcp.pop %v2024
        %v2027 = vmul.f32 %v2016, %v2025
        %v2028 = vmul.f32 %v2018, %v2026
        %v2029 = vpack.c.bf16 %v2028, %v2027
        %2032 = vrot.lane.b32.xlu0 %v1945, 96
        %v2033 = vpop.permute.xlu0 %2032
        %2034 = vrot.lane.b32.xlu0 %v1946, 96
        %v2035 = vpop.permute.xlu0 %2034
        %v2039 = vsel %vm993, %v2029, 0
        %2041 = vmatprep.subr.bf16.mxu0 0
        %2042 = vmatpush1.bf16.msra.mxu0 0
        %2043 = vmatprep.subr.bf16.mxu0 0
        %2044 = vmatpush1.bf16.msra.mxu0 0
        %2045 = vmatprep.subr.bf16.mxu0 0
        %2046 = vmatpush1.bf16.msra.mxu0 0
        %2047 = vmatprep.subr.bf16.mxu0 0
        %2048 = vmatpush1.bf16.msra.mxu0 0
        %2049 = vmatprep.subr.bf16.mxu0 0
        %2050 = vmatpush1.bf16.msra.mxu0 0
        %2051 = vmatprep.subr.bf16.mxu0 0
        %2052 = vmatpush1.bf16.msra.mxu0 0
        %2053 = vmatprep.subr.bf16.mxu0 0
        %2054 = vmatpush1.bf16.msra.mxu0 %v2035
        %2055 = vmatprep.subr.bf16.mxu0 0
        %2056 = vmatpush1.bf16.msra.mxu0 %v2033
        %2057 = vmatprep.subr.bf16.mxu0 0
        %2058 = vmatpush2.bf16.msra.mxu0 0
        %2059 = vmatprep.subr.bf16.mxu0 0
        %2060 = vmatpush2.bf16.msra.mxu0 0
        %2061 = vmatprep.subr.bf16.mxu0 0
        %2062 = vmatpush2.bf16.msra.mxu0 0
        %2063 = vmatprep.subr.bf16.mxu0 0
        %2064 = vmatpush2.bf16.msra.mxu0 0
        %2065 = vmatprep.subr.bf16.mxu0 0
        %2066 = vmatpush2.bf16.msra.mxu0 0
        %2067 = vmatprep.subr.bf16.mxu0 0
        %2068 = vmatpush2.bf16.msra.mxu0 0
        %2069 = vmatprep.subr.bf16.mxu0 0
        %2070 = vmatpush2.bf16.msra.mxu0 0
        %2071 = vmatprep.subr.bf16.mxu0 0
        %2072 = vmatpush2.bf16.msra.mxu0 0
        %2073 = vmatprep.mubr.bf16.mxu0 0
        %2074 = vmatmul.mubr.bf16.gmra.mxu0 %v2039
        %v2075 = vpop.f32.mrf.mxu0
        %v2076 = vadd.f32 0.0, %v2075
        %v2077 = vpop.f32.mrf.mxu0
        %v2078 = vpop.f32.mrf.mxu0
        %v2079 = vadd.f32 0.0, %v2078
        %v2080 = vpop.f32.mrf.mxu0
        %2081 = vdwg.mxu0
        %v2082 = vpack.c.bf16 %v2079, %v2076
        %2084 = vrot.lane.b32.xlu0 %v1864, 120
        %v2085 = vpop.permute.xlu0 %2084
        %2086 = vrot.lane.b32.xlu0 %v1945, 120
        %v2087 = vpop.permute.xlu0 %2086
        %2088 = vrot.lane.b32.xlu0 %v1946, 120
        %v2089 = vpop.permute.xlu0 %2088
        %v2091 = vsel %vm1048, %v2085, 0
        %v2094 = vsel %vm1048, %v2087, 0
        %v2097 = vsel %vm1048, %v2089, 0
        %2099 = vmatprep.subr.bf16.mxu0 0
        %2100 = vmatpush1.bf16.xpose.msra.mxu0 0
        %2101 = vmatprep.subr.bf16.mxu0 0
        %2102 = vmatpush1.bf16.xpose.msra.mxu0 0
        %2103 = vmatprep.subr.bf16.mxu0 0
        %2104 = vmatpush1.bf16.xpose.msra.mxu0 0
        %2105 = vmatprep.subr.bf16.mxu0 0
        %2106 = vmatpush1.bf16.xpose.msra.mxu0 0
        %2107 = vmatprep.subr.bf16.mxu0 0
        %2108 = vmatpush1.bf16.xpose.msra.mxu0 0
        %2109 = vmatprep.subr.bf16.mxu0 0
        %2110 = vmatpush1.bf16.xpose.msra.mxu0 0
        %2111 = vmatprep.subr.bf16.mxu0 0
        %2112 = vmatpush1.bf16.xpose.msra.mxu0 %v2097
        %2113 = vmatprep.subr.bf16.mxu0 0
        %2114 = vmatpush1.bf16.xpose.msra.mxu0 %v2094
        %2115 = vmatprep.subr.bf16.mxu0 0
        %2116 = vmatpush2.bf16.xpose.msra.mxu0 0
        %2117 = vmatprep.subr.bf16.mxu0 0
        %2118 = vmatpush2.bf16.xpose.msra.mxu0 0
        %2119 = vmatprep.subr.bf16.mxu0 0
        %2120 = vmatpush2.bf16.xpose.msra.mxu0 0
        %2121 = vmatprep.subr.bf16.mxu0 0
        %2122 = vmatpush2.bf16.xpose.msra.mxu0 0
        %2123 = vmatprep.subr.bf16.mxu0 0
        %2124 = vmatpush2.bf16.xpose.msra.mxu0 0
        %2125 = vmatprep.subr.bf16.mxu0 0
        %2126 = vmatpush2.bf16.xpose.msra.mxu0 0
        %2127 = vmatprep.subr.bf16.mxu0 0
        %2128 = vmatpush2.bf16.xpose.msra.mxu0 0
        %2129 = vmatprep.subr.bf16.mxu0 0
        %2130 = vmatpush2.bf16.xpose.msra.mxu0 0
        %2131 = vmatprep.mubr.bf16.mxu0 0
        %2132 = vmatmul.mubr.bf16.gmra.mxu0 %v2091
        %v2133 = vpop.f32.mrf.mxu0
        %v2134 = vadd.f32 0.0, %v2133
        %v2135 = vpop.f32.mrf.mxu0
        %v2136 = vpop.f32.mrf.mxu0
        %v2137 = vadd.f32 0.0, %v2136
        %v2138 = vpop.f32.mrf.mxu0
        %2139 = vdwg.mxu0
        %v2140 = vmul.f32 %v2134, 0.35355338
        %v2141 = vmul.f32 %v2137, 0.35355338
        %v2142 = vadd.f32 %v2140, %v1947
        %v2143 = vadd.f32 %v2141, %v1948
        %v2144 = vsel %vm993, %v2142, -inf
        %2145 = vmax.xlane.f32.xlu0 %v2144
        %v2146 = vpop.xlane.xlu0 %2145
        %v2147 = vsel %vm993, %v2143, -inf
        %2148 = vmax.xlane.f32.xlu0 %v2147
        %v2149 = vpop.xlane.xlu0 %2148
        %v2150 = vsub.f32 %v2142, %v2146
        %v2151 = vsub.f32 %v2143, %v2149
        %v2152 = vmul.f32 %v2150, 1.442695
        %v2153 = vpow.pop %v2152
        %v2154 = vmul.f32 %v2151, 1.442695
        %v2155 = vpow.pop %v2154
        %v2156 = vsel %vm993, %v2153, 0.0
        %2157 = vadd.xlane.f32.xlu0 %v2156
        %v2158 = vpop.xlane.xlu0 %2157
        %v2159 = vsel %vm993, %v2155, 0.0
        %2160 = vadd.xlane.f32.xlu0 %v2159
        %v2161 = vpop.xlane.xlu0 %2160
        %v2162 = vrcp.pop %v2158
        %v2163 = vrcp.pop %v2161
        %v2164 = vmul.f32 %v2153, %v2162
        %v2165 = vmul.f32 %v2155, %v2163
        %v2166 = vpack.c.bf16 %v2165, %v2164
        %2167 = vrot.lane.b32.xlu0 %v1945, 88
        %v2168 = vpop.permute.xlu0 %2167
        %2169 = vrot.lane.b32.xlu0 %v1946, 88
        %v2170 = vpop.permute.xlu0 %2169
        %v2174 = vsel %vm993, %v2166, 0
        %2176 = vmatprep.subr.bf16.mxu0 0
        %2177 = vmatpush1.bf16.msra.mxu0 0
        %2178 = vmatprep.subr.bf16.mxu0 0
        %2179 = vmatpush1.bf16.msra.mxu0 0
        %2180 = vmatprep.subr.bf16.mxu0 0
        %2181 = vmatpush1.bf16.msra.mxu0 0
        %2182 = vmatprep.subr.bf16.mxu0 0
        %2183 = vmatpush1.bf16.msra.mxu0 0
        %2184 = vmatprep.subr.bf16.mxu0 0
        %2185 = vmatpush1.bf16.msra.mxu0 0
        %2186 = vmatprep.subr.bf16.mxu0 0
        %2187 = vmatpush1.bf16.msra.mxu0 0
        %2188 = vmatprep.subr.bf16.mxu0 0
        %2189 = vmatpush1.bf16.msra.mxu0 %v2170
        %2190 = vmatprep.subr.bf16.mxu0 0
        %2191 = vmatpush1.bf16.msra.mxu0 %v2168
        %2192 = vmatprep.subr.bf16.mxu0 0
        %2193 = vmatpush2.bf16.msra.mxu0 0
        %2194 = vmatprep.subr.bf16.mxu0 0
        %2195 = vmatpush2.bf16.msra.mxu0 0
        %2196 = vmatprep.subr.bf16.mxu0 0
        %2197 = vmatpush2.bf16.msra.mxu0 0
        %2198 = vmatprep.subr.bf16.mxu0 0
        %2199 = vmatpush2.bf16.msra.mxu0 0
        %2200 = vmatprep.subr.bf16.mxu0 0
        %2201 = vmatpush2.bf16.msra.mxu0 0
        %2202 = vmatprep.subr.bf16.mxu0 0
        %2203 = vmatpush2.bf16.msra.mxu0 0
        %2204 = vmatprep.subr.bf16.mxu0 0
        %2205 = vmatpush2.bf16.msra.mxu0 0
        %2206 = vmatprep.subr.bf16.mxu0 0
        %2207 = vmatpush2.bf16.msra.mxu0 0
        %2208 = vmatprep.mubr.bf16.mxu0 0
        %2209 = vmatmul.mubr.bf16.gmra.mxu0 %v2174
        %v2210 = vpop.f32.mrf.mxu0
        %v2211 = vadd.f32 0.0, %v2210
        %v2212 = vpop.f32.mrf.mxu0
        %v2213 = vpop.f32.mrf.mxu0
        %v2214 = vadd.f32 0.0, %v2213
        %v2215 = vpop.f32.mrf.mxu0
        %2216 = vdwg.mxu0
        %v2217 = vpack.c.bf16 %v2214, %v2211
        %v2219 = vsel %vm1048, %v2217, 0
        %v2222 = vsel %vm1301, %v1950, 0
        %2224 = vmatprep.subr.bf16.mxu0 0
        %2225 = vmatpush1.bf16.msra.mxu0 0
        %2226 = vmatprep.subr.bf16.mxu0 0
        %2227 = vmatpush1.bf16.msra.mxu0 0
        %2228 = vmatprep.subr.bf16.mxu0 0
        %2229 = vmatpush1.bf16.msra.mxu0 0
        %2230 = vmatprep.subr.bf16.mxu0 0
        %2231 = vmatpush1.bf16.msra.mxu0 0
        %2232 = vmatprep.subr.bf16.mxu0 0
        %2233 = vmatpush1.bf16.msra.mxu0 0
        %2234 = vmatprep.subr.bf16.mxu0 0
        %2235 = vmatpush1.bf16.msra.mxu0 0
        %2236 = vmatprep.subr.bf16.mxu0 0
        %2237 = vmatpush1.bf16.msra.mxu0 0
        %2238 = vmatprep.subr.bf16.mxu0 0
        %2239 = vmatpush1.bf16.msra.mxu0 %v2222
        %2240 = vmatprep.subr.bf16.mxu0 0
        %2241 = vmatpush2.bf16.msra.mxu0 0
        %2242 = vmatprep.subr.bf16.mxu0 0
        %2243 = vmatpush2.bf16.msra.mxu0 0
        %2244 = vmatprep.subr.bf16.mxu0 0
        %2245 = vmatpush2.bf16.msra.mxu0 0
        %2246 = vmatprep.subr.bf16.mxu0 0
        %2247 = vmatpush2.bf16.msra.mxu0 0
        %2248 = vmatprep.subr.bf16.mxu0 0
        %2249 = vmatpush2.bf16.msra.mxu0 0
        %2250 = vmatprep.subr.bf16.mxu0 0
        %2251 = vmatpush2.bf16.msra.mxu0 0
        %2252 = vmatprep.subr.bf16.mxu0 0
        %2253 = vmatpush2.bf16.msra.mxu0 0
        %2254 = vmatprep.subr.bf16.mxu0 0
        %2255 = vmatpush2.bf16.msra.mxu0 0
        %2256 = vmatprep.mubr.bf16.mxu0 0
        %2257 = vmatmul.mubr.bf16.gmra.mxu0 %v2219
        %v2258 = vpop.f32.mrf.mxu0
        %v2259 = vadd.f32 0.0, %v2258
        %v2260 = vpop.f32.mrf.mxu0
        %v2261 = vpop.f32.mrf.mxu0
        %v2262 = vadd.f32 0.0, %v2261
        %v2263 = vpop.f32.mrf.mxu0
        %2264 = vdwg.mxu0
        %v2266 = vsel %vm1048, %v2082, 0
        %v2269 = vsel %vm1301, %v1949, 0
        %2271 = vmatprep.subr.bf16.mxu0 0
        %2272 = vmatpush1.bf16.msra.mxu0 0
        %2273 = vmatprep.subr.bf16.mxu0 0
        %2274 = vmatpush1.bf16.msra.mxu0 0
        %2275 = vmatprep.subr.bf16.mxu0 0
        %2276 = vmatpush1.bf16.msra.mxu0 0
        %2277 = vmatprep.subr.bf16.mxu0 0
        %2278 = vmatpush1.bf16.msra.mxu0 0
        %2279 = vmatprep.subr.bf16.mxu0 0
        %2280 = vmatpush1.bf16.msra.mxu0 0
        %2281 = vmatprep.subr.bf16.mxu0 0
        %2282 = vmatpush1.bf16.msra.mxu0 0
        %2283 = vmatprep.subr.bf16.mxu0 0
        %2284 = vmatpush1.bf16.msra.mxu0 0
        %2285 = vmatprep.subr.bf16.mxu0 0
        %2286 = vmatpush1.bf16.msra.mxu0 %v2269
        %2287 = vmatprep.subr.bf16.mxu0 0
        %2288 = vmatpush2.bf16.msra.mxu0 0
        %2289 = vmatprep.subr.bf16.mxu0 0
        %2290 = vmatpush2.bf16.msra.mxu0 0
        %2291 = vmatprep.subr.bf16.mxu0 0
        %2292 = vmatpush2.bf16.msra.mxu0 0
        %2293 = vmatprep.subr.bf16.mxu0 0
        %2294 = vmatpush2.bf16.msra.mxu0 0
        %2295 = vmatprep.subr.bf16.mxu0 0
        %2296 = vmatpush2.bf16.msra.mxu0 0
        %2297 = vmatprep.subr.bf16.mxu0 0
        %2298 = vmatpush2.bf16.msra.mxu0 0
        %2299 = vmatprep.subr.bf16.mxu0 0
        %2300 = vmatpush2.bf16.msra.mxu0 0
        %2301 = vmatprep.subr.bf16.mxu0 0
        %2302 = vmatpush2.bf16.msra.mxu0 0
        %2303 = vmatprep.mubr.bf16.mxu0 0
        %2304 = vmatmul.mubr.bf16.gmra.mxu0 %v2266
        %v2305 = vpop.f32.mrf.mxu0
        %v2306 = vadd.f32 %v2259, %v2305
        %v2307 = vpop.f32.mrf.mxu0
        %v2308 = vpop.f32.mrf.mxu0
        %v2309 = vadd.f32 %v2262, %v2308
        %v2310 = vpop.f32.mrf.mxu0
        %2311 = vdwg.mxu0
        %2312 = vrot.lane.b32.xlu0 %v1864, 112
        %v2313 = vpop.permute.xlu0 %2312
        %2314 = vrot.lane.b32.xlu0 %v1945, 112
        %v2315 = vpop.permute.xlu0 %2314
        %2316 = vrot.lane.b32.xlu0 %v1946, 112
        %v2317 = vpop.permute.xlu0 %2316
        %v2319 = vsel %vm1048, %v2313, 0
        %v2322 = vsel %vm1048, %v2315, 0
        %v2325 = vsel %vm1048, %v2317, 0
        %2327 = vmatprep.subr.bf16.mxu0 0
        %2328 = vmatpush1.bf16.xpose.msra.mxu0 0
        %2329 = vmatprep.subr.bf16.mxu0 0
        %2330 = vmatpush1.bf16.xpose.msra.mxu0 0
        %2331 = vmatprep.subr.bf16.mxu0 0
        %2332 = vmatpush1.bf16.xpose.msra.mxu0 0
        %2333 = vmatprep.subr.bf16.mxu0 0
        %2334 = vmatpush1.bf16.xpose.msra.mxu0 0
        %2335 = vmatprep.subr.bf16.mxu0 0
        %2336 = vmatpush1.bf16.xpose.msra.mxu0 0
        %2337 = vmatprep.subr.bf16.mxu0 0
        %2338 = vmatpush1.bf16.xpose.msra.mxu0 0
        %2339 = vmatprep.subr.bf16.mxu0 0
        %2340 = vmatpush1.bf16.xpose.msra.mxu0 %v2325
        %2341 = vmatprep.subr.bf16.mxu0 0
        %2342 = vmatpush1.bf16.xpose.msra.mxu0 %v2322
        %2343 = vmatprep.subr.bf16.mxu0 0
        %2344 = vmatpush2.bf16.xpose.msra.mxu0 0
        %2345 = vmatprep.subr.bf16.mxu0 0
        %2346 = vmatpush2.bf16.xpose.msra.mxu0 0
        %2347 = vmatprep.subr.bf16.mxu0 0
        %2348 = vmatpush2.bf16.xpose.msra.mxu0 0
        %2349 = vmatprep.subr.bf16.mxu0 0
        %2350 = vmatpush2.bf16.xpose.msra.mxu0 0
        %2351 = vmatprep.subr.bf16.mxu0 0
        %2352 = vmatpush2.bf16.xpose.msra.mxu0 0
        %2353 = vmatprep.subr.bf16.mxu0 0
        %2354 = vmatpush2.bf16.xpose.msra.mxu0 0
        %2355 = vmatprep.subr.bf16.mxu0 0
        %2356 = vmatpush2.bf16.xpose.msra.mxu0 0
        %2357 = vmatprep.subr.bf16.mxu0 0
        %2358 = vmatpush2.bf16.xpose.msra.mxu0 0
        %2359 = vmatprep.mubr.bf16.mxu0 0
        %2360 = vmatmul.mubr.bf16.gmra.mxu0 %v2319
        %v2361 = vpop.f32.mrf.mxu0
        %v2362 = vadd.f32 0.0, %v2361
        %v2363 = vpop.f32.mrf.mxu0
        %v2364 = vpop.f32.mrf.mxu0
        %v2365 = vadd.f32 0.0, %v2364
        %v2366 = vpop.f32.mrf.mxu0
        %2367 = vdwg.mxu0
        %v2368 = vmul.f32 %v2362, 0.35355338
        %v2369 = vmul.f32 %v2365, 0.35355338
        %v2370 = vadd.f32 %v2368, %v1947
        %v2371 = vadd.f32 %v2369, %v1948
        %v2372 = vsel %vm993, %v2370, -inf
        %2373 = vmax.xlane.f32.xlu0 %v2372
        %v2374 = vpop.xlane.xlu0 %2373
        %v2375 = vsel %vm993, %v2371, -inf
        %2376 = vmax.xlane.f32.xlu0 %v2375
        %v2377 = vpop.xlane.xlu0 %2376
        %v2378 = vsub.f32 %v2370, %v2374
        %v2379 = vsub.f32 %v2371, %v2377
        %v2380 = vmul.f32 %v2378, 1.442695
        %v2381 = vpow.pop %v2380
        %v2382 = vmul.f32 %v2379, 1.442695
        %v2383 = vpow.pop %v2382
        %v2384 = vsel %vm993, %v2381, 0.0
        %2385 = vadd.xlane.f32.xlu0 %v2384
        %v2386 = vpop.xlane.xlu0 %2385
        %v2387 = vsel %vm993, %v2383, 0.0
        %2388 = vadd.xlane.f32.xlu0 %v2387
        %v2389 = vpop.xlane.xlu0 %2388
        %v2390 = vrcp.pop %v2386
        %v2391 = vrcp.pop %v2389
        %v2392 = vmul.f32 %v2381, %v2390
        %v2393 = vmul.f32 %v2383, %v2391
        %v2394 = vpack.c.bf16 %v2393, %v2392
        %2395 = vrot.lane.b32.xlu0 %v1945, 80
        %v2396 = vpop.permute.xlu0 %2395
        %2397 = vrot.lane.b32.xlu0 %v1946, 80
        %v2398 = vpop.permute.xlu0 %2397
        %v2402 = vsel %vm993, %v2394, 0
        %2404 = vmatprep.subr.bf16.mxu0 0
        %2405 = vmatpush1.bf16.msra.mxu0 0
        %2406 = vmatprep.subr.bf16.mxu0 0
        %2407 = vmatpush1.bf16.msra.mxu0 0
        %2408 = vmatprep.subr.bf16.mxu0 0
        %2409 = vmatpush1.bf16.msra.mxu0 0
        %2410 = vmatprep.subr.bf16.mxu0 0
        %2411 = vmatpush1.bf16.msra.mxu0 0
        %2412 = vmatprep.subr.bf16.mxu0 0
        %2413 = vmatpush1.bf16.msra.mxu0 0
        %2414 = vmatprep.subr.bf16.mxu0 0
        %2415 = vmatpush1.bf16.msra.mxu0 0
        %2416 = vmatprep.subr.bf16.mxu0 0
        %2417 = vmatpush1.bf16.msra.mxu0 %v2398
        %2418 = vmatprep.subr.bf16.mxu0 0
        %2419 = vmatpush1.bf16.msra.mxu0 %v2396
        %2420 = vmatprep.subr.bf16.mxu0 0
        %2421 = vmatpush2.bf16.msra.mxu0 0
        %2422 = vmatprep.subr.bf16.mxu0 0
        %2423 = vmatpush2.bf16.msra.mxu0 0
        %2424 = vmatprep.subr.bf16.mxu0 0
        %2425 = vmatpush2.bf16.msra.mxu0 0
        %2426 = vmatprep.subr.bf16.mxu0 0
        %2427 = vmatpush2.bf16.msra.mxu0 0
        %2428 = vmatprep.subr.bf16.mxu0 0
        %2429 = vmatpush2.bf16.msra.mxu0 0
        %2430 = vmatprep.subr.bf16.mxu0 0
        %2431 = vmatpush2.bf16.msra.mxu0 0
        %2432 = vmatprep.subr.bf16.mxu0 0
        %2433 = vmatpush2.bf16.msra.mxu0 0
        %2434 = vmatprep.subr.bf16.mxu0 0
        %2435 = vmatpush2.bf16.msra.mxu0 0
        %2436 = vmatprep.mubr.bf16.mxu0 0
        %2437 = vmatmul.mubr.bf16.gmra.mxu0 %v2402
        %v2438 = vpop.f32.mrf.mxu0
        %v2439 = vadd.f32 0.0, %v2438
        %v2440 = vpop.f32.mrf.mxu0
        %v2441 = vpop.f32.mrf.mxu0
        %v2442 = vadd.f32 0.0, %v2441
        %v2443 = vpop.f32.mrf.mxu0
        %2444 = vdwg.mxu0
        %v2445 = vpack.c.bf16 %v2442, %v2439
        %v2447 = vsel %vm1048, %v2445, 0
        %v2450 = vsel %vm1301, %v1951, 0
        %2452 = vmatprep.subr.bf16.mxu0 0
        %2453 = vmatpush1.bf16.msra.mxu0 0
        %2454 = vmatprep.subr.bf16.mxu0 0
        %2455 = vmatpush1.bf16.msra.mxu0 0
        %2456 = vmatprep.subr.bf16.mxu0 0
        %2457 = vmatpush1.bf16.msra.mxu0 0
        %2458 = vmatprep.subr.bf16.mxu0 0
        %2459 = vmatpush1.bf16.msra.mxu0 0
        %2460 = vmatprep.subr.bf16.mxu0 0
        %2461 = vmatpush1.bf16.msra.mxu0 0
        %2462 = vmatprep.subr.bf16.mxu0 0
        %2463 = vmatpush1.bf16.msra.mxu0 0
        %2464 = vmatprep.subr.bf16.mxu0 0
        %2465 = vmatpush1.bf16.msra.mxu0 0
        %2466 = vmatprep.subr.bf16.mxu0 0
        %2467 = vmatpush1.bf16.msra.mxu0 %v2450
        %2468 = vmatprep.subr.bf16.mxu0 0
        %2469 = vmatpush2.bf16.msra.mxu0 0
        %2470 = vmatprep.subr.bf16.mxu0 0
        %2471 = vmatpush2.bf16.msra.mxu0 0
        %2472 = vmatprep.subr.bf16.mxu0 0
        %2473 = vmatpush2.bf16.msra.mxu0 0
        %2474 = vmatprep.subr.bf16.mxu0 0
        %2475 = vmatpush2.bf16.msra.mxu0 0
        %2476 = vmatprep.subr.bf16.mxu0 0
        %2477 = vmatpush2.bf16.msra.mxu0 0
        %2478 = vmatprep.subr.bf16.mxu0 0
        %2479 = vmatpush2.bf16.msra.mxu0 0
        %2480 = vmatprep.subr.bf16.mxu0 0
        %2481 = vmatpush2.bf16.msra.mxu0 0
        %2482 = vmatprep.subr.bf16.mxu0 0
        %2483 = vmatpush2.bf16.msra.mxu0 0
        %2484 = vmatprep.mubr.bf16.mxu0 0
        %2485 = vmatmul.mubr.bf16.gmra.mxu0 %v2447
        %v2486 = vpop.f32.mrf.mxu0
        %v2487 = vadd.f32 0.0, %v2486
        %v2488 = vpop.f32.mrf.mxu0
        %v2489 = vpop.f32.mrf.mxu0
        %v2490 = vadd.f32 0.0, %v2489
        %v2491 = vpop.f32.mrf.mxu0
        %2492 = vdwg.mxu0
        %v2493 = vadd.f32 %v2306, %v2487
        %v2494 = vadd.f32 %v2309, %v2490
        %2495 = vrot.lane.b32.xlu0 %v1864, 104
        %v2496 = vpop.permute.xlu0 %2495
        %2497 = vrot.lane.b32.xlu0 %v1945, 104
        %v2498 = vpop.permute.xlu0 %2497
        %2499 = vrot.lane.b32.xlu0 %v1946, 104
        %v2500 = vpop.permute.xlu0 %2499
        %v2502 = vsel %vm1048, %v2496, 0
        %v2505 = vsel %vm1048, %v2498, 0
        %v2508 = vsel %vm1048, %v2500, 0
        %2510 = vmatprep.subr.bf16.mxu0 0
        %2511 = vmatpush1.bf16.xpose.msra.mxu0 0
        %2512 = vmatprep.subr.bf16.mxu0 0
        %2513 = vmatpush1.bf16.xpose.msra.mxu0 0
        %2514 = vmatprep.subr.bf16.mxu0 0
        %2515 = vmatpush1.bf16.xpose.msra.mxu0 0
        %2516 = vmatprep.subr.bf16.mxu0 0
        %2517 = vmatpush1.bf16.xpose.msra.mxu0 0
        %2518 = vmatprep.subr.bf16.mxu0 0
        %2519 = vmatpush1.bf16.xpose.msra.mxu0 0
        %2520 = vmatprep.subr.bf16.mxu0 0
        %2521 = vmatpush1.bf16.xpose.msra.mxu0 0
        %2522 = vmatprep.subr.bf16.mxu0 0
        %2523 = vmatpush1.bf16.xpose.msra.mxu0 %v2508
        %2524 = vmatprep.subr.bf16.mxu0 0
        %2525 = vmatpush1.bf16.xpose.msra.mxu0 %v2505
        %2526 = vmatprep.subr.bf16.mxu0 0
        %2527 = vmatpush2.bf16.xpose.msra.mxu0 0
        %2528 = vmatprep.subr.bf16.mxu0 0
        %2529 = vmatpush2.bf16.xpose.msra.mxu0 0
        %2530 = vmatprep.subr.bf16.mxu0 0
        %2531 = vmatpush2.bf16.xpose.msra.mxu0 0
        %2532 = vmatprep.subr.bf16.mxu0 0
        %2533 = vmatpush2.bf16.xpose.msra.mxu0 0
        %2534 = vmatprep.subr.bf16.mxu0 0
        %2535 = vmatpush2.bf16.xpose.msra.mxu0 0
        %2536 = vmatprep.subr.bf16.mxu0 0
        %2537 = vmatpush2.bf16.xpose.msra.mxu0 0
        %2538 = vmatprep.subr.bf16.mxu0 0
        %2539 = vmatpush2.bf16.xpose.msra.mxu0 0
        %2540 = vmatprep.subr.bf16.mxu0 0
        %2541 = vmatpush2.bf16.xpose.msra.mxu0 0
        %2542 = vmatprep.mubr.bf16.mxu0 0
        %2543 = vmatmul.mubr.bf16.gmra.mxu0 %v2502
        %v2544 = vpop.f32.mrf.mxu0
        %v2545 = vadd.f32 0.0, %v2544
        %v2546 = vpop.f32.mrf.mxu0
        %v2547 = vpop.f32.mrf.mxu0
        %v2548 = vadd.f32 0.0, %v2547
        %v2549 = vpop.f32.mrf.mxu0
        %2550 = vdwg.mxu0
        %v2551 = vmul.f32 %v2545, 0.35355338
        %v2552 = vmul.f32 %v2548, 0.35355338
        %v2553 = vadd.f32 %v2551, %v1947
        %v2554 = vadd.f32 %v2552, %v1948
        %v2555 = vsel %vm993, %v2553, -inf
        %2556 = vmax.xlane.f32.xlu0 %v2555
        %v2557 = vpop.xlane.xlu0 %2556
        %v2558 = vsel %vm993, %v2554, -inf
        %2559 = vmax.xlane.f32.xlu0 %v2558
        %v2560 = vpop.xlane.xlu0 %2559
        %v2561 = vsub.f32 %v2553, %v2557
        %v2562 = vsub.f32 %v2554, %v2560
        %v2563 = vmul.f32 %v2561, 1.442695
        %v2564 = vpow.pop %v2563
        %v2565 = vmul.f32 %v2562, 1.442695
        %v2566 = vpow.pop %v2565
        %v2567 = vsel %vm993, %v2564, 0.0
        %2568 = vadd.xlane.f32.xlu0 %v2567
        %v2569 = vpop.xlane.xlu0 %2568
        %v2570 = vsel %vm993, %v2566, 0.0
        %2571 = vadd.xlane.f32.xlu0 %v2570
        %v2572 = vpop.xlane.xlu0 %2571
        %v2573 = vrcp.pop %v2569
        %v2574 = vrcp.pop %v2572
        %v2575 = vmul.f32 %v2564, %v2573
        %v2576 = vmul.f32 %v2566, %v2574
        %v2577 = vpack.c.bf16 %v2576, %v2575
        %2578 = vrot.lane.b32.xlu0 %v1945, 72
        %v2579 = vpop.permute.xlu0 %2578
        %2580 = vrot.lane.b32.xlu0 %v1946, 72
        %v2581 = vpop.permute.xlu0 %2580
        %v2585 = vsel %vm993, %v2577, 0
        %2587 = vmatprep.subr.bf16.mxu0 0
        %2588 = vmatpush1.bf16.msra.mxu0 0
        %2589 = vmatprep.subr.bf16.mxu0 0
        %2590 = vmatpush1.bf16.msra.mxu0 0
        %2591 = vmatprep.subr.bf16.mxu0 0
        %2592 = vmatpush1.bf16.msra.mxu0 0
        %2593 = vmatprep.subr.bf16.mxu0 0
        %2594 = vmatpush1.bf16.msra.mxu0 0
        %2595 = vmatprep.subr.bf16.mxu0 0
        %2596 = vmatpush1.bf16.msra.mxu0 0
        %2597 = vmatprep.subr.bf16.mxu0 0
        %2598 = vmatpush1.bf16.msra.mxu0 0
        %2599 = vmatprep.subr.bf16.mxu0 0
        %2600 = vmatpush1.bf16.msra.mxu0 %v2581
        %2601 = vmatprep.subr.bf16.mxu0 0
        %2602 = vmatpush1.bf16.msra.mxu0 %v2579
        %2603 = vmatprep.subr.bf16.mxu0 0
        %2604 = vmatpush2.bf16.msra.mxu0 0
        %2605 = vmatprep.subr.bf16.mxu0 0
        %2606 = vmatpush2.bf16.msra.mxu0 0
        %2607 = vmatprep.subr.bf16.mxu0 0
        %2608 = vmatpush2.bf16.msra.mxu0 0
        %2609 = vmatprep.subr.bf16.mxu0 0
        %2610 = vmatpush2.bf16.msra.mxu0 0
        %2611 = vmatprep.subr.bf16.mxu0 0
        %2612 = vmatpush2.bf16.msra.mxu0 0
        %2613 = vmatprep.subr.bf16.mxu0 0
        %2614 = vmatpush2.bf16.msra.mxu0 0
        %2615 = vmatprep.subr.bf16.mxu0 0
        %2616 = vmatpush2.bf16.msra.mxu0 0
        %2617 = vmatprep.subr.bf16.mxu0 0
        %2618 = vmatpush2.bf16.msra.mxu0 0
        %2619 = vmatprep.mubr.bf16.mxu0 0
        %2620 = vmatmul.mubr.bf16.gmra.mxu0 %v2585
        %v2621 = vpop.f32.mrf.mxu0
        %v2622 = vadd.f32 0.0, %v2621
        %v2623 = vpop.f32.mrf.mxu0
        %v2624 = vpop.f32.mrf.mxu0
        %v2625 = vadd.f32 0.0, %v2624
        %v2626 = vpop.f32.mrf.mxu0
        %2627 = vdwg.mxu0
        %v2628 = vpack.c.bf16 %v2625, %v2622
        %v2630 = vsel %vm1048, %v2628, 0
        %v2633 = vsel %vm1301, %v1952, 0
        %2635 = vmatprep.subr.bf16.mxu0 0
        %2636 = vmatpush1.bf16.msra.mxu0 0
        %2637 = vmatprep.subr.bf16.mxu0 0
        %2638 = vmatpush1.bf16.msra.mxu0 0
        %2639 = vmatprep.subr.bf16.mxu0 0
        %2640 = vmatpush1.bf16.msra.mxu0 0
        %2641 = vmatprep.subr.bf16.mxu0 0
        %2642 = vmatpush1.bf16.msra.mxu0 0
        %2643 = vmatprep.subr.bf16.mxu0 0
        %2644 = vmatpush1.bf16.msra.mxu0 0
        %2645 = vmatprep.subr.bf16.mxu0 0
        %2646 = vmatpush1.bf16.msra.mxu0 0
        %2647 = vmatprep.subr.bf16.mxu0 0
        %2648 = vmatpush1.bf16.msra.mxu0 0
        %2649 = vmatprep.subr.bf16.mxu0 0
        %2650 = vmatpush1.bf16.msra.mxu0 %v2633
        %2651 = vmatprep.subr.bf16.mxu0 0
        %2652 = vmatpush2.bf16.msra.mxu0 0
        %2653 = vmatprep.subr.bf16.mxu0 0
        %2654 = vmatpush2.bf16.msra.mxu0 0
        %2655 = vmatprep.subr.bf16.mxu0 0
        %2656 = vmatpush2.bf16.msra.mxu0 0
        %2657 = vmatprep.subr.bf16.mxu0 0
        %2658 = vmatpush2.bf16.msra.mxu0 0
        %2659 = vmatprep.subr.bf16.mxu0 0
        %2660 = vmatpush2.bf16.msra.mxu0 0
        %2661 = vmatprep.subr.bf16.mxu0 0
        %2662 = vmatpush2.bf16.msra.mxu0 0
        %2663 = vmatprep.subr.bf16.mxu0 0
        %2664 = vmatpush2.bf16.msra.mxu0 0
        %2665 = vmatprep.subr.bf16.mxu0 0
        %2666 = vmatpush2.bf16.msra.mxu0 0
        %2667 = vmatprep.mubr.bf16.mxu0 0
        %2668 = vmatmul.mubr.bf16.gmra.mxu0 %v2630
        %v2669 = vpop.f32.mrf.mxu0
        %v2670 = vadd.f32 0.0, %v2669
        %v2671 = vpop.f32.mrf.mxu0
        %v2672 = vpop.f32.mrf.mxu0
        %v2673 = vadd.f32 0.0, %v2672
        %v2674 = vpop.f32.mrf.mxu0
        %2675 = vdwg.mxu0
        %v2676 = vadd.f32 %v2493, %v2670
        %v2677 = vadd.f32 %v2494, %v2673
        %v2678 = vld [vmem:[%s930] sm:$0x1]
        %v2680 = vlaneseq
        %v2681 = vshrl.u32 %v2680, 7
        %v2682 = vsub.s32 0, %v2681
        %v2683 = vrot.slane %v2678, %v2682
        %v2685 = vadd.f32 %v2676, %v2683
        %v2686 = vadd.f32 %v2677, %v2683
        %v2687 = vadd.f32 %v1794, %v2685
        %v2688 = vadd.f32 %v1795, %v2686
        %v2689 = vsel %vm993, %v2687, 0.0
        %2690 = vadd.xlane.f32.xlu0 %v2689
        %v2691 = vpop.xlane.xlu0 %2690
        %v2692 = vsel %vm993, %v2688, 0.0
        %2693 = vadd.xlane.f32.xlu0 %v2692
        %v2694 = vpop.xlane.xlu0 %2693
        %v2695 = vmul.f32 %v2687, %v2687
        %v2696 = vmul.f32 %v2688, %v2688
        %v2697 = vsel %vm993, %v2695, 0.0
        %2698 = vadd.xlane.f32.xlu0 %v2697
        %v2699 = vpop.xlane.xlu0 %2698
        %v2700 = vsel %vm993, %v2696, 0.0
        %2701 = vadd.xlane.f32.xlu0 %v2700
        %v2702 = vpop.xlane.xlu0 %2701
        %v2703 = vmul.f32 %v2691, 0.03125
        %v2704 = vmul.f32 %v2694, 0.03125
        %v2705 = vmul.f32 %v2699, 0.03125
        %v2706 = vmul.f32 %v2702, 0.03125
        %v2707 = vmul.f32 %v2703, %v2703
        %v2708 = vmul.f32 %v2704, %v2704
        %v2709 = vsub.f32 %v2705, %v2707
        %v2710 = vsub.f32 %v2706, %v2708
        %v2711 = vsub.f32 %v2687, %v2703
        %v2712 = vsub.f32 %v2688, %v2704
        %v2713 = vadd.f32 %v2709, 1e-05
        %v2714 = vadd.f32 %v2710, 1e-05
        %v2715 = vrsqrt.pop %v2713
        %v2716 = vrsqrt.pop %v2714
        %v2717 = vmul.f32 %v2711, %v2715
        %v2718 = vmul.f32 %v2712, %v2716
        %v2719 = vlaneseq
        %v2720 = vshrl.u32 %v2719, 7
        %v2721 = vsub.s32 2, %v2720
        %v2722 = vrot.slane %v968, %v2721
        %v2723 = vmul.f32 %v2717, %v2722
        %v2724 = vmul.f32 %v2718, %v2722
        %v2725 = vlaneseq
        %v2726 = vshrl.u32 %v2725, 7
        %v2727 = vsub.s32 3, %v2726
        %v2728 = vrot.slane %v968, %v2727
        %v2729 = vadd.f32 %v2723, %v2728
        %v2730 = vadd.f32 %v2724, %v2728
        %v2731 = vld [vmem:[%s935] sm:$0xf]
        %v2732 = vld [vmem:[%s935 + $0x4] sm:$0xf]
        %v2733 = vld [vmem:[%s935 + $0x8] sm:$0xf]
        %v2734 = vld [vmem:[%s935 + $0xc] sm:$0xf]
        %v2735 = vpack.c.bf16 %v2730, %v2729
        %v2736 = vld [vmem:[%s938] sm:$0x1]
        %v2738 = vlaneseq
        %v2739 = vshrl.u32 %v2738, 7
        %v2740 = vsub.s32 0, %v2739
        %v2741 = vrot.slane %v2736, %v2740
        %v2747 = vunpack.c.l.b16 %v2731
        %v2748 = vunpack.c.l.b16 %v2732
        %v2749 = vunpack.c.l.b16 %v2733
        %v2750 = vunpack.c.l.b16 %v2734
        %v2751 = vpack.c.b16 %v2748, %v2747
        %v2752 = vpack.c.b16 %v2750, %v2749
        %v2756 = vsel %vm993, %v2735, 0
        %2758 = vmatprep.subr.bf16.mxu0 0
        %2759 = vmatpush1.bf16.msra.mxu0 0
        %2760 = vmatprep.subr.bf16.mxu0 0
        %2761 = vmatpush1.bf16.msra.mxu0 0
        %2762 = vmatprep.subr.bf16.mxu0 0
        %2763 = vmatpush1.bf16.msra.mxu0 0
        %2764 = vmatprep.subr.bf16.mxu0 0
        %2765 = vmatpush1.bf16.msra.mxu0 0
        %2766 = vmatprep.subr.bf16.mxu0 0
        %2767 = vmatpush1.bf16.msra.mxu0 0
        %2768 = vmatprep.subr.bf16.mxu0 0
        %2769 = vmatpush1.bf16.msra.mxu0 0
        %2770 = vmatprep.subr.bf16.mxu0 0
        %2771 = vmatpush1.bf16.msra.mxu0 %v2752
        %2772 = vmatprep.subr.bf16.mxu0 0
        %2773 = vmatpush1.bf16.msra.mxu0 %v2751
        %2774 = vmatprep.subr.bf16.mxu0 0
        %2775 = vmatpush2.bf16.msra.mxu0 0
        %2776 = vmatprep.subr.bf16.mxu0 0
        %2777 = vmatpush2.bf16.msra.mxu0 0
        %2778 = vmatprep.subr.bf16.mxu0 0
        %2779 = vmatpush2.bf16.msra.mxu0 0
        %2780 = vmatprep.subr.bf16.mxu0 0
        %2781 = vmatpush2.bf16.msra.mxu0 0
        %2782 = vmatprep.subr.bf16.mxu0 0
        %2783 = vmatpush2.bf16.msra.mxu0 0
        %2784 = vmatprep.subr.bf16.mxu0 0
        %2785 = vmatpush2.bf16.msra.mxu0 0
        %2786 = vmatprep.subr.bf16.mxu0 0
        %2787 = vmatpush2.bf16.msra.mxu0 0
        %2788 = vmatprep.subr.bf16.mxu0 0
        %2789 = vmatpush2.bf16.msra.mxu0 0
        %2790 = vmatprep.mubr.bf16.mxu0 0
        %2791 = vmatmul.mubr.bf16.gmra.mxu0 %v2756
        %v2792 = vpop.f32.mrf.mxu0
        %v2793 = vadd.f32 %v2741, %v2792
        %v2794 = vpop.f32.mrf.mxu0
        %v2795 = vpop.f32.mrf.mxu0
        %v2796 = vadd.f32 %v2741, %v2795
        %v2797 = vpop.f32.mrf.mxu0
        %2798 = vdwg.mxu0
        %v2799 = vmax.f32 %v2793, 0.0
        %v2800 = vmax.f32 %v2796, 0.0
        %v2801 = vld [vmem:[%s943] sm:$0xf]
        %v2802 = vld [vmem:[%s943 + $0x4] sm:$0xf]
        %v2803 = vld [vmem:[%s943 + $0x8] sm:$0xf]
        %v2804 = vld [vmem:[%s943 + $0xc] sm:$0xf]
        %v2805 = vld [vmem:[%s943 + $0x10] sm:$0xf]
        %v2806 = vld [vmem:[%s943 + $0x14] sm:$0xf]
        %v2807 = vld [vmem:[%s943 + $0x18] sm:$0xf]
        %v2808 = vld [vmem:[%s943 + $0x1c] sm:$0xf]
        %v2809 = vpack.c.bf16 %v2800, %v2799
        %v2810 = vld [vmem:[%s946] sm:$0x1]
        %v2812 = vlaneseq
        %v2813 = vshrl.u32 %v2812, 7
        %v2814 = vsub.s32 0, %v2813
        %v2815 = vrot.slane %v2810, %v2814
        %v2825 = vunpack.c.l.b16 %v2801
        %v2826 = vunpack.c.l.b16 %v2802
        %v2827 = vunpack.c.l.b16 %v2803
        %v2828 = vunpack.c.l.b16 %v2804
        %v2829 = vunpack.c.l.b16 %v2805
        %v2830 = vunpack.c.l.b16 %v2806
        %v2831 = vunpack.c.l.b16 %v2807
        %v2832 = vunpack.c.l.b16 %v2808
        %v2833 = vpack.c.b16 %v2826, %v2825
        %v2834 = vpack.c.b16 %v2828, %v2827
        %v2835 = vpack.c.b16 %v2830, %v2829
        %v2836 = vpack.c.b16 %v2832, %v2831
        %vm2841 = vcmask 523264
        %v2843 = vsel %vm2841, %v2809, 0
        %2845 = vmatprep.subr.bf16.mxu0 0
        %2846 = vmatpush1.bf16.msra.mxu0 0
        %2847 = vmatprep.subr.bf16.mxu0 0
        %2848 = vmatpush1.bf16.msra.mxu0 0
        %2849 = vmatprep.subr.bf16.mxu0 0
        %2850 = vmatpush1.bf16.msra.mxu0 0
        %2851 = vmatprep.subr.bf16.mxu0 0
        %2852 = vmatpush1.bf16.msra.mxu0 0
        %2853 = vmatprep.subr.bf16.mxu0 0
        %2854 = vmatpush1.bf16.msra.mxu0 %v2836
        %2855 = vmatprep.subr.bf16.mxu0 0
        %2856 = vmatpush1.bf16.msra.mxu0 %v2835
        %2857 = vmatprep.subr.bf16.mxu0 0
        %2858 = vmatpush1.bf16.msra.mxu0 %v2834
        %2859 = vmatprep.subr.bf16.mxu0 0
        %2860 = vmatpush1.bf16.msra.mxu0 %v2833
        %2861 = vmatprep.subr.bf16.mxu0 0
        %2862 = vmatpush2.bf16.msra.mxu0 0
        %2863 = vmatprep.subr.bf16.mxu0 0
        %2864 = vmatpush2.bf16.msra.mxu0 0
        %2865 = vmatprep.subr.bf16.mxu0 0
        %2866 = vmatpush2.bf16.msra.mxu0 0
        %2867 = vmatprep.subr.bf16.mxu0 0
        %2868 = vmatpush2.bf16.msra.mxu0 0
        %2869 = vmatprep.subr.bf16.mxu0 0
        %2870 = vmatpush2.bf16.msra.mxu0 0
        %2871 = vmatprep.subr.bf16.mxu0 0
        %2872 = vmatpush2.bf16.msra.mxu0 0
        %2873 = vmatprep.subr.bf16.mxu0 0
        %2874 = vmatpush2.bf16.msra.mxu0 0
        %2875 = vmatprep.subr.bf16.mxu0 0
        %2876 = vmatpush2.bf16.msra.mxu0 0
        %2877 = vmatprep.mubr.bf16.mxu0 0
        %2878 = vmatmul.mubr.bf16.gmra.mxu0 %v2843
        %v2879 = vpop.f32.mrf.mxu0
        %v2880 = vadd.f32 %v2815, %v2879
        %v2881 = vpop.f32.mrf.mxu0
        %v2882 = vpop.f32.mrf.mxu0
        %v2883 = vadd.f32 %v2815, %v2882
        %v2884 = vpop.f32.mrf.mxu0
        %2885 = vdwg.mxu0
        %v2886 = vadd.f32 %v2729, %v2880
        %v2887 = vadd.f32 %v2730, %v2883
        %v2888 = vsel %vm993, %v2886, 0.0
        %2889 = vadd.xlane.f32.xlu0 %v2888
        %v2890 = vpop.xlane.xlu0 %2889
        %v2891 = vsel %vm993, %v2887, 0.0
        %2892 = vadd.xlane.f32.xlu0 %v2891
        %v2893 = vpop.xlane.xlu0 %2892
        %v2894 = vmul.f32 %v2886, %v2886
        %v2895 = vmul.f32 %v2887, %v2887
        %v2896 = vsel %vm993, %v2894, 0.0
        %2897 = vadd.xlane.f32.xlu0 %v2896
        %v2898 = vpop.xlane.xlu0 %2897
        %v2899 = vsel %vm993, %v2895, 0.0
        %2900 = vadd.xlane.f32.xlu0 %v2899
        %v2901 = vpop.xlane.xlu0 %2900
        %v2902 = vmul.f32 %v2890, 0.03125
        %v2903 = vmul.f32 %v2893, 0.03125
        %v2904 = vmul.f32 %v2898, 0.03125
        %v2905 = vmul.f32 %v2901, 0.03125
        %v2906 = vmul.f32 %v2902, %v2902
        %v2907 = vmul.f32 %v2903, %v2903
        %v2908 = vsub.f32 %v2904, %v2906
        %v2909 = vsub.f32 %v2905, %v2907
        %v2910 = vsub.f32 %v2886, %v2902
        %v2911 = vsub.f32 %v2887, %v2903
        %v2912 = vadd.f32 %v2908, 1e-05
        %v2913 = vadd.f32 %v2909, 1e-05
        %v2914 = vrsqrt.pop %v2912
        %v2915 = vrsqrt.pop %v2913
        %v2916 = vmul.f32 %v2910, %v2914
        %v2917 = vmul.f32 %v2911, %v2915
        %v2918 = vlaneseq
        %v2919 = vshrl.u32 %v2918, 7
        %v2920 = vsub.s32 4, %v2919
        %v2921 = vrot.slane %v968, %v2920
        %v2922 = vmul.f32 %v2916, %v2921
        %v2923 = vmul.f32 %v2917, %v2921
        %v2924 = vlaneseq
        %v2925 = vshrl.u32 %v2924, 7
        %v2926 = vsub.s32 5, %v2925
        %v2927 = vrot.slane %v968, %v2926
        %v2928 = vadd.f32 %v2922, %v2927
        %v2929 = vadd.f32 %v2923, %v2927
        %2930 = vst.msk [vmem:[#allocation2] sm:$0xff] %vm993, %v2928
        %2931 = vst.msk [vmem:[#allocation2 + $0x8] sm:$0xff] %vm993, %v2929
        %p2932 = scmp.eq.s32.totalorder %s36, 1
        // Predicated region
        $region101: #{decoder_forward_pallas.1} parent=95 // pred_check
          %p2933 = pneg %p2932
        $region102: #{decoder_forward_pallas.1} parent=95 // pred_check_branch
          %2935 = sbr.rel (%p2933) target = $region104
        $region103: #{decoder_forward_pallas.1} parent=95 // pred_region
          %2936 = vst.msk [vmem:[#allocation3] sm:$0xff] %vm993, %v2928
          %2937 = vst.msk [vmem:[#allocation3 + $0x8] sm:$0xff] %vm993, %v2929
        $region104: #{decoder_forward_pallas.1} parent=95 // pred_fallthru
          _
        // Predicated region
        $region105: #{decoder_forward_pallas.1} parent=95 // pred_check
          %p2938 = pneg %p559
        $region106: #{decoder_forward_pallas.1} parent=95 // pred_check_branch
          %2940 = sbr.rel (%p2938) target = $region108
        $region107: #{decoder_forward_pallas.1} parent=95 // pred_region
          %s2941 = smul.u32 2, %s35
          %s2943 = ssub.s32 256, 256
          %2944 = vsyncadd [#allocation4], %s2943
          %s2945 = smul.addr %s2941, 128
          %s2946 = scalar_lea.hbm %s19, %s2945
          %s2947 = sshll.u32 [#allocation3], 4
          %s2948 = int_to_ptr.vmem [resolvable:$true] %s2947
          %2953 = dma.vmem_to_hbm [thread:$0]  %s2948, 256, %s2946, [#allocation4], 128, 128, 8
        $region108: #{decoder_forward_pallas.1} parent=95 // pred_fallthru
          _
        // Predicated region
        $region109: #{decoder_forward_pallas.1} parent=95 // pred_check
          %p2954 = pneg %p559
        $region110: #{decoder_forward_pallas.1} parent=95 // pred_check_branch
          %2956 = sbr.rel (%p2954) target = $region112
        $region111: #{decoder_forward_pallas.1} parent=95 // pred_region
          %2957 = dma.done [#allocation4], 256
        $region112: #{decoder_forward_pallas.1} parent=95 // pred_fallthru
          _
      $region96: #{decoder_forward_pallas.1} parent=5 // pred_fallthru
        _
      %p2958 = scmp.le.s32.totalorder 2, %s26
      // Predicated region
      $region113: #{decoder_forward_pallas.1} parent=5 // pred_check
        %p2959 = pneg %p2958
      $region114: #{decoder_forward_pallas.1} parent=5 // pred_check_branch
        %2961 = sbr.rel (%p2959) target = $region116
      $region115: #{decoder_forward_pallas.1} parent=5 // pred_region
        %s2962 = ssub.s32 %s26, 2
      $region116: #{decoder_forward_pallas.1} parent=5 // pred_fallthru
        _
    $region6: #{decoder_forward_pallas.1} parent=1 // loop_footer
      %s30 = sadd.s32 1, %s26
    $region7: #{decoder_forward_pallas.1} parent=1 // loop_footer_branch
      %25 = sbr.rel target = $region3
    $region8: #{decoder_forward_pallas.1} parent=1 // loop_exit
      _
    %2963 = vsyncpa [#allocation4], 1
    %s2964 = scalar_lea.sflag [#allocation4], 1
    %2965 = vsyncpa %s2964, 1

</llo_original>
